<compile_context>
chip_gen: v7x
topology: tpu7x:2x2x1
jax: 0.10.0
libtpu: 0.0.40
codegen_flags: <defaults>
</compile_context>

<pallas_src>
import jax
import jax.numpy as jnp
import numpy as np
from jax import lax
from jax.experimental import pallas as pl
from jax.experimental.pallas import tpu as pltpu


def _round_up(x, m):
    return ((x + m - 1) // m) * m


# ----------------------------------------------------------------------------- kernel
def _lstm_kernel(x_ref,                 # (Tc, Bp, Ip)   chunk of timesteps
                 w1_ref, b1_ref,        # (Ip+Hp, 4Hp), (1, 4Hp)   layer-1 fused
                 w2_ref, b2_ref,        # (2Hp,   4Hp), (1, 4Hp)   layer-2 fused
                 wfc_ref, bfc_ref,      # (Hp, Hp), (1, Hp)
                 feat_ref, last_ref,    # outputs: (Bp, Hp) each
                 h1, c1, h2, c2):       # VMEM scratch, persist across chunks
    chunk = pl.program_id(0)
    Tc, Bp, _ = x_ref.shape
    Hp = h1.shape[-1]

    @pl.when(chunk == 0)
    def _():
        h1[...] = jnp.zeros_like(h1)
        c1[...] = jnp.zeros_like(c1)
        h2[...] = jnp.zeros_like(h2)
        c2[...] = jnp.zeros_like(c2)

    # Hoist weight loads and bias broadcasts out of the per-timestep loop.
    w1 = w1_ref[...]
    w2 = w2_ref[...]
    b1 = jnp.broadcast_to(b1_ref[...], (Bp, 4 * Hp))
    b2 = jnp.broadcast_to(b2_ref[...], (Bp, 4 * Hp))

    def cell(xh, c, w, b):
        # PyTorch gate order: i, f, g, o
        gates = jnp.dot(xh, w, preferred_element_type=jnp.float32) + b
        i_g = jax.nn.sigmoid(gates[:, 0 * Hp:1 * Hp])
        f_g = jax.nn.sigmoid(gates[:, 1 * Hp:2 * Hp])
        g_g = jnp.tanh(gates[:, 2 * Hp:3 * Hp])
        o_g = jax.nn.sigmoid(gates[:, 3 * Hp:4 * Hp])
        c_new = f_g * c + i_g * g_g
        h_new = o_g * jnp.tanh(c_new)
        return h_new, c_new

    def step(t, carry):
        h1_v, c1_v, h2_v, c2_v = carry
        x_t = x_ref[t]                                        # (Bp, Ip)
        h1_n, c1_n = cell(jnp.concatenate([x_t, h1_v], axis=-1), c1_v, w1, b1)
        # inter-layer dropout is identity at inference
        h2_n, c2_n = cell(jnp.concatenate([h1_n, h2_v], axis=-1), c2_v, w2, b2)
        return h1_n, c1_n, h2_n, c2_n

    carry = (h1[...], c1[...], h2[...], c2[...])
    carry = lax.fori_loop(0, Tc, step, carry,
                          unroll=True if Tc <= 16 else 8)
    h1[...], c1[...], h2[...], c2[...] = carry

    # Only the final chunk produces the (single) FC matmul and output stores.
    @pl.when(chunk == pl.num_programs(0) - 1)
    def _():
        last = carry[2]                                       # h2 after last step
        last_ref[...] = last
        feat = (jnp.dot(last, wfc_ref[...], preferred_element_type=jnp.float32)
                + bfc_ref[...])
        feat_ref[...] = jnp.maximum(feat, 0.0)                # Dropout -> identity


# ----------------------------------------------------------------------------- wrapper
def modified_lstm_forward(x, params):
    """x: (B, T, I) float32. Returns (features (B,H), last_out (B,H))."""
    B, T, I = x.shape
    H = params["w_fc"].shape[0]

    Bp = _round_up(B, 8)
    Hp = _round_up(H, 128)
    Ip = _round_up(I, 128)

    # (B,T,I) -> (T,B,I) -> zero-pad to (T, Bp, Ip)
    xt = jnp.transpose(x, (1, 0, 2))
    xt = jnp.pad(xt, ((0, 0), (0, Bp - B), (0, Ip - I)))

    def fuse_pad_w(w_ih, w_hh, in_real, in_pad):
        # w_ih: (4H, in_real), w_hh: (4H, H) -> fused (in_pad + Hp, 4*Hp),
        # gate g occupies columns [g*Hp, g*Hp + H); everything else is zero.
        wih_t = jnp.transpose(w_ih)          # (in_real, 4H)
        whh_t = jnp.transpose(w_hh)          # (H, 4H)
        w = jnp.zeros((in_pad + Hp, 4 * Hp), jnp.float32)
        for g in range(4):
            w = w.at[:in_real, g * Hp:g * Hp + H].set(wih_t[:, g * H:(g + 1) * H])
            w = w.at[in_pad:in_pad + H, g * Hp:g * Hp + H].set(whh_t[:, g * H:(g + 1) * H])
        return w

    def fuse_pad_b(b_ih, b_hh):
        bb = b_ih + b_hh                     # (4H,)
        b = jnp.zeros((1, 4 * Hp), jnp.float32)
        for g in range(4):
            b = b.at[0, g * Hp:g * Hp + H].set(bb[g * H:(g + 1) * H])
        return b

    w1 = fuse_pad_w(params["w_ih1"], params["w_hh1"], I, Ip)   # (Ip+Hp, 4Hp)
    b1 = fuse_pad_b(params["b_ih1"], params["b_hh1"])
    w2 = fuse_pad_w(params["w_ih2"], params["w_hh2"], H, Hp)   # (2Hp, 4Hp)
    b2 = fuse_pad_b(params["b_ih2"], params["b_hh2"])

    wfc = jnp.zeros((Hp, Hp), jnp.float32).at[:H, :H].set(jnp.transpose(params["w_fc"]))
    bfc = jnp.zeros((1, Hp), jnp.float32).at[0, :H].set(params["b_fc"])

    # Chunk the time axis: largest divisor of T that is <= 128 (T itself here).
    Tc = next(c for c in range(min(T, 128), 0, -1) if T % c == 0)
    n_chunks = T // Tc

    const = lambda shape: pl.BlockSpec(shape, lambda c: (0, 0))

    grid_spec = pltpu.PrefetchScalarGridSpec(
        num_scalar_prefetch=0,
        grid=(n_chunks,),
        in_specs=[
            pl.BlockSpec((Tc, Bp, Ip), lambda c: (c, 0, 0)),   # x chunk
            const((Ip + Hp, 4 * Hp)), const((1, 4 * Hp)),      # layer 1
            const((2 * Hp, 4 * Hp)), const((1, 4 * Hp)),       # layer 2
            const((Hp, Hp)), const((1, Hp)),                   # fc
        ],
        out_specs=[
            pl.BlockSpec((Bp, Hp), lambda c: (0, 0)),          # features
            pl.BlockSpec((Bp, Hp), lambda c: (0, 0)),          # last_out
        ],
        scratch_shapes=[pltpu.VMEM((Bp, Hp), jnp.float32)] * 4,
    )

    feat_p, last_p = pl.pallas_call(
        _lstm_kernel,
        out_shape=(jax.ShapeDtypeStruct((Bp, Hp), jnp.float32),
                   jax.ShapeDtypeStruct((Bp, Hp), jnp.float32)),
        grid_spec=grid_spec,
        compiler_params=pltpu.CompilerParams(
            dimension_semantics=("arbitrary",)),   # time is sequential
    )(xt, w1, b1, w2, b2, wfc, bfc)

    return feat_p[:B, :H], last_p[:B, :H]


# ----------------------------------------------------------------------------- params
def init_params(key, input_size, hidden_size):
    """Deterministic PyTorch-style init: U(-1/sqrt(H), 1/sqrt(H))."""
    H = hidden_size
    bound = 1.0 / np.sqrt(H)
    names_shapes = [
        ("w_ih1", (4 * H, input_size)), ("w_hh1", (4 * H, H)),
        ("b_ih1", (4 * H,)), ("b_hh1", (4 * H,)),
        ("w_ih2", (4 * H, H)), ("w_hh2", (4 * H, H)),
        ("b_ih2", (4 * H,)), ("b_hh2", (4 * H,)),
        ("w_fc", (H, H)), ("b_fc", (H,)),
    ]
    keys = jax.random.split(key, len(names_shapes))
    return {n: jax.random.uniform(k, s, jnp.float32, -bound, bound)
            for (n, s), k in zip(names_shapes, keys)}


# ----------------------------------------------------------------------------- reference
def reference_forward(x, params):
    B, T, I = x.shape
    H = params["w_fc"].shape[0]

    def cell(x_t, h, c, wih, whh, b_ih, b_hh):
        gates = x_t @ wih.T + h @ whh.T + b_ih + b_hh
        i_g = jax.nn.sigmoid(gates[:, 0 * H:1 * H])
        f_g = jax.nn.sigmoid(gates[:, 1 * H:2 * H])
        g_g = jnp.tanh(gates[:, 2 * H:3 * H])
        o_g = jax.nn.sigmoid(gates[:, 3 * H:4 * H])
        c_new = f_g * c + i_g * g_g
        return o_g * jnp.tanh(c_new), c_new

    h1 = c1 = h2 = c2 = jnp.zeros((B, H), jnp.float32)
    for t in range(T):
        h1, c1 = cell(x[:, t, :], h1, c1, params["w_ih1"], params["w_hh1"],
                      params["b_ih1"], params["b_hh1"])
        h2, c2 = cell(h1, h2, c2, params["w_ih2"], params["w_hh2"],
                      params["b_ih2"], params["b_hh2"])
    last_out = h2
    features = jnp.maximum(last_out @ params["w_fc"].T + params["b_fc"], 0.0)
    return features, last_out


# ----------------------------------------------------------------------------- main
if __name__ == "__main__":
    B, T, I, H = 2, 8, 16, 32  # batch, seq, input_size, hidden_size

    key = jax.random.PRNGKey(0)
    k_x, k_p = jax.random.split(key)
    x = jax.random.normal(k_x, (B, T, I), jnp.float32)
    params = init_params(k_p, I, H)

    feats, last_out = jax.block_until_ready(modified_lstm_forward(x, params))
    ref_feats, ref_last = reference_forward(x, params)

    np.testing.assert_allclose(np.asarray(last_out), np.asarray(ref_last),
                               rtol=1e-2, atol=1e-2)
    np.testing.assert_allclose(np.asarray(feats), np.asarray(ref_feats),
                               rtol=1e-2, atol=1e-2)

    assert feats.shape == (B, H) and last_out.shape == (B, H)
    print("KERNEL_OK")
</pallas_src>

<mosaic_0001>
module attributes {stable_mosaic.version = 11 : i64} {
  func.func @_lstm_kernel(%arg0: i32, %arg1: memref<8x8x128xf32, #tpu.memory_space<vmem>>, %arg2: memref<256x512xf32, #tpu.memory_space<vmem>>, %arg3: memref<1x512xf32, #tpu.memory_space<vmem>>, %arg4: memref<256x512xf32, #tpu.memory_space<vmem>>, %arg5: memref<1x512xf32, #tpu.memory_space<vmem>>, %arg6: memref<128x128xf32, #tpu.memory_space<vmem>>, %arg7: memref<1x128xf32, #tpu.memory_space<vmem>>, %arg8: memref<8x128xf32, #tpu.memory_space<vmem>>, %arg9: memref<8x128xf32, #tpu.memory_space<vmem>>, %arg10: memref<8x128xf32, #tpu.memory_space<vmem>>, %arg11: memref<8x128xf32, #tpu.memory_space<vmem>>, %arg12: memref<8x128xf32, #tpu.memory_space<vmem>>, %arg13: memref<8x128xf32, #tpu.memory_space<vmem>>) attributes {dimension_semantics = [#tpu.dimension_semantics<arbitrary>], iteration_bounds = array<i64: 1>, scalar_prefetch = 0 : i64, scratch_operands = 4 : i64, tpu.core_type = #tpu.core_type<tc>, window_params = [{transform_indices = @transform_0, window_bounds = array<i64: 8, 8, 128>}, {pipeline_mode = #tpu.pipeline_mode<synchronous>, transform_indices = @transform_1, window_bounds = array<i64: 256, 512>}, {pipeline_mode = #tpu.pipeline_mode<synchronous>, transform_indices = @transform_2, window_bounds = array<i64: 1, 512>}, {pipeline_mode = #tpu.pipeline_mode<synchronous>, transform_indices = @transform_3, window_bounds = array<i64: 256, 512>}, {pipeline_mode = #tpu.pipeline_mode<synchronous>, transform_indices = @transform_4, window_bounds = array<i64: 1, 512>}, {pipeline_mode = #tpu.pipeline_mode<synchronous>, transform_indices = @transform_5, window_bounds = array<i64: 128, 128>}, {pipeline_mode = #tpu.pipeline_mode<synchronous>, transform_indices = @transform_6, window_bounds = array<i64: 1, 128>}, {pipeline_mode = #tpu.pipeline_mode<synchronous>, transform_indices = @transform_7, window_bounds = array<i64: 8, 128>}, {pipeline_mode = #tpu.pipeline_mode<synchronous>, transform_indices = @transform_8, window_bounds = array<i64: 8, 128>}]} {
    %c0_i32 = arith.constant 0 : i32
    %0 = arith.cmpi eq, %arg0, %c0_i32 : i32
    %1 = arith.extui %0 : i1 to i32
    %c0_i32_0 = arith.constant 0 : i32
    %2 = arith.cmpi ne, %1, %c0_i32_0 : i32
    scf.if %2 {
      %cst_106 = arith.constant 0.000000e+00 : f32
      %494 = vector.broadcast %cst_106 : f32 to vector<8x128xf32>
      %c0_107 = arith.constant 0 : index
      %c0_108 = arith.constant 0 : index
      %495 = vector.load %arg10[%c0_107, %c0_108] : memref<8x128xf32, #tpu.memory_space<vmem>>, vector<8x128xf32>
      tpu.vector_store %arg10[%c0_107, %c0_108], %494 {strides = array<i32>} : memref<8x128xf32, #tpu.memory_space<vmem>>, vector<8x128xf32>,
      %cst_109 = arith.constant 0.000000e+00 : f32
      %496 = vector.broadcast %cst_109 : f32 to vector<8x128xf32>
      %c0_110 = arith.constant 0 : index
      %c0_111 = arith.constant 0 : index
      %497 = vector.load %arg11[%c0_110, %c0_111] : memref<8x128xf32, #tpu.memory_space<vmem>>, vector<8x128xf32>
      tpu.vector_store %arg11[%c0_110, %c0_111], %496 {strides = array<i32>} : memref<8x128xf32, #tpu.memory_space<vmem>>, vector<8x128xf32>,
      %cst_112 = arith.constant 0.000000e+00 : f32
      %498 = vector.broadcast %cst_112 : f32 to vector<8x128xf32>
      %c0_113 = arith.constant 0 : index
      %c0_114 = arith.constant 0 : index
      %499 = vector.load %arg12[%c0_113, %c0_114] : memref<8x128xf32, #tpu.memory_space<vmem>>, vector<8x128xf32>
      tpu.vector_store %arg12[%c0_113, %c0_114], %498 {strides = array<i32>} : memref<8x128xf32, #tpu.memory_space<vmem>>, vector<8x128xf32>,
      %cst_115 = arith.constant 0.000000e+00 : f32
      %500 = vector.broadcast %cst_115 : f32 to vector<8x128xf32>
      %c0_116 = arith.constant 0 : index
      %c0_117 = arith.constant 0 : index
      %501 = vector.load %arg13[%c0_116, %c0_117] : memref<8x128xf32, #tpu.memory_space<vmem>>, vector<8x128xf32>
      tpu.vector_store %arg13[%c0_116, %c0_117], %500 {strides = array<i32>} : memref<8x128xf32, #tpu.memory_space<vmem>>, vector<8x128xf32>,
    } else {
    }
    %c0 = arith.constant 0 : index
    %c0_1 = arith.constant 0 : index
    %3 = vector.load %arg2[%c0, %c0_1] : memref<256x512xf32, #tpu.memory_space<vmem>>, vector<256x512xf32>
    %c0_2 = arith.constant 0 : index
    %c0_3 = arith.constant 0 : index
    %4 = vector.load %arg4[%c0_2, %c0_3] : memref<256x512xf32, #tpu.memory_space<vmem>>, vector<256x512xf32>
    %c0_4 = arith.constant 0 : index
    %c0_5 = arith.constant 0 : index
    %5 = vector.load %arg3[%c0_4, %c0_5] : memref<1x512xf32, #tpu.memory_space<vmem>>, vector<1x512xf32>
    %6 = vector.shape_cast %5 : vector<1x512xf32> to vector<1x512xf32>
    %7 = vector.broadcast %6 : vector<1x512xf32> to vector<8x512xf32>
    %c0_6 = arith.constant 0 : index
    %c0_7 = arith.constant 0 : index
    %8 = vector.load %arg5[%c0_6, %c0_7] : memref<1x512xf32, #tpu.memory_space<vmem>>, vector<1x512xf32>
    %9 = vector.shape_cast %8 : vector<1x512xf32> to vector<1x512xf32>
    %10 = vector.broadcast %9 : vector<1x512xf32> to vector<8x512xf32>
    %c0_8 = arith.constant 0 : index
    %c0_9 = arith.constant 0 : index
    %11 = vector.load %arg10[%c0_8, %c0_9] : memref<8x128xf32, #tpu.memory_space<vmem>>, vector<8x128xf32>
    %c0_10 = arith.constant 0 : index
    %c0_11 = arith.constant 0 : index
    %12 = vector.load %arg11[%c0_10, %c0_11] : memref<8x128xf32, #tpu.memory_space<vmem>>, vector<8x128xf32>
    %c0_12 = arith.constant 0 : index
    %c0_13 = arith.constant 0 : index
    %13 = vector.load %arg12[%c0_12, %c0_13] : memref<8x128xf32, #tpu.memory_space<vmem>>, vector<8x128xf32>
    %c0_14 = arith.constant 0 : index
    %c0_15 = arith.constant 0 : index
    %14 = vector.load %arg13[%c0_14, %c0_15] : memref<8x128xf32, #tpu.memory_space<vmem>>, vector<8x128xf32>
    %c0_i32_16 = arith.constant 0 : i32
    %15 = arith.index_cast %c0_i32_16 : i32 to index
    %c0_17 = arith.constant 0 : index
    %c0_18 = arith.constant 0 : index
    %16 = vector.load %arg1[%15, %c0_17, %c0_18] : memref<8x8x128xf32, #tpu.memory_space<vmem>>, vector<1x8x128xf32>
    %17 = vector.shape_cast %16 : vector<1x8x128xf32> to vector<8x128xf32>
    %18 = tpu.concatenate %17, %11 in 1 : vector<8x128xf32>, vector<8x128xf32> -> vector<8x256xf32>
    %cst = arith.constant dense<0.000000e+00> : vector<8x512xf32>
    %19 = tpu.matmul %18, %3, %cst {dimension_numbers = #tpu.dot_dimension_numbers<[1], [0], [0], [1], [0, 0, 1, 1], [], []>} : vector<8x256xf32>, vector<256x512xf32>, vector<8x512xf32> -> vector<8x512xf32>
    %20 = arith.addf %19, %7 : vector<8x512xf32>
    %21 = vector.extract_strided_slice %20 {offsets = [0, 0], sizes = [8, 128], strides = [1, 1]} : vector<8x512xf32> to vector<8x128xf32>
    %22 = arith.negf %21 : vector<8x128xf32>
    %23 = math.exp %22 : vector<8x128xf32>
    %cst_19 = arith.constant 1.000000e+00 : f32
    %24 = vector.broadcast %cst_19 : f32 to vector<8x128xf32>
    %25 = arith.addf %24, %23 : vector<8x128xf32>
    %26 = arith.divf %24, %25 : vector<8x128xf32>
    %27 = vector.extract_strided_slice %20 {offsets = [0, 128], sizes = [8, 128], strides = [1, 1]} : vector<8x512xf32> to vector<8x128xf32>
    %28 = arith.negf %27 : vector<8x128xf32>
    %29 = math.exp %28 : vector<8x128xf32>
    %cst_20 = arith.constant 1.000000e+00 : f32
    %30 = vector.broadcast %cst_20 : f32 to vector<8x128xf32>
    %31 = arith.addf %30, %29 : vector<8x128xf32>
    %32 = arith.divf %30, %31 : vector<8x128xf32>
    %33 = vector.extract_strided_slice %20 {offsets = [0, 256], sizes = [8, 128], strides = [1, 1]} : vector<8x512xf32> to vector<8x128xf32>
    %34 = math.tanh %33 : vector<8x128xf32>
    %35 = vector.extract_strided_slice %20 {offsets = [0, 384], sizes = [8, 128], strides = [1, 1]} : vector<8x512xf32> to vector<8x128xf32>
    %36 = arith.negf %35 : vector<8x128xf32>
    %37 = math.exp %36 : vector<8x128xf32>
    %cst_21 = arith.constant 1.000000e+00 : f32
    %38 = vector.broadcast %cst_21 : f32 to vector<8x128xf32>
    %39 = arith.addf %38, %37 : vector<8x128xf32>
    %40 = arith.divf %38, %39 : vector<8x128xf32>
    %41 = arith.mulf %32, %12 : vector<8x128xf32>
    %42 = arith.mulf %26, %34 : vector<8x128xf32>
    %43 = arith.addf %41, %42 : vector<8x128xf32>
    %44 = math.tanh %43 : vector<8x128xf32>
    %45 = arith.mulf %40, %44 : vector<8x128xf32>
    %46 = tpu.concatenate %45, %13 in 1 : vector<8x128xf32>, vector<8x128xf32> -> vector<8x256xf32>
    %cst_22 = arith.constant dense<0.000000e+00> : vector<8x512xf32>
    %47 = tpu.matmul %46, %4, %cst_22 {dimension_numbers = #tpu.dot_dimension_numbers<[1], [0], [0], [1], [0, 0, 1, 1], [], []>} : vector<8x256xf32>, vector<256x512xf32>, vector<8x512xf32> -> vector<8x512xf32>
    %48 = arith.addf %47, %10 : vector<8x512xf32>
    %49 = vector.extract_strided_slice %48 {offsets = [0, 0], sizes = [8, 128], strides = [1, 1]} : vector<8x512xf32> to vector<8x128xf32>
    %50 = arith.negf %49 : vector<8x128xf32>
    %51 = math.exp %50 : vector<8x128xf32>
    %cst_23 = arith.constant 1.000000e+00 : f32
    %52 = vector.broadcast %cst_23 : f32 to vector<8x128xf32>
    %53 = arith.addf %52, %51 : vector<8x128xf32>
    %54 = arith.divf %52, %53 : vector<8x128xf32>
    %55 = vector.extract_strided_slice %48 {offsets = [0, 128], sizes = [8, 128], strides = [1, 1]} : vector<8x512xf32> to vector<8x128xf32>
    %56 = arith.negf %55 : vector<8x128xf32>
    %57 = math.exp %56 : vector<8x128xf32>
    %cst_24 = arith.constant 1.000000e+00 : f32
    %58 = vector.broadcast %cst_24 : f32 to vector<8x128xf32>
    %59 = arith.addf %58, %57 : vector<8x128xf32>
    %60 = arith.divf %58, %59 : vector<8x128xf32>
    %61 = vector.extract_strided_slice %48 {offsets = [0, 256], sizes = [8, 128], strides = [1, 1]} : vector<8x512xf32> to vector<8x128xf32>
    %62 = math.tanh %61 : vector<8x128xf32>
    %63 = vector.extract_strided_slice %48 {offsets = [0, 384], sizes = [8, 128], strides = [1, 1]} : vector<8x512xf32> to vector<8x128xf32>
    %64 = arith.negf %63 : vector<8x128xf32>
    %65 = math.exp %64 : vector<8x128xf32>
    %cst_25 = arith.constant 1.000000e+00 : f32
    %66 = vector.broadcast %cst_25 : f32 to vector<8x128xf32>
    %67 = arith.addf %66, %65 : vector<8x128xf32>
    %68 = arith.divf %66, %67 : vector<8x128xf32>
    %69 = arith.mulf %60, %14 : vector<8x128xf32>
    %70 = arith.mulf %54, %62 : vector<8x128xf32>
    %71 = arith.addf %69, %70 : vector<8x128xf32>
    %72 = math.tanh %71 : vector<8x128xf32>
    %73 = arith.mulf %68, %72 : vector<8x128xf32>
    %c1_i32 = arith.constant 1 : i32
    %74 = arith.index_cast %c1_i32 : i32 to index
    %c0_26 = arith.constant 0 : index
    %c0_27 = arith.constant 0 : index
    %75 = vector.load %arg1[%74, %c0_26, %c0_27] : memref<8x8x128xf32, #tpu.memory_space<vmem>>, vector<1x8x128xf32>
    %76 = vector.shape_cast %75 : vector<1x8x128xf32> to vector<8x128xf32>
    %77 = tpu.concatenate %76, %45 in 1 : vector<8x128xf32>, vector<8x128xf32> -> vector<8x256xf32>
    %cst_28 = arith.constant dense<0.000000e+00> : vector<8x512xf32>
    %78 = tpu.matmul %77, %3, %cst_28 {dimension_numbers = #tpu.dot_dimension_numbers<[1], [0], [0], [1], [0, 0, 1, 1], [], []>} : vector<8x256xf32>, vector<256x512xf32>, vector<8x512xf32> -> vector<8x512xf32>
    %79 = arith.addf %78, %7 : vector<8x512xf32>
    %80 = vector.extract_strided_slice %79 {offsets = [0, 0], sizes = [8, 128], strides = [1, 1]} : vector<8x512xf32> to vector<8x128xf32>
    %81 = arith.negf %80 : vector<8x128xf32>
    %82 = math.exp %81 : vector<8x128xf32>
    %cst_29 = arith.constant 1.000000e+00 : f32
    %83 = vector.broadcast %cst_29 : f32 to vector<8x128xf32>
    %84 = arith.addf %83, %82 : vector<8x128xf32>
    %85 = arith.divf %83, %84 : vector<8x128xf32>
    %86 = vector.extract_strided_slice %79 {offsets = [0, 128], sizes = [8, 128], strides = [1, 1]} : vector<8x512xf32> to vector<8x128xf32>
    %87 = arith.negf %86 : vector<8x128xf32>
    %88 = math.exp %87 : vector<8x128xf32>
    %cst_30 = arith.constant 1.000000e+00 : f32
    %89 = vector.broadcast %cst_30 : f32 to vector<8x128xf32>
    %90 = arith.addf %89, %88 : vector<8x128xf32>
    %91 = arith.divf %89, %90 : vector<8x128xf32>
    %92 = vector.extract_strided_slice %79 {offsets = [0, 256], sizes = [8, 128], strides = [1, 1]} : vector<8x512xf32> to vector<8x128xf32>
    %93 = math.tanh %92 : vector<8x128xf32>
    %94 = vector.extract_strided_slice %79 {offsets = [0, 384], sizes = [8, 128], strides = [1, 1]} : vector<8x512xf32> to vector<8x128xf32>
    %95 = arith.negf %94 : vector<8x128xf32>
    %96 = math.exp %95 : vector<8x128xf32>
    %cst_31 = arith.constant 1.000000e+00 : f32
    %97 = vector.broadcast %cst_31 : f32 to vector<8x128xf32>
    %98 = arith.addf %97, %96 : vector<8x128xf32>
    %99 = arith.divf %97, %98 : vector<8x128xf32>
    %100 = arith.mulf %91, %43 : vector<8x128xf32>
    %101 = arith.mulf %85, %93 : vector<8x128xf32>
    %102 = arith.addf %100, %101 : vector<8x128xf32>
    %103 = math.tanh %102 : vector<8x128xf32>
    %104 = arith.mulf %99, %103 : vector<8x128xf32>
    %105 = tpu.concatenate %104, %73 in 1 : vector<8x128xf32>, vector<8x128xf32> -> vector<8x256xf32>
    %cst_32 = arith.constant dense<0.000000e+00> : vector<8x512xf32>
    %106 = tpu.matmul %105, %4, %cst_32 {dimension_numbers = #tpu.dot_dimension_numbers<[1], [0], [0], [1], [0, 0, 1, 1], [], []>} : vector<8x256xf32>, vector<256x512xf32>, vector<8x512xf32> -> vector<8x512xf32>
    %107 = arith.addf %106, %10 : vector<8x512xf32>
    %108 = vector.extract_strided_slice %107 {offsets = [0, 0], sizes = [8, 128], strides = [1, 1]} : vector<8x512xf32> to vector<8x128xf32>
    %109 = arith.negf %108 : vector<8x128xf32>
    %110 = math.exp %109 : vector<8x128xf32>
    %cst_33 = arith.constant 1.000000e+00 : f32
    %111 = vector.broadcast %cst_33 : f32 to vector<8x128xf32>
    %112 = arith.addf %111, %110 : vector<8x128xf32>
    %113 = arith.divf %111, %112 : vector<8x128xf32>
    %114 = vector.extract_strided_slice %107 {offsets = [0, 128], sizes = [8, 128], strides = [1, 1]} : vector<8x512xf32> to vector<8x128xf32>
    %115 = arith.negf %114 : vector<8x128xf32>
    %116 = math.exp %115 : vector<8x128xf32>
    %cst_34 = arith.constant 1.000000e+00 : f32
    %117 = vector.broadcast %cst_34 : f32 to vector<8x128xf32>
    %118 = arith.addf %117, %116 : vector<8x128xf32>
    %119 = arith.divf %117, %118 : vector<8x128xf32>
    %120 = vector.extract_strided_slice %107 {offsets = [0, 256], sizes = [8, 128], strides = [1, 1]} : vector<8x512xf32> to vector<8x128xf32>
    %121 = math.tanh %120 : vector<8x128xf32>
    %122 = vector.extract_strided_slice %107 {offsets = [0, 384], sizes = [8, 128], strides = [1, 1]} : vector<8x512xf32> to vector<8x128xf32>
    %123 = arith.negf %122 : vector<8x128xf32>
    %124 = math.exp %123 : vector<8x128xf32>
    %cst_35 = arith.constant 1.000000e+00 : f32
    %125 = vector.broadcast %cst_35 : f32 to vector<8x128xf32>
    %126 = arith.addf %125, %124 : vector<8x128xf32>
    %127 = arith.divf %125, %126 : vector<8x128xf32>
    %128 = arith.mulf %119, %71 : vector<8x128xf32>
    %129 = arith.mulf %113, %121 : vector<8x128xf32>
    %130 = arith.addf %128, %129 : vector<8x128xf32>
    %131 = math.tanh %130 : vector<8x128xf32>
    %132 = arith.mulf %127, %131 : vector<8x128xf32>
    %c2_i32 = arith.constant 2 : i32
    %133 = arith.index_cast %c2_i32 : i32 to index
    %c0_36 = arith.constant 0 : index
    %c0_37 = arith.constant 0 : index
    %134 = vector.load %arg1[%133, %c0_36, %c0_37] : memref<8x8x128xf32, #tpu.memory_space<vmem>>, vector<1x8x128xf32>
    %135 = vector.shape_cast %134 : vector<1x8x128xf32> to vector<8x128xf32>
    %136 = tpu.concatenate %135, %104 in 1 : vector<8x128xf32>, vector<8x128xf32> -> vector<8x256xf32>
    %cst_38 = arith.constant dense<0.000000e+00> : vector<8x512xf32>
    %137 = tpu.matmul %136, %3, %cst_38 {dimension_numbers = #tpu.dot_dimension_numbers<[1], [0], [0], [1], [0, 0, 1, 1], [], []>} : vector<8x256xf32>, vector<256x512xf32>, vector<8x512xf32> -> vector<8x512xf32>
    %138 = arith.addf %137, %7 : vector<8x512xf32>
    %139 = vector.extract_strided_slice %138 {offsets = [0, 0], sizes = [8, 128], strides = [1, 1]} : vector<8x512xf32> to vector<8x128xf32>
    %140 = arith.negf %139 : vector<8x128xf32>
    %141 = math.exp %140 : vector<8x128xf32>
    %cst_39 = arith.constant 1.000000e+00 : f32
    %142 = vector.broadcast %cst_39 : f32 to vector<8x128xf32>
    %143 = arith.addf %142, %141 : vector<8x128xf32>
    %144 = arith.divf %142, %143 : vector<8x128xf32>
    %145 = vector.extract_strided_slice %138 {offsets = [0, 128], sizes = [8, 128], strides = [1, 1]} : vector<8x512xf32> to vector<8x128xf32>
    %146 = arith.negf %145 : vector<8x128xf32>
    %147 = math.exp %146 : vector<8x128xf32>
    %cst_40 = arith.constant 1.000000e+00 : f32
    %148 = vector.broadcast %cst_40 : f32 to vector<8x128xf32>
    %149 = arith.addf %148, %147 : vector<8x128xf32>
    %150 = arith.divf %148, %149 : vector<8x128xf32>
    %151 = vector.extract_strided_slice %138 {offsets = [0, 256], sizes = [8, 128], strides = [1, 1]} : vector<8x512xf32> to vector<8x128xf32>
    %152 = math.tanh %151 : vector<8x128xf32>
    %153 = vector.extract_strided_slice %138 {offsets = [0, 384], sizes = [8, 128], strides = [1, 1]} : vector<8x512xf32> to vector<8x128xf32>
    %154 = arith.negf %153 : vector<8x128xf32>
    %155 = math.exp %154 : vector<8x128xf32>
    %cst_41 = arith.constant 1.000000e+00 : f32
    %156 = vector.broadcast %cst_41 : f32 to vector<8x128xf32>
    %157 = arith.addf %156, %155 : vector<8x128xf32>
    %158 = arith.divf %156, %157 : vector<8x128xf32>
    %159 = arith.mulf %150, %102 : vector<8x128xf32>
    %160 = arith.mulf %144, %152 : vector<8x128xf32>
    %161 = arith.addf %159, %160 : vector<8x128xf32>
    %162 = math.tanh %161 : vector<8x128xf32>
    %163 = arith.mulf %158, %162 : vector<8x128xf32>
    %164 = tpu.concatenate %163, %132 in 1 : vector<8x128xf32>, vector<8x128xf32> -> vector<8x256xf32>
    %cst_42 = arith.constant dense<0.000000e+00> : vector<8x512xf32>
    %165 = tpu.matmul %164, %4, %cst_42 {dimension_numbers = #tpu.dot_dimension_numbers<[1], [0], [0], [1], [0, 0, 1, 1], [], []>} : vector<8x256xf32>, vector<256x512xf32>, vector<8x512xf32> -> vector<8x512xf32>
    %166 = arith.addf %165, %10 : vector<8x512xf32>
    %167 = vector.extract_strided_slice %166 {offsets = [0, 0], sizes = [8, 128], strides = [1, 1]} : vector<8x512xf32> to vector<8x128xf32>
    %168 = arith.negf %167 : vector<8x128xf32>
    %169 = math.exp %168 : vector<8x128xf32>
    %cst_43 = arith.constant 1.000000e+00 : f32
    %170 = vector.broadcast %cst_43 : f32 to vector<8x128xf32>
    %171 = arith.addf %170, %169 : vector<8x128xf32>
    %172 = arith.divf %170, %171 : vector<8x128xf32>
    %173 = vector.extract_strided_slice %166 {offsets = [0, 128], sizes = [8, 128], strides = [1, 1]} : vector<8x512xf32> to vector<8x128xf32>
    %174 = arith.negf %173 : vector<8x128xf32>
    %175 = math.exp %174 : vector<8x128xf32>
    %cst_44 = arith.constant 1.000000e+00 : f32
    %176 = vector.broadcast %cst_44 : f32 to vector<8x128xf32>
    %177 = arith.addf %176, %175 : vector<8x128xf32>
    %178 = arith.divf %176, %177 : vector<8x128xf32>
    %179 = vector.extract_strided_slice %166 {offsets = [0, 256], sizes = [8, 128], strides = [1, 1]} : vector<8x512xf32> to vector<8x128xf32>
    %180 = math.tanh %179 : vector<8x128xf32>
    %181 = vector.extract_strided_slice %166 {offsets = [0, 384], sizes = [8, 128], strides = [1, 1]} : vector<8x512xf32> to vector<8x128xf32>
    %182 = arith.negf %181 : vector<8x128xf32>
    %183 = math.exp %182 : vector<8x128xf32>
    %cst_45 = arith.constant 1.000000e+00 : f32
    %184 = vector.broadcast %cst_45 : f32 to vector<8x128xf32>
    %185 = arith.addf %184, %183 : vector<8x128xf32>
    %186 = arith.divf %184, %185 : vector<8x128xf32>
    %187 = arith.mulf %178, %130 : vector<8x128xf32>
    %188 = arith.mulf %172, %180 : vector<8x128xf32>
    %189 = arith.addf %187, %188 : vector<8x128xf32>
    %190 = math.tanh %189 : vector<8x128xf32>
    %191 = arith.mulf %186, %190 : vector<8x128xf32>
    %c3_i32 = arith.constant 3 : i32
    %192 = arith.index_cast %c3_i32 : i32 to index
    %c0_46 = arith.constant 0 : index
    %c0_47 = arith.constant 0 : index
    %193 = vector.load %arg1[%192, %c0_46, %c0_47] : memref<8x8x128xf32, #tpu.memory_space<vmem>>, vector<1x8x128xf32>
    %194 = vector.shape_cast %193 : vector<1x8x128xf32> to vector<8x128xf32>
    %195 = tpu.concatenate %194, %163 in 1 : vector<8x128xf32>, vector<8x128xf32> -> vector<8x256xf32>
    %cst_48 = arith.constant dense<0.000000e+00> : vector<8x512xf32>
    %196 = tpu.matmul %195, %3, %cst_48 {dimension_numbers = #tpu.dot_dimension_numbers<[1], [0], [0], [1], [0, 0, 1, 1], [], []>} : vector<8x256xf32>, vector<256x512xf32>, vector<8x512xf32> -> vector<8x512xf32>
    %197 = arith.addf %196, %7 : vector<8x512xf32>
    %198 = vector.extract_strided_slice %197 {offsets = [0, 0], sizes = [8, 128], strides = [1, 1]} : vector<8x512xf32> to vector<8x128xf32>
    %199 = arith.negf %198 : vector<8x128xf32>
    %200 = math.exp %199 : vector<8x128xf32>
    %cst_49 = arith.constant 1.000000e+00 : f32
    %201 = vector.broadcast %cst_49 : f32 to vector<8x128xf32>
    %202 = arith.addf %201, %200 : vector<8x128xf32>
    %203 = arith.divf %201, %202 : vector<8x128xf32>
    %204 = vector.extract_strided_slice %197 {offsets = [0, 128], sizes = [8, 128], strides = [1, 1]} : vector<8x512xf32> to vector<8x128xf32>
    %205 = arith.negf %204 : vector<8x128xf32>
    %206 = math.exp %205 : vector<8x128xf32>
    %cst_50 = arith.constant 1.000000e+00 : f32
    %207 = vector.broadcast %cst_50 : f32 to vector<8x128xf32>
    %208 = arith.addf %207, %206 : vector<8x128xf32>
    %209 = arith.divf %207, %208 : vector<8x128xf32>
    %210 = vector.extract_strided_slice %197 {offsets = [0, 256], sizes = [8, 128], strides = [1, 1]} : vector<8x512xf32> to vector<8x128xf32>
    %211 = math.tanh %210 : vector<8x128xf32>
    %212 = vector.extract_strided_slice %197 {offsets = [0, 384], sizes = [8, 128], strides = [1, 1]} : vector<8x512xf32> to vector<8x128xf32>
    %213 = arith.negf %212 : vector<8x128xf32>
    %214 = math.exp %213 : vector<8x128xf32>
    %cst_51 = arith.constant 1.000000e+00 : f32
    %215 = vector.broadcast %cst_51 : f32 to vector<8x128xf32>
    %216 = arith.addf %215, %214 : vector<8x128xf32>
    %217 = arith.divf %215, %216 : vector<8x128xf32>
    %218 = arith.mulf %209, %161 : vector<8x128xf32>
    %219 = arith.mulf %203, %211 : vector<8x128xf32>
    %220 = arith.addf %218, %219 : vector<8x128xf32>
    %221 = math.tanh %220 : vector<8x128xf32>
    %222 = arith.mulf %217, %221 : vector<8x128xf32>
    %223 = tpu.concatenate %222, %191 in 1 : vector<8x128xf32>, vector<8x128xf32> -> vector<8x256xf32>
    %cst_52 = arith.constant dense<0.000000e+00> : vector<8x512xf32>
    %224 = tpu.matmul %223, %4, %cst_52 {dimension_numbers = #tpu.dot_dimension_numbers<[1], [0], [0], [1], [0, 0, 1, 1], [], []>} : vector<8x256xf32>, vector<256x512xf32>, vector<8x512xf32> -> vector<8x512xf32>
    %225 = arith.addf %224, %10 : vector<8x512xf32>
    %226 = vector.extract_strided_slice %225 {offsets = [0, 0], sizes = [8, 128], strides = [1, 1]} : vector<8x512xf32> to vector<8x128xf32>
    %227 = arith.negf %226 : vector<8x128xf32>
    %228 = math.exp %227 : vector<8x128xf32>
    %cst_53 = arith.constant 1.000000e+00 : f32
    %229 = vector.broadcast %cst_53 : f32 to vector<8x128xf32>
    %230 = arith.addf %229, %228 : vector<8x128xf32>
    %231 = arith.divf %229, %230 : vector<8x128xf32>
    %232 = vector.extract_strided_slice %225 {offsets = [0, 128], sizes = [8, 128], strides = [1, 1]} : vector<8x512xf32> to vector<8x128xf32>
    %233 = arith.negf %232 : vector<8x128xf32>
    %234 = math.exp %233 : vector<8x128xf32>
    %cst_54 = arith.constant 1.000000e+00 : f32
    %235 = vector.broadcast %cst_54 : f32 to vector<8x128xf32>
    %236 = arith.addf %235, %234 : vector<8x128xf32>
    %237 = arith.divf %235, %236 : vector<8x128xf32>
    %238 = vector.extract_strided_slice %225 {offsets = [0, 256], sizes = [8, 128], strides = [1, 1]} : vector<8x512xf32> to vector<8x128xf32>
    %239 = math.tanh %238 : vector<8x128xf32>
    %240 = vector.extract_strided_slice %225 {offsets = [0, 384], sizes = [8, 128], strides = [1, 1]} : vector<8x512xf32> to vector<8x128xf32>
    %241 = arith.negf %240 : vector<8x128xf32>
    %242 = math.exp %241 : vector<8x128xf32>
    %cst_55 = arith.constant 1.000000e+00 : f32
    %243 = vector.broadcast %cst_55 : f32 to vector<8x128xf32>
    %244 = arith.addf %243, %242 : vector<8x128xf32>
    %245 = arith.divf %243, %244 : vector<8x128xf32>
    %246 = arith.mulf %237, %189 : vector<8x128xf32>
    %247 = arith.mulf %231, %239 : vector<8x128xf32>
    %248 = arith.addf %246, %247 : vector<8x128xf32>
    %249 = math.tanh %248 : vector<8x128xf32>
    %250 = arith.mulf %245, %249 : vector<8x128xf32>
    %c4_i32 = arith.constant 4 : i32
    %251 = arith.index_cast %c4_i32 : i32 to index
    %c0_56 = arith.constant 0 : index
    %c0_57 = arith.constant 0 : index
    %252 = vector.load %arg1[%251, %c0_56, %c0_57] : memref<8x8x128xf32, #tpu.memory_space<vmem>>, vector<1x8x128xf32>
    %253 = vector.shape_cast %252 : vector<1x8x128xf32> to vector<8x128xf32>
    %254 = tpu.concatenate %253, %222 in 1 : vector<8x128xf32>, vector<8x128xf32> -> vector<8x256xf32>
    %cst_58 = arith.constant dense<0.000000e+00> : vector<8x512xf32>
    %255 = tpu.matmul %254, %3, %cst_58 {dimension_numbers = #tpu.dot_dimension_numbers<[1], [0], [0], [1], [0, 0, 1, 1], [], []>} : vector<8x256xf32>, vector<256x512xf32>, vector<8x512xf32> -> vector<8x512xf32>
    %256 = arith.addf %255, %7 : vector<8x512xf32>
    %257 = vector.extract_strided_slice %256 {offsets = [0, 0], sizes = [8, 128], strides = [1, 1]} : vector<8x512xf32> to vector<8x128xf32>
    %258 = arith.negf %257 : vector<8x128xf32>
    %259 = math.exp %258 : vector<8x128xf32>
    %cst_59 = arith.constant 1.000000e+00 : f32
    %260 = vector.broadcast %cst_59 : f32 to vector<8x128xf32>
    %261 = arith.addf %260, %259 : vector<8x128xf32>
    %262 = arith.divf %260, %261 : vector<8x128xf32>
    %263 = vector.extract_strided_slice %256 {offsets = [0, 128], sizes = [8, 128], strides = [1, 1]} : vector<8x512xf32> to vector<8x128xf32>
    %264 = arith.negf %263 : vector<8x128xf32>
    %265 = math.exp %264 : vector<8x128xf32>
    %cst_60 = arith.constant 1.000000e+00 : f32
    %266 = vector.broadcast %cst_60 : f32 to vector<8x128xf32>
    %267 = arith.addf %266, %265 : vector<8x128xf32>
    %268 = arith.divf %266, %267 : vector<8x128xf32>
    %269 = vector.extract_strided_slice %256 {offsets = [0, 256], sizes = [8, 128], strides = [1, 1]} : vector<8x512xf32> to vector<8x128xf32>
    %270 = math.tanh %269 : vector<8x128xf32>
    %271 = vector.extract_strided_slice %256 {offsets = [0, 384], sizes = [8, 128], strides = [1, 1]} : vector<8x512xf32> to vector<8x128xf32>
    %272 = arith.negf %271 : vector<8x128xf32>
    %273 = math.exp %272 : vector<8x128xf32>
    %cst_61 = arith.constant 1.000000e+00 : f32
    %274 = vector.broadcast %cst_61 : f32 to vector<8x128xf32>
    %275 = arith.addf %274, %273 : vector<8x128xf32>
    %276 = arith.divf %274, %275 : vector<8x128xf32>
    %277 = arith.mulf %268, %220 : vector<8x128xf32>
    %278 = arith.mulf %262, %270 : vector<8x128xf32>
    %279 = arith.addf %277, %278 : vector<8x128xf32>
    %280 = math.tanh %279 : vector<8x128xf32>
    %281 = arith.mulf %276, %280 : vector<8x128xf32>
    %282 = tpu.concatenate %281, %250 in 1 : vector<8x128xf32>, vector<8x128xf32> -> vector<8x256xf32>
    %cst_62 = arith.constant dense<0.000000e+00> : vector<8x512xf32>
    %283 = tpu.matmul %282, %4, %cst_62 {dimension_numbers = #tpu.dot_dimension_numbers<[1], [0], [0], [1], [0, 0, 1, 1], [], []>} : vector<8x256xf32>, vector<256x512xf32>, vector<8x512xf32> -> vector<8x512xf32>
    %284 = arith.addf %283, %10 : vector<8x512xf32>
    %285 = vector.extract_strided_slice %284 {offsets = [0, 0], sizes = [8, 128], strides = [1, 1]} : vector<8x512xf32> to vector<8x128xf32>
    %286 = arith.negf %285 : vector<8x128xf32>
    %287 = math.exp %286 : vector<8x128xf32>
    %cst_63 = arith.constant 1.000000e+00 : f32
    %288 = vector.broadcast %cst_63 : f32 to vector<8x128xf32>
    %289 = arith.addf %288, %287 : vector<8x128xf32>
    %290 = arith.divf %288, %289 : vector<8x128xf32>
    %291 = vector.extract_strided_slice %284 {offsets = [0, 128], sizes = [8, 128], strides = [1, 1]} : vector<8x512xf32> to vector<8x128xf32>
    %292 = arith.negf %291 : vector<8x128xf32>
    %293 = math.exp %292 : vector<8x128xf32>
    %cst_64 = arith.constant 1.000000e+00 : f32
    %294 = vector.broadcast %cst_64 : f32 to vector<8x128xf32>
    %295 = arith.addf %294, %293 : vector<8x128xf32>
    %296 = arith.divf %294, %295 : vector<8x128xf32>
    %297 = vector.extract_strided_slice %284 {offsets = [0, 256], sizes = [8, 128], strides = [1, 1]} : vector<8x512xf32> to vector<8x128xf32>
    %298 = math.tanh %297 : vector<8x128xf32>
    %299 = vector.extract_strided_slice %284 {offsets = [0, 384], sizes = [8, 128], strides = [1, 1]} : vector<8x512xf32> to vector<8x128xf32>
    %300 = arith.negf %299 : vector<8x128xf32>
    %301 = math.exp %300 : vector<8x128xf32>
    %cst_65 = arith.constant 1.000000e+00 : f32
    %302 = vector.broadcast %cst_65 : f32 to vector<8x128xf32>
    %303 = arith.addf %302, %301 : vector<8x128xf32>
    %304 = arith.divf %302, %303 : vector<8x128xf32>
    %305 = arith.mulf %296, %248 : vector<8x128xf32>
    %306 = arith.mulf %290, %298 : vector<8x128xf32>
    %307 = arith.addf %305, %306 : vector<8x128xf32>
    %308 = math.tanh %307 : vector<8x128xf32>
    %309 = arith.mulf %304, %308 : vector<8x128xf32>
    %c5_i32 = arith.constant 5 : i32
    %310 = arith.index_cast %c5_i32 : i32 to index
    %c0_66 = arith.constant 0 : index
    %c0_67 = arith.constant 0 : index
    %311 = vector.load %arg1[%310, %c0_66, %c0_67] : memref<8x8x128xf32, #tpu.memory_space<vmem>>, vector<1x8x128xf32>
    %312 = vector.shape_cast %311 : vector<1x8x128xf32> to vector<8x128xf32>
    %313 = tpu.concatenate %312, %281 in 1 : vector<8x128xf32>, vector<8x128xf32> -> vector<8x256xf32>
    %cst_68 = arith.constant dense<0.000000e+00> : vector<8x512xf32>
    %314 = tpu.matmul %313, %3, %cst_68 {dimension_numbers = #tpu.dot_dimension_numbers<[1], [0], [0], [1], [0, 0, 1, 1], [], []>} : vector<8x256xf32>, vector<256x512xf32>, vector<8x512xf32> -> vector<8x512xf32>
    %315 = arith.addf %314, %7 : vector<8x512xf32>
    %316 = vector.extract_strided_slice %315 {offsets = [0, 0], sizes = [8, 128], strides = [1, 1]} : vector<8x512xf32> to vector<8x128xf32>
    %317 = arith.negf %316 : vector<8x128xf32>
    %318 = math.exp %317 : vector<8x128xf32>
    %cst_69 = arith.constant 1.000000e+00 : f32
    %319 = vector.broadcast %cst_69 : f32 to vector<8x128xf32>
    %320 = arith.addf %319, %318 : vector<8x128xf32>
    %321 = arith.divf %319, %320 : vector<8x128xf32>
    %322 = vector.extract_strided_slice %315 {offsets = [0, 128], sizes = [8, 128], strides = [1, 1]} : vector<8x512xf32> to vector<8x128xf32>
    %323 = arith.negf %322 : vector<8x128xf32>
    %324 = math.exp %323 : vector<8x128xf32>
    %cst_70 = arith.constant 1.000000e+00 : f32
    %325 = vector.broadcast %cst_70 : f32 to vector<8x128xf32>
    %326 = arith.addf %325, %324 : vector<8x128xf32>
    %327 = arith.divf %325, %326 : vector<8x128xf32>
    %328 = vector.extract_strided_slice %315 {offsets = [0, 256], sizes = [8, 128], strides = [1, 1]} : vector<8x512xf32> to vector<8x128xf32>
    %329 = math.tanh %328 : vector<8x128xf32>
    %330 = vector.extract_strided_slice %315 {offsets = [0, 384], sizes = [8, 128], strides = [1, 1]} : vector<8x512xf32> to vector<8x128xf32>
    %331 = arith.negf %330 : vector<8x128xf32>
    %332 = math.exp %331 : vector<8x128xf32>
    %cst_71 = arith.constant 1.000000e+00 : f32
    %333 = vector.broadcast %cst_71 : f32 to vector<8x128xf32>
    %334 = arith.addf %333, %332 : vector<8x128xf32>
    %335 = arith.divf %333, %334 : vector<8x128xf32>
    %336 = arith.mulf %327, %279 : vector<8x128xf32>
    %337 = arith.mulf %321, %329 : vector<8x128xf32>
    %338 = arith.addf %336, %337 : vector<8x128xf32>
    %339 = math.tanh %338 : vector<8x128xf32>
    %340 = arith.mulf %335, %339 : vector<8x128xf32>
    %341 = tpu.concatenate %340, %309 in 1 : vector<8x128xf32>, vector<8x128xf32> -> vector<8x256xf32>
    %cst_72 = arith.constant dense<0.000000e+00> : vector<8x512xf32>
    %342 = tpu.matmul %341, %4, %cst_72 {dimension_numbers = #tpu.dot_dimension_numbers<[1], [0], [0], [1], [0, 0, 1, 1], [], []>} : vector<8x256xf32>, vector<256x512xf32>, vector<8x512xf32> -> vector<8x512xf32>
    %343 = arith.addf %342, %10 : vector<8x512xf32>
    %344 = vector.extract_strided_slice %343 {offsets = [0, 0], sizes = [8, 128], strides = [1, 1]} : vector<8x512xf32> to vector<8x128xf32>
    %345 = arith.negf %344 : vector<8x128xf32>
    %346 = math.exp %345 : vector<8x128xf32>
    %cst_73 = arith.constant 1.000000e+00 : f32
    %347 = vector.broadcast %cst_73 : f32 to vector<8x128xf32>
    %348 = arith.addf %347, %346 : vector<8x128xf32>
    %349 = arith.divf %347, %348 : vector<8x128xf32>
    %350 = vector.extract_strided_slice %343 {offsets = [0, 128], sizes = [8, 128], strides = [1, 1]} : vector<8x512xf32> to vector<8x128xf32>
    %351 = arith.negf %350 : vector<8x128xf32>
    %352 = math.exp %351 : vector<8x128xf32>
    %cst_74 = arith.constant 1.000000e+00 : f32
    %353 = vector.broadcast %cst_74 : f32 to vector<8x128xf32>
    %354 = arith.addf %353, %352 : vector<8x128xf32>
    %355 = arith.divf %353, %354 : vector<8x128xf32>
    %356 = vector.extract_strided_slice %343 {offsets = [0, 256], sizes = [8, 128], strides = [1, 1]} : vector<8x512xf32> to vector<8x128xf32>
    %357 = math.tanh %356 : vector<8x128xf32>
    %358 = vector.extract_strided_slice %343 {offsets = [0, 384], sizes = [8, 128], strides = [1, 1]} : vector<8x512xf32> to vector<8x128xf32>
    %359 = arith.negf %358 : vector<8x128xf32>
    %360 = math.exp %359 : vector<8x128xf32>
    %cst_75 = arith.constant 1.000000e+00 : f32
    %361 = vector.broadcast %cst_75 : f32 to vector<8x128xf32>
    %362 = arith.addf %361, %360 : vector<8x128xf32>
    %363 = arith.divf %361, %362 : vector<8x128xf32>
    %364 = arith.mulf %355, %307 : vector<8x128xf32>
    %365 = arith.mulf %349, %357 : vector<8x128xf32>
    %366 = arith.addf %364, %365 : vector<8x128xf32>
    %367 = math.tanh %366 : vector<8x128xf32>
    %368 = arith.mulf %363, %367 : vector<8x128xf32>
    %c6_i32 = arith.constant 6 : i32
    %369 = arith.index_cast %c6_i32 : i32 to index
    %c0_76 = arith.constant 0 : index
    %c0_77 = arith.constant 0 : index
    %370 = vector.load %arg1[%369, %c0_76, %c0_77] : memref<8x8x128xf32, #tpu.memory_space<vmem>>, vector<1x8x128xf32>
    %371 = vector.shape_cast %370 : vector<1x8x128xf32> to vector<8x128xf32>
    %372 = tpu.concatenate %371, %340 in 1 : vector<8x128xf32>, vector<8x128xf32> -> vector<8x256xf32>
    %cst_78 = arith.constant dense<0.000000e+00> : vector<8x512xf32>
    %373 = tpu.matmul %372, %3, %cst_78 {dimension_numbers = #tpu.dot_dimension_numbers<[1], [0], [0], [1], [0, 0, 1, 1], [], []>} : vector<8x256xf32>, vector<256x512xf32>, vector<8x512xf32> -> vector<8x512xf32>
    %374 = arith.addf %373, %7 : vector<8x512xf32>
    %375 = vector.extract_strided_slice %374 {offsets = [0, 0], sizes = [8, 128], strides = [1, 1]} : vector<8x512xf32> to vector<8x128xf32>
    %376 = arith.negf %375 : vector<8x128xf32>
    %377 = math.exp %376 : vector<8x128xf32>
    %cst_79 = arith.constant 1.000000e+00 : f32
    %378 = vector.broadcast %cst_79 : f32 to vector<8x128xf32>
    %379 = arith.addf %378, %377 : vector<8x128xf32>
    %380 = arith.divf %378, %379 : vector<8x128xf32>
    %381 = vector.extract_strided_slice %374 {offsets = [0, 128], sizes = [8, 128], strides = [1, 1]} : vector<8x512xf32> to vector<8x128xf32>
    %382 = arith.negf %381 : vector<8x128xf32>
    %383 = math.exp %382 : vector<8x128xf32>
    %cst_80 = arith.constant 1.000000e+00 : f32
    %384 = vector.broadcast %cst_80 : f32 to vector<8x128xf32>
    %385 = arith.addf %384, %383 : vector<8x128xf32>
    %386 = arith.divf %384, %385 : vector<8x128xf32>
    %387 = vector.extract_strided_slice %374 {offsets = [0, 256], sizes = [8, 128], strides = [1, 1]} : vector<8x512xf32> to vector<8x128xf32>
    %388 = math.tanh %387 : vector<8x128xf32>
    %389 = vector.extract_strided_slice %374 {offsets = [0, 384], sizes = [8, 128], strides = [1, 1]} : vector<8x512xf32> to vector<8x128xf32>
    %390 = arith.negf %389 : vector<8x128xf32>
    %391 = math.exp %390 : vector<8x128xf32>
    %cst_81 = arith.constant 1.000000e+00 : f32
    %392 = vector.broadcast %cst_81 : f32 to vector<8x128xf32>
    %393 = arith.addf %392, %391 : vector<8x128xf32>
    %394 = arith.divf %392, %393 : vector<8x128xf32>
    %395 = arith.mulf %386, %338 : vector<8x128xf32>
    %396 = arith.mulf %380, %388 : vector<8x128xf32>
    %397 = arith.addf %395, %396 : vector<8x128xf32>
    %398 = math.tanh %397 : vector<8x128xf32>
    %399 = arith.mulf %394, %398 : vector<8x128xf32>
    %400 = tpu.concatenate %399, %368 in 1 : vector<8x128xf32>, vector<8x128xf32> -> vector<8x256xf32>
    %cst_82 = arith.constant dense<0.000000e+00> : vector<8x512xf32>
    %401 = tpu.matmul %400, %4, %cst_82 {dimension_numbers = #tpu.dot_dimension_numbers<[1], [0], [0], [1], [0, 0, 1, 1], [], []>} : vector<8x256xf32>, vector<256x512xf32>, vector<8x512xf32> -> vector<8x512xf32>
    %402 = arith.addf %401, %10 : vector<8x512xf32>
    %403 = vector.extract_strided_slice %402 {offsets = [0, 0], sizes = [8, 128], strides = [1, 1]} : vector<8x512xf32> to vector<8x128xf32>
    %404 = arith.negf %403 : vector<8x128xf32>
    %405 = math.exp %404 : vector<8x128xf32>
    %cst_83 = arith.constant 1.000000e+00 : f32
    %406 = vector.broadcast %cst_83 : f32 to vector<8x128xf32>
    %407 = arith.addf %406, %405 : vector<8x128xf32>
    %408 = arith.divf %406, %407 : vector<8x128xf32>
    %409 = vector.extract_strided_slice %402 {offsets = [0, 128], sizes = [8, 128], strides = [1, 1]} : vector<8x512xf32> to vector<8x128xf32>
    %410 = arith.negf %409 : vector<8x128xf32>
    %411 = math.exp %410 : vector<8x128xf32>
    %cst_84 = arith.constant 1.000000e+00 : f32
    %412 = vector.broadcast %cst_84 : f32 to vector<8x128xf32>
    %413 = arith.addf %412, %411 : vector<8x128xf32>
    %414 = arith.divf %412, %413 : vector<8x128xf32>
    %415 = vector.extract_strided_slice %402 {offsets = [0, 256], sizes = [8, 128], strides = [1, 1]} : vector<8x512xf32> to vector<8x128xf32>
    %416 = math.tanh %415 : vector<8x128xf32>
    %417 = vector.extract_strided_slice %402 {offsets = [0, 384], sizes = [8, 128], strides = [1, 1]} : vector<8x512xf32> to vector<8x128xf32>
    %418 = arith.negf %417 : vector<8x128xf32>
    %419 = math.exp %418 : vector<8x128xf32>
    %cst_85 = arith.constant 1.000000e+00 : f32
    %420 = vector.broadcast %cst_85 : f32 to vector<8x128xf32>
    %421 = arith.addf %420, %419 : vector<8x128xf32>
    %422 = arith.divf %420, %421 : vector<8x128xf32>
    %423 = arith.mulf %414, %366 : vector<8x128xf32>
    %424 = arith.mulf %408, %416 : vector<8x128xf32>
    %425 = arith.addf %423, %424 : vector<8x128xf32>
    %426 = math.tanh %425 : vector<8x128xf32>
    %427 = arith.mulf %422, %426 : vector<8x128xf32>
    %c7_i32 = arith.constant 7 : i32
    %428 = arith.index_cast %c7_i32 : i32 to index
    %c0_86 = arith.constant 0 : index
    %c0_87 = arith.constant 0 : index
    %429 = vector.load %arg1[%428, %c0_86, %c0_87] : memref<8x8x128xf32, #tpu.memory_space<vmem>>, vector<1x8x128xf32>
    %430 = vector.shape_cast %429 : vector<1x8x128xf32> to vector<8x128xf32>
    %431 = tpu.concatenate %430, %399 in 1 : vector<8x128xf32>, vector<8x128xf32> -> vector<8x256xf32>
    %cst_88 = arith.constant dense<0.000000e+00> : vector<8x512xf32>
    %432 = tpu.matmul %431, %3, %cst_88 {dimension_numbers = #tpu.dot_dimension_numbers<[1], [0], [0], [1], [0, 0, 1, 1], [], []>} : vector<8x256xf32>, vector<256x512xf32>, vector<8x512xf32> -> vector<8x512xf32>
    %433 = arith.addf %432, %7 : vector<8x512xf32>
    %434 = vector.extract_strided_slice %433 {offsets = [0, 0], sizes = [8, 128], strides = [1, 1]} : vector<8x512xf32> to vector<8x128xf32>
    %435 = arith.negf %434 : vector<8x128xf32>
    %436 = math.exp %435 : vector<8x128xf32>
    %cst_89 = arith.constant 1.000000e+00 : f32
    %437 = vector.broadcast %cst_89 : f32 to vector<8x128xf32>
    %438 = arith.addf %437, %436 : vector<8x128xf32>
    %439 = arith.divf %437, %438 : vector<8x128xf32>
    %440 = vector.extract_strided_slice %433 {offsets = [0, 128], sizes = [8, 128], strides = [1, 1]} : vector<8x512xf32> to vector<8x128xf32>
    %441 = arith.negf %440 : vector<8x128xf32>
    %442 = math.exp %441 : vector<8x128xf32>
    %cst_90 = arith.constant 1.000000e+00 : f32
    %443 = vector.broadcast %cst_90 : f32 to vector<8x128xf32>
    %444 = arith.addf %443, %442 : vector<8x128xf32>
    %445 = arith.divf %443, %444 : vector<8x128xf32>
    %446 = vector.extract_strided_slice %433 {offsets = [0, 256], sizes = [8, 128], strides = [1, 1]} : vector<8x512xf32> to vector<8x128xf32>
    %447 = math.tanh %446 : vector<8x128xf32>
    %448 = vector.extract_strided_slice %433 {offsets = [0, 384], sizes = [8, 128], strides = [1, 1]} : vector<8x512xf32> to vector<8x128xf32>
    %449 = arith.negf %448 : vector<8x128xf32>
    %450 = math.exp %449 : vector<8x128xf32>
    %cst_91 = arith.constant 1.000000e+00 : f32
    %451 = vector.broadcast %cst_91 : f32 to vector<8x128xf32>
    %452 = arith.addf %451, %450 : vector<8x128xf32>
    %453 = arith.divf %451, %452 : vector<8x128xf32>
    %454 = arith.mulf %445, %397 : vector<8x128xf32>
    %455 = arith.mulf %439, %447 : vector<8x128xf32>
    %456 = arith.addf %454, %455 : vector<8x128xf32>
    %457 = math.tanh %456 : vector<8x128xf32>
    %458 = arith.mulf %453, %457 : vector<8x128xf32>
    %459 = tpu.concatenate %458, %427 in 1 : vector<8x128xf32>, vector<8x128xf32> -> vector<8x256xf32>
    %cst_92 = arith.constant dense<0.000000e+00> : vector<8x512xf32>
    %460 = tpu.matmul %459, %4, %cst_92 {dimension_numbers = #tpu.dot_dimension_numbers<[1], [0], [0], [1], [0, 0, 1, 1], [], []>} : vector<8x256xf32>, vector<256x512xf32>, vector<8x512xf32> -> vector<8x512xf32>
    %461 = arith.addf %460, %10 : vector<8x512xf32>
    %462 = vector.extract_strided_slice %461 {offsets = [0, 0], sizes = [8, 128], strides = [1, 1]} : vector<8x512xf32> to vector<8x128xf32>
    %463 = arith.negf %462 : vector<8x128xf32>
    %464 = math.exp %463 : vector<8x128xf32>
    %cst_93 = arith.constant 1.000000e+00 : f32
    %465 = vector.broadcast %cst_93 : f32 to vector<8x128xf32>
    %466 = arith.addf %465, %464 : vector<8x128xf32>
    %467 = arith.divf %465, %466 : vector<8x128xf32>
    %468 = vector.extract_strided_slice %461 {offsets = [0, 128], sizes = [8, 128], strides = [1, 1]} : vector<8x512xf32> to vector<8x128xf32>
    %469 = arith.negf %468 : vector<8x128xf32>
    %470 = math.exp %469 : vector<8x128xf32>
    %cst_94 = arith.constant 1.000000e+00 : f32
    %471 = vector.broadcast %cst_94 : f32 to vector<8x128xf32>
    %472 = arith.addf %471, %470 : vector<8x128xf32>
    %473 = arith.divf %471, %472 : vector<8x128xf32>
    %474 = vector.extract_strided_slice %461 {offsets = [0, 256], sizes = [8, 128], strides = [1, 1]} : vector<8x512xf32> to vector<8x128xf32>
    %475 = math.tanh %474 : vector<8x128xf32>
    %476 = vector.extract_strided_slice %461 {offsets = [0, 384], sizes = [8, 128], strides = [1, 1]} : vector<8x512xf32> to vector<8x128xf32>
    %477 = arith.negf %476 : vector<8x128xf32>
    %478 = math.exp %477 : vector<8x128xf32>
    %cst_95 = arith.constant 1.000000e+00 : f32
    %479 = vector.broadcast %cst_95 : f32 to vector<8x128xf32>
    %480 = arith.addf %479, %478 : vector<8x128xf32>
    %481 = arith.divf %479, %480 : vector<8x128xf32>
    %482 = arith.mulf %473, %425 : vector<8x128xf32>
    %483 = arith.mulf %467, %475 : vector<8x128xf32>
    %484 = arith.addf %482, %483 : vector<8x128xf32>
    %485 = math.tanh %484 : vector<8x128xf32>
    %486 = arith.mulf %481, %485 : vector<8x128xf32>
    %c8_i32 = arith.constant 8 : i32
    %c0_96 = arith.constant 0 : index
    %c0_97 = arith.constant 0 : index
    %487 = vector.load %arg10[%c0_96, %c0_97] : memref<8x128xf32, #tpu.memory_space<vmem>>, vector<8x128xf32>
    tpu.vector_store %arg10[%c0_96, %c0_97], %458 {strides = array<i32>} : memref<8x128xf32, #tpu.memory_space<vmem>>, vector<8x128xf32>,
    %c0_98 = arith.constant 0 : index
    %c0_99 = arith.constant 0 : index
    %488 = vector.load %arg11[%c0_98, %c0_99] : memref<8x128xf32, #tpu.memory_space<vmem>>, vector<8x128xf32>
    tpu.vector_store %arg11[%c0_98, %c0_99], %456 {strides = array<i32>} : memref<8x128xf32, #tpu.memory_space<vmem>>, vector<8x128xf32>,
    %c0_100 = arith.constant 0 : index
    %c0_101 = arith.constant 0 : index
    %489 = vector.load %arg12[%c0_100, %c0_101] : memref<8x128xf32, #tpu.memory_space<vmem>>, vector<8x128xf32>
    tpu.vector_store %arg12[%c0_100, %c0_101], %486 {strides = array<i32>} : memref<8x128xf32, #tpu.memory_space<vmem>>, vector<8x128xf32>,
    %c0_102 = arith.constant 0 : index
    %c0_103 = arith.constant 0 : index
    %490 = vector.load %arg13[%c0_102, %c0_103] : memref<8x128xf32, #tpu.memory_space<vmem>>, vector<8x128xf32>
    tpu.vector_store %arg13[%c0_102, %c0_103], %484 {strides = array<i32>} : memref<8x128xf32, #tpu.memory_space<vmem>>, vector<8x128xf32>,
    %c0_i32_104 = arith.constant 0 : i32
    %491 = arith.cmpi eq, %arg0, %c0_i32_104 : i32
    %492 = arith.extui %491 : i1 to i32
    %c0_i32_105 = arith.constant 0 : i32
    %493 = arith.cmpi ne, %492, %c0_i32_105 : i32
    scf.if %493 {
      %c0_106 = arith.constant 0 : index
      %c0_107 = arith.constant 0 : index
      %494 = vector.load %arg9[%c0_106, %c0_107] : memref<8x128xf32, #tpu.memory_space<vmem>>, vector<8x128xf32>
      tpu.vector_store %arg9[%c0_106, %c0_107], %486 {strides = array<i32>} : memref<8x128xf32, #tpu.memory_space<vmem>>, vector<8x128xf32>,
      %c0_108 = arith.constant 0 : index
      %c0_109 = arith.constant 0 : index
      %495 = vector.load %arg6[%c0_108, %c0_109] : memref<128x128xf32, #tpu.memory_space<vmem>>, vector<128x128xf32>
      %cst_110 = arith.constant dense<0.000000e+00> : vector<8x128xf32>
      %496 = tpu.matmul %486, %495, %cst_110 {dimension_numbers = #tpu.dot_dimension_numbers<[1], [0], [0], [1], [0, 0, 1, 1], [], []>} : vector<8x128xf32>, vector<128x128xf32>, vector<8x128xf32> -> vector<8x128xf32>
      %c0_111 = arith.constant 0 : index
      %c0_112 = arith.constant 0 : index
      %497 = vector.load %arg7[%c0_111, %c0_112] : memref<1x128xf32, #tpu.memory_space<vmem>>, vector<1x128xf32>
      %498 = vector.broadcast %497 : vector<1x128xf32> to vector<8x128xf32>
      %499 = arith.addf %496, %498 : vector<8x128xf32>
      %cst_113 = arith.constant 0.000000e+00 : f32
      %500 = vector.broadcast %cst_113 : f32 to vector<8x128xf32>
      %501 = arith.maximumf %499, %500 : vector<8x128xf32>
      %c0_114 = arith.constant 0 : index
      %c0_115 = arith.constant 0 : index
      %502 = vector.load %arg8[%c0_114, %c0_115] : memref<8x128xf32, #tpu.memory_space<vmem>>, vector<8x128xf32>
      tpu.vector_store %arg8[%c0_114, %c0_115], %501 {strides = array<i32>} : memref<8x128xf32, #tpu.memory_space<vmem>>, vector<8x128xf32>,
    } else {
    }
    return
  }
  func.func @transform_0(%arg0: i32) -> (i32, i32, i32) {
    %c0_i32 = arith.constant 0 : i32
    %c0_i32_0 = arith.constant 0 : i32
    %c0_i32_1 = arith.constant 0 : i32
    return %arg0, %c0_i32, %c0_i32_0 : i32, i32, i32
  }
  func.func @transform_1(%arg0: i32) -> (i32, i32) {
    %c0_i32 = arith.constant 0 : i32
    %c0_i32_0 = arith.constant 0 : i32
    %c0_i32_1 = arith.constant 0 : i32
    return %c0_i32, %c0_i32_0 : i32, i32
  }
  func.func @transform_2(%arg0: i32) -> (i32, i32) {
    %c0_i32 = arith.constant 0 : i32
    %c0_i32_0 = arith.constant 0 : i32
    %c0_i32_1 = arith.constant 0 : i32
    return %c0_i32, %c0_i32_0 : i32, i32
  }
  func.func @transform_3(%arg0: i32) -> (i32, i32) {
    %c0_i32 = arith.constant 0 : i32
    %c0_i32_0 = arith.constant 0 : i32
    %c0_i32_1 = arith.constant 0 : i32
    return %c0_i32, %c0_i32_0 : i32, i32
  }
  func.func @transform_4(%arg0: i32) -> (i32, i32) {
    %c0_i32 = arith.constant 0 : i32
    %c0_i32_0 = arith.constant 0 : i32
    %c0_i32_1 = arith.constant 0 : i32
    return %c0_i32, %c0_i32_0 : i32, i32
  }
  func.func @transform_5(%arg0: i32) -> (i32, i32) {
    %c0_i32 = arith.constant 0 : i32
    %c0_i32_0 = arith.constant 0 : i32
    %c0_i32_1 = arith.constant 0 : i32
    return %c0_i32, %c0_i32_0 : i32, i32
  }
  func.func @transform_6(%arg0: i32) -> (i32, i32) {
    %c0_i32 = arith.constant 0 : i32
    %c0_i32_0 = arith.constant 0 : i32
    %c0_i32_1 = arith.constant 0 : i32
    return %c0_i32, %c0_i32_0 : i32, i32
  }
  func.func @transform_7(%arg0: i32) -> (i32, i32) {
    %c0_i32 = arith.constant 0 : i32
    %c0_i32_0 = arith.constant 0 : i32
    %c0_i32_1 = arith.constant 0 : i32
    return %c0_i32, %c0_i32_0 : i32, i32
  }
  func.func @transform_8(%arg0: i32) -> (i32, i32) {
    %c0_i32 = arith.constant 0 : i32
    %c0_i32_0 = arith.constant 0 : i32
    %c0_i32_1 = arith.constant 0 : i32
    return %c0_i32, %c0_i32_0 : i32, i32
  }
}

</mosaic_0001>

<llo_original>
// kernel: tpu_custom_call.1
$region0: #{tpu_custom_call.1}
  #allocation0 [shape = 'u32[]', space=smem, size = 0x4, offset = 0x4, fixed_abs, tag = 'smem constant byte address 0x4 - core index']
  #allocation1 [shape = 'u32[144,128]{1,0:T(1,128)}', space=vmem, size = 0x12000, scoped, tag = 'internal scratch']
  #allocation2 [shape = 'f32[8,128]{1,0:T(8,128)}', space=vmem, size = 0x1000, scoped, tag = 'scratch operand']
  #allocation3 [shape = 'f32[8,128]{1,0:T(8,128)}', space=vmem, size = 0x1000, scoped, tag = 'scratch operand']
  #allocation4 [shape = 'f32[8,128]{1,0:T(8,128)}', space=vmem, size = 0x1000, scoped, tag = 'scratch operand']
  #allocation5 [shape = 'f32[8,128]{1,0:T(8,128)}', space=vmem, size = 0x1000, scoped, tag = 'scratch operand']
  %s0 = inlined_call_operand.hbm [shape: f32[8,8,128], index: 0, kind: input, shape index: {}]
  %s1 = inlined_call_operand.hbm [shape: f32[256,512], index: 1, kind: input, shape index: {}]
  %s2 = inlined_call_operand.vmem [shape: f32[1,512], index: 2, kind: input, shape index: {}]
  %s3 = inlined_call_operand.hbm [shape: f32[256,512], index: 3, kind: input, shape index: {}]
  %s4 = inlined_call_operand.vmem [shape: f32[1,512], index: 4, kind: input, shape index: {}]
  %s5 = inlined_call_operand.hbm [shape: f32[128,128], index: 5, kind: input, shape index: {}]
  %s6 = inlined_call_operand.vmem [shape: f32[1,128], index: 6, kind: input, shape index: {}]
  %s7 = inlined_call_operand.hbm [shape: f32[8,128], index: 7, kind: output, shape index: {0}]
  %s8 = inlined_call_operand.hbm [shape: f32[8,128], index: 8, kind: output, shape index: {1}]
  %9 = xla_tuple %s7, %s8
  %s10 = sld [smem:[#allocation0]]
  $region70: #{tpu_custom_call.1} parent=0
    _
  %s12 = ssub.s32 1, %s10
  %s13 = scalar_select 0, %s12, %s10
  $region1: #{tpu_custom_call.1} parent=0
    #allocation6 [shape = 'u8[32768]{0}', space=vmem, size = 0x8000, scoped, tag = 'input window, operand 0, single buffered']
    #allocation7 [shape = 's32[1]{0}', space=sflag, size = 0x4, scoped, tag = 'scoped memory for tpu_custom_call.1']
    #allocation8 [shape = 's32[1]{0}', space=sflag, size = 0x4, scoped, tag = 'scoped memory for tpu_custom_call.1']
    #allocation9 [shape = 'u8[524288]{0}', space=vmem, size = 0x80000, scoped, tag = 'input window, operand 1, single buffered']
    #allocation10 [shape = 's32[1]{0}', space=sflag, size = 0x4, scoped, tag = 'scoped memory for tpu_custom_call.1']
    #allocation11 [shape = 'u8[524288]{0}', space=vmem, size = 0x80000, scoped, tag = 'input window, operand 3, single buffered']
    #allocation12 [shape = 'u8[65536]{0}', space=vmem, size = 0x10000, scoped, tag = 'input window, operand 5, single buffered']
    #allocation13 [shape = 's32[1]{0}', space=sflag, size = 0x4, scoped, tag = 'scoped memory for tpu_custom_call.1']
    #allocation14 [shape = 'u8[4096]{0}', space=vmem, size = 0x1000, scoped, tag = 'output window, operand 0, single buffered']
    #allocation15 [shape = 'u8[4096]{0}', space=vmem, size = 0x1000, scoped, tag = 'output window, operand 1, single buffered']
    #allocation16 [shape = 's32[1]{0}', space=sflag, size = 0x4, scoped, tag = 'scoped memory for tpu_custom_call.1']
    %14 = vsyncpa [#allocation7], 0
    %15 = vsyncpa [#allocation10], 0
    %16 = vsyncpa [#allocation13], 0
    %17 = vsyncpa [#allocation8], 0
    %18 = vsyncpa [#allocation16], 0
    // Predicated region
    $region2: #{tpu_custom_call.1} parent=1 // pred_check
      _
    $region3: #{tpu_custom_call.1} parent=1 // pred_check_branch
      %20 = sbr.rel (0) target = $region5
    $region4: #{tpu_custom_call.1} parent=1 // pred_region
      %s22 = ssub.s32 1024, 1024
      %23 = vsyncadd [#allocation7], %s22
      %s24 = sshll.u32 [#allocation6], 4
      %s25 = int_to_ptr.vmem [resolvable:$true] %s24
      %30 = dma.hbm_to_vmem [thread:$0]  %s0, 1024, %s25, [#allocation7], 128, 128, 8
    $region5: #{tpu_custom_call.1} parent=1 // pred_fallthru
      _
    // Predicated region
    $region6: #{tpu_custom_call.1} parent=1 // pred_check
      _
    $region7: #{tpu_custom_call.1} parent=1 // pred_check_branch
      %32 = sbr.rel (0) target = $region9
    $region8: #{tpu_custom_call.1} parent=1 // pred_region
      %s34 = ssub.s32 16384, 16384
      %35 = vsyncadd [#allocation10], %s34
      %s36 = sshll.u32 [#allocation9], 4
      %s37 = int_to_ptr.vmem [resolvable:$true] %s36
      %42 = dma.hbm_to_vmem [thread:$0]  %s1, 16384, %s37, [#allocation10], 512, 512, 32
    $region9: #{tpu_custom_call.1} parent=1 // pred_fallthru
      _
    // Predicated region
    $region10: #{tpu_custom_call.1} parent=1 // pred_check
      _
    $region11: #{tpu_custom_call.1} parent=1 // pred_check_branch
      %44 = sbr.rel (0) target = $region13
    $region12: #{tpu_custom_call.1} parent=1 // pred_region
      _
    $region13: #{tpu_custom_call.1} parent=1 // pred_fallthru
      _
    // Predicated region
    $region14: #{tpu_custom_call.1} parent=1 // pred_check
      _
    $region15: #{tpu_custom_call.1} parent=1 // pred_check_branch
      %46 = sbr.rel (0) target = $region17
    $region16: #{tpu_custom_call.1} parent=1 // pred_region
      %s48 = ssub.s32 16384, 16384
      %49 = vsyncadd [#allocation10], %s48
      %s50 = sshll.u32 [#allocation11], 4
      %s51 = int_to_ptr.vmem [resolvable:$true] %s50
      %56 = dma.hbm_to_vmem [thread:$0]  %s3, 16384, %s51, [#allocation10], 512, 512, 32
    $region17: #{tpu_custom_call.1} parent=1 // pred_fallthru
      _
    // Predicated region
    $region18: #{tpu_custom_call.1} parent=1 // pred_check
      _
    $region19: #{tpu_custom_call.1} parent=1 // pred_check_branch
      %58 = sbr.rel (0) target = $region21
    $region20: #{tpu_custom_call.1} parent=1 // pred_region
      _
    $region21: #{tpu_custom_call.1} parent=1 // pred_fallthru
      _
    // Predicated region
    $region22: #{tpu_custom_call.1} parent=1 // pred_check
      _
    $region23: #{tpu_custom_call.1} parent=1 // pred_check_branch
      %60 = sbr.rel (0) target = $region25
    $region24: #{tpu_custom_call.1} parent=1 // pred_region
      %s62 = ssub.s32 2048, 2048
      %63 = vsyncadd [#allocation13], %s62
      %s64 = sshll.u32 [#allocation12], 4
      %s65 = int_to_ptr.vmem [resolvable:$true] %s64
      %70 = dma.hbm_to_vmem [thread:$0]  %s5, 2048, %s65, [#allocation13], 128, 128, 8
    $region25: #{tpu_custom_call.1} parent=1 // pred_fallthru
      _
    // Predicated region
    $region26: #{tpu_custom_call.1} parent=1 // pred_check
      _
    $region27: #{tpu_custom_call.1} parent=1 // pred_check_branch
      %72 = sbr.rel (0) target = $region29
    $region28: #{tpu_custom_call.1} parent=1 // pred_region
      _
    $region29: #{tpu_custom_call.1} parent=1 // pred_fallthru
      _
    // Predicated region
    $region30: #{tpu_custom_call.1} parent=1 // pred_check
      _
    $region31: #{tpu_custom_call.1} parent=1 // pred_check_branch
      %74 = sbr.rel (0) target = $region33
    $region32: #{tpu_custom_call.1} parent=1 // pred_region
      %75 = dma.done [#allocation7], 1024
    $region33: #{tpu_custom_call.1} parent=1 // pred_fallthru
      _
    // Predicated region
    $region34: #{tpu_custom_call.1} parent=1 // pred_check
      _
    $region35: #{tpu_custom_call.1} parent=1 // pred_check_branch
      %77 = sbr.rel (0) target = $region37
    $region36: #{tpu_custom_call.1} parent=1 // pred_region
      %78 = dma.done [#allocation10], 16384
    $region37: #{tpu_custom_call.1} parent=1 // pred_fallthru
      _
    // Predicated region
    $region38: #{tpu_custom_call.1} parent=1 // pred_check
      _
    $region39: #{tpu_custom_call.1} parent=1 // pred_check_branch
      %80 = sbr.rel (0) target = $region41
    $region40: #{tpu_custom_call.1} parent=1 // pred_region
      %81 = dma.done [#allocation10], 16384
    $region41: #{tpu_custom_call.1} parent=1 // pred_fallthru
      _
    // Predicated region
    $region42: #{tpu_custom_call.1} parent=1 // pred_check
      _
    $region43: #{tpu_custom_call.1} parent=1 // pred_check_branch
      %83 = sbr.rel (0) target = $region45
    $region44: #{tpu_custom_call.1} parent=1 // pred_region
      %84 = dma.done [#allocation13], 2048
    $region45: #{tpu_custom_call.1} parent=1 // pred_fallthru
      _
    %p85 = scmp.eq.s32.totalorder 0, 0
    // Predicated region
    $region46: #{tpu_custom_call.1} parent=1 // pred_check
      %p86 = pneg %p85
    $region47: #{tpu_custom_call.1} parent=1 // pred_check_branch
      %88 = sbr.rel (%p86) target = $region49
    $region48: #{tpu_custom_call.1} parent=1 // pred_region
      %89 = vst [vmem:[#allocation2] sm:$0xff] 0.0
      %90 = vst [vmem:[#allocation3] sm:$0xff] 0.0
      %91 = vst [vmem:[#allocation4] sm:$0xff] 0.0
      %92 = vst [vmem:[#allocation5] sm:$0xff] 0.0
    $region49: #{tpu_custom_call.1} parent=1 // pred_fallthru
      _
    %v93 = vld [vmem:[#allocation9] sm:$0xff]
    %v94 = vld [vmem:[#allocation9 + $0x8] sm:$0xff]
    %v95 = vld [vmem:[#allocation9 + $0x10] sm:$0xff]
    %v96 = vld [vmem:[#allocation9 + $0x18] sm:$0xff]
    %v97 = vld [vmem:[#allocation9 + $0x20] sm:$0xff]
    %v98 = vld [vmem:[#allocation9 + $0x28] sm:$0xff]
    %v99 = vld [vmem:[#allocation9 + $0x30] sm:$0xff]
    %v100 = vld [vmem:[#allocation9 + $0x38] sm:$0xff]
    %v101 = vld [vmem:[#allocation9 + $0x40] sm:$0xff]
    %v102 = vld [vmem:[#allocation9 + $0x48] sm:$0xff]
    %v103 = vld [vmem:[#allocation9 + $0x50] sm:$0xff]
    %v104 = vld [vmem:[#allocation9 + $0x58] sm:$0xff]
    %v105 = vld [vmem:[#allocation9 + $0x60] sm:$0xff]
    %v106 = vld [vmem:[#allocation9 + $0x68] sm:$0xff]
    %v107 = vld [vmem:[#allocation9 + $0x70] sm:$0xff]
    %v108 = vld [vmem:[#allocation9 + $0x78] sm:$0xff]
    %v109 = vld [vmem:[#allocation9 + $0x80] sm:$0xff]
    %v110 = vld [vmem:[#allocation9 + $0x88] sm:$0xff]
    %v111 = vld [vmem:[#allocation9 + $0x90] sm:$0xff]
    %v112 = vld [vmem:[#allocation9 + $0x98] sm:$0xff]
    %v113 = vld [vmem:[#allocation9 + $0xa0] sm:$0xff]
    %v114 = vld [vmem:[#allocation9 + $0xa8] sm:$0xff]
    %v115 = vld [vmem:[#allocation9 + $0xb0] sm:$0xff]
    %v116 = vld [vmem:[#allocation9 + $0xb8] sm:$0xff]
    %v117 = vld [vmem:[#allocation9 + $0xc0] sm:$0xff]
    %v118 = vld [vmem:[#allocation9 + $0xc8] sm:$0xff]
    %v119 = vld [vmem:[#allocation9 + $0xd0] sm:$0xff]
    %v120 = vld [vmem:[#allocation9 + $0xd8] sm:$0xff]
    %v121 = vld [vmem:[#allocation9 + $0xe0] sm:$0xff]
    %v122 = vld [vmem:[#allocation9 + $0xe8] sm:$0xff]
    %v123 = vld [vmem:[#allocation9 + $0xf0] sm:$0xff]
    %v124 = vld [vmem:[#allocation9 + $0xf8] sm:$0xff]
    %v125 = vld [vmem:[#allocation9 + $0x100] sm:$0xff]
    %v126 = vld [vmem:[#allocation9 + $0x108] sm:$0xff]
    %v127 = vld [vmem:[#allocation9 + $0x110] sm:$0xff]
    %v128 = vld [vmem:[#allocation9 + $0x118] sm:$0xff]
    %v129 = vld [vmem:[#allocation9 + $0x120] sm:$0xff]
    %v130 = vld [vmem:[#allocation9 + $0x128] sm:$0xff]
    %v131 = vld [vmem:[#allocation9 + $0x130] sm:$0xff]
    %v132 = vld [vmem:[#allocation9 + $0x138] sm:$0xff]
    %v133 = vld [vmem:[#allocation9 + $0x140] sm:$0xff]
    %v134 = vld [vmem:[#allocation9 + $0x148] sm:$0xff]
    %v135 = vld [vmem:[#allocation9 + $0x150] sm:$0xff]
    %v136 = vld [vmem:[#allocation9 + $0x158] sm:$0xff]
    %v137 = vld [vmem:[#allocation9 + $0x160] sm:$0xff]
    %v138 = vld [vmem:[#allocation9 + $0x168] sm:$0xff]
    %v139 = vld [vmem:[#allocation9 + $0x170] sm:$0xff]
    %v140 = vld [vmem:[#allocation9 + $0x178] sm:$0xff]
    %v141 = vld [vmem:[#allocation9 + $0x180] sm:$0xff]
    %v142 = vld [vmem:[#allocation9 + $0x188] sm:$0xff]
    %v143 = vld [vmem:[#allocation9 + $0x190] sm:$0xff]
    %v144 = vld [vmem:[#allocation9 + $0x198] sm:$0xff]
    %v145 = vld [vmem:[#allocation9 + $0x1a0] sm:$0xff]
    %v146 = vld [vmem:[#allocation9 + $0x1a8] sm:$0xff]
    %v147 = vld [vmem:[#allocation9 + $0x1b0] sm:$0xff]
    %v148 = vld [vmem:[#allocation9 + $0x1b8] sm:$0xff]
    %v149 = vld [vmem:[#allocation9 + $0x1c0] sm:$0xff]
    %v150 = vld [vmem:[#allocation9 + $0x1c8] sm:$0xff]
    %v151 = vld [vmem:[#allocation9 + $0x1d0] sm:$0xff]
    %v152 = vld [vmem:[#allocation9 + $0x1d8] sm:$0xff]
    %v153 = vld [vmem:[#allocation9 + $0x1e0] sm:$0xff]
    %v154 = vld [vmem:[#allocation9 + $0x1e8] sm:$0xff]
    %v155 = vld [vmem:[#allocation9 + $0x1f0] sm:$0xff]
    %v156 = vld [vmem:[#allocation9 + $0x1f8] sm:$0xff]
    %v157 = vld [vmem:[#allocation9 + $0x200] sm:$0xff]
    %v158 = vld [vmem:[#allocation9 + $0x208] sm:$0xff]
    %v159 = vld [vmem:[#allocation9 + $0x210] sm:$0xff]
    %v160 = vld [vmem:[#allocation9 + $0x218] sm:$0xff]
    %v161 = vld [vmem:[#allocation9 + $0x220] sm:$0xff]
    %v162 = vld [vmem:[#allocation9 + $0x228] sm:$0xff]
    %v163 = vld [vmem:[#allocation9 + $0x230] sm:$0xff]
    %v164 = vld [vmem:[#allocation9 + $0x238] sm:$0xff]
    %v165 = vld [vmem:[#allocation9 + $0x240] sm:$0xff]
    %v166 = vld [vmem:[#allocation9 + $0x248] sm:$0xff]
    %v167 = vld [vmem:[#allocation9 + $0x250] sm:$0xff]
    %v168 = vld [vmem:[#allocation9 + $0x258] sm:$0xff]
    %v169 = vld [vmem:[#allocation9 + $0x260] sm:$0xff]
    %v170 = vld [vmem:[#allocation9 + $0x268] sm:$0xff]
    %v171 = vld [vmem:[#allocation9 + $0x270] sm:$0xff]
    %v172 = vld [vmem:[#allocation9 + $0x278] sm:$0xff]
    %v173 = vld [vmem:[#allocation9 + $0x280] sm:$0xff]
    %v174 = vld [vmem:[#allocation9 + $0x288] sm:$0xff]
    %v175 = vld [vmem:[#allocation9 + $0x290] sm:$0xff]
    %v176 = vld [vmem:[#allocation9 + $0x298] sm:$0xff]
    %v177 = vld [vmem:[#allocation9 + $0x2a0] sm:$0xff]
    %v178 = vld [vmem:[#allocation9 + $0x2a8] sm:$0xff]
    %v179 = vld [vmem:[#allocation9 + $0x2b0] sm:$0xff]
    %v180 = vld [vmem:[#allocation9 + $0x2b8] sm:$0xff]
    %v181 = vld [vmem:[#allocation9 + $0x2c0] sm:$0xff]
    %v182 = vld [vmem:[#allocation9 + $0x2c8] sm:$0xff]
    %v183 = vld [vmem:[#allocation9 + $0x2d0] sm:$0xff]
    %v184 = vld [vmem:[#allocation9 + $0x2d8] sm:$0xff]
    %v185 = vld [vmem:[#allocation9 + $0x2e0] sm:$0xff]
    %v186 = vld [vmem:[#allocation9 + $0x2e8] sm:$0xff]
    %v187 = vld [vmem:[#allocation9 + $0x2f0] sm:$0xff]
    %v188 = vld [vmem:[#allocation9 + $0x2f8] sm:$0xff]
    %v189 = vld [vmem:[#allocation9 + $0x300] sm:$0xff]
    %v190 = vld [vmem:[#allocation9 + $0x308] sm:$0xff]
    %v191 = vld [vmem:[#allocation9 + $0x310] sm:$0xff]
    %v192 = vld [vmem:[#allocation9 + $0x318] sm:$0xff]
    %v193 = vld [vmem:[#allocation9 + $0x320] sm:$0xff]
    %v194 = vld [vmem:[#allocation9 + $0x328] sm:$0xff]
    %v195 = vld [vmem:[#allocation9 + $0x330] sm:$0xff]
    %v196 = vld [vmem:[#allocation9 + $0x338] sm:$0xff]
    %v197 = vld [vmem:[#allocation9 + $0x340] sm:$0xff]
    %v198 = vld [vmem:[#allocation9 + $0x348] sm:$0xff]
    %v199 = vld [vmem:[#allocation9 + $0x350] sm:$0xff]
    %v200 = vld [vmem:[#allocation9 + $0x358] sm:$0xff]
    %v201 = vld [vmem:[#allocation9 + $0x360] sm:$0xff]
    %v202 = vld [vmem:[#allocation9 + $0x368] sm:$0xff]
    %v203 = vld [vmem:[#allocation9 + $0x370] sm:$0xff]
    %v204 = vld [vmem:[#allocation9 + $0x378] sm:$0xff]
    %v205 = vld [vmem:[#allocation9 + $0x380] sm:$0xff]
    %v206 = vld [vmem:[#allocation9 + $0x388] sm:$0xff]
    %v207 = vld [vmem:[#allocation9 + $0x390] sm:$0xff]
    %v208 = vld [vmem:[#allocation9 + $0x398] sm:$0xff]
    %v209 = vld [vmem:[#allocation9 + $0x3a0] sm:$0xff]
    %v210 = vld [vmem:[#allocation9 + $0x3a8] sm:$0xff]
    %v211 = vld [vmem:[#allocation9 + $0x3b0] sm:$0xff]
    %v212 = vld [vmem:[#allocation9 + $0x3b8] sm:$0xff]
    %v213 = vld [vmem:[#allocation9 + $0x3c0] sm:$0xff]
    %v214 = vld [vmem:[#allocation9 + $0x3c8] sm:$0xff]
    %v215 = vld [vmem:[#allocation9 + $0x3d0] sm:$0xff]
    %v216 = vld [vmem:[#allocation9 + $0x3d8] sm:$0xff]
    %v217 = vld [vmem:[#allocation9 + $0x3e0] sm:$0xff]
    %v218 = vld [vmem:[#allocation9 + $0x3e8] sm:$0xff]
    %v219 = vld [vmem:[#allocation9 + $0x3f0] sm:$0xff]
    %v220 = vld [vmem:[#allocation9 + $0x3f8] sm:$0xff]
    %v221 = vld [vmem:[#allocation11] sm:$0xff]
    %v222 = vld [vmem:[#allocation11 + $0x8] sm:$0xff]
    %v223 = vld [vmem:[#allocation11 + $0x10] sm:$0xff]
    %v224 = vld [vmem:[#allocation11 + $0x18] sm:$0xff]
    %v225 = vld [vmem:[#allocation11 + $0x20] sm:$0xff]
    %v226 = vld [vmem:[#allocation11 + $0x28] sm:$0xff]
    %v227 = vld [vmem:[#allocation11 + $0x30] sm:$0xff]
    %v228 = vld [vmem:[#allocation11 + $0x38] sm:$0xff]
    %v229 = vld [vmem:[#allocation11 + $0x40] sm:$0xff]
    %v230 = vld [vmem:[#allocation11 + $0x48] sm:$0xff]
    %v231 = vld [vmem:[#allocation11 + $0x50] sm:$0xff]
    %v232 = vld [vmem:[#allocation11 + $0x58] sm:$0xff]
    %v233 = vld [vmem:[#allocation11 + $0x60] sm:$0xff]
    %v234 = vld [vmem:[#allocation11 + $0x68] sm:$0xff]
    %v235 = vld [vmem:[#allocation11 + $0x70] sm:$0xff]
    %v236 = vld [vmem:[#allocation11 + $0x78] sm:$0xff]
    %v237 = vld [vmem:[#allocation11 + $0x80] sm:$0xff]
    %v238 = vld [vmem:[#allocation11 + $0x88] sm:$0xff]
    %v239 = vld [vmem:[#allocation11 + $0x90] sm:$0xff]
    %v240 = vld [vmem:[#allocation11 + $0x98] sm:$0xff]
    %v241 = vld [vmem:[#allocation11 + $0xa0] sm:$0xff]
    %v242 = vld [vmem:[#allocation11 + $0xa8] sm:$0xff]
    %v243 = vld [vmem:[#allocation11 + $0xb0] sm:$0xff]
    %v244 = vld [vmem:[#allocation11 + $0xb8] sm:$0xff]
    %v245 = vld [vmem:[#allocation11 + $0xc0] sm:$0xff]
    %v246 = vld [vmem:[#allocation11 + $0xc8] sm:$0xff]
    %v247 = vld [vmem:[#allocation11 + $0xd0] sm:$0xff]
    %v248 = vld [vmem:[#allocation11 + $0xd8] sm:$0xff]
    %v249 = vld [vmem:[#allocation11 + $0xe0] sm:$0xff]
    %v250 = vld [vmem:[#allocation11 + $0xe8] sm:$0xff]
    %v251 = vld [vmem:[#allocation11 + $0xf0] sm:$0xff]
    %v252 = vld [vmem:[#allocation11 + $0xf8] sm:$0xff]
    %v253 = vld [vmem:[#allocation11 + $0x100] sm:$0xff]
    %v254 = vld [vmem:[#allocation11 + $0x108] sm:$0xff]
    %v255 = vld [vmem:[#allocation11 + $0x110] sm:$0xff]
    %v256 = vld [vmem:[#allocation11 + $0x118] sm:$0xff]
    %v257 = vld [vmem:[#allocation11 + $0x120] sm:$0xff]
    %v258 = vld [vmem:[#allocation11 + $0x128] sm:$0xff]
    %v259 = vld [vmem:[#allocation11 + $0x130] sm:$0xff]
    %v260 = vld [vmem:[#allocation11 + $0x138] sm:$0xff]
    %v261 = vld [vmem:[#allocation11 + $0x140] sm:$0xff]
    %v262 = vld [vmem:[#allocation11 + $0x148] sm:$0xff]
    %v263 = vld [vmem:[#allocation11 + $0x150] sm:$0xff]
    %v264 = vld [vmem:[#allocation11 + $0x158] sm:$0xff]
    %v265 = vld [vmem:[#allocation11 + $0x160] sm:$0xff]
    %v266 = vld [vmem:[#allocation11 + $0x168] sm:$0xff]
    %v267 = vld [vmem:[#allocation11 + $0x170] sm:$0xff]
    %v268 = vld [vmem:[#allocation11 + $0x178] sm:$0xff]
    %v269 = vld [vmem:[#allocation11 + $0x180] sm:$0xff]
    %v270 = vld [vmem:[#allocation11 + $0x188] sm:$0xff]
    %v271 = vld [vmem:[#allocation11 + $0x190] sm:$0xff]
    %v272 = vld [vmem:[#allocation11 + $0x198] sm:$0xff]
    %v273 = vld [vmem:[#allocation11 + $0x1a0] sm:$0xff]
    %v274 = vld [vmem:[#allocation11 + $0x1a8] sm:$0xff]
    %v275 = vld [vmem:[#allocation11 + $0x1b0] sm:$0xff]
    %v276 = vld [vmem:[#allocation11 + $0x1b8] sm:$0xff]
    %v277 = vld [vmem:[#allocation11 + $0x1c0] sm:$0xff]
    %v278 = vld [vmem:[#allocation11 + $0x1c8] sm:$0xff]
    %v279 = vld [vmem:[#allocation11 + $0x1d0] sm:$0xff]
    %v280 = vld [vmem:[#allocation11 + $0x1d8] sm:$0xff]
    %v281 = vld [vmem:[#allocation11 + $0x1e0] sm:$0xff]
    %v282 = vld [vmem:[#allocation11 + $0x1e8] sm:$0xff]
    %v283 = vld [vmem:[#allocation11 + $0x1f0] sm:$0xff]
    %v284 = vld [vmem:[#allocation11 + $0x1f8] sm:$0xff]
    %v285 = vld [vmem:[#allocation11 + $0x200] sm:$0xff]
    %v286 = vld [vmem:[#allocation11 + $0x208] sm:$0xff]
    %v287 = vld [vmem:[#allocation11 + $0x210] sm:$0xff]
    %v288 = vld [vmem:[#allocation11 + $0x218] sm:$0xff]
    %v289 = vld [vmem:[#allocation11 + $0x220] sm:$0xff]
    %v290 = vld [vmem:[#allocation11 + $0x228] sm:$0xff]
    %v291 = vld [vmem:[#allocation11 + $0x230] sm:$0xff]
    %v292 = vld [vmem:[#allocation11 + $0x238] sm:$0xff]
    %v293 = vld [vmem:[#allocation11 + $0x240] sm:$0xff]
    %v294 = vld [vmem:[#allocation11 + $0x248] sm:$0xff]
    %v295 = vld [vmem:[#allocation11 + $0x250] sm:$0xff]
    %v296 = vld [vmem:[#allocation11 + $0x258] sm:$0xff]
    %v297 = vld [vmem:[#allocation11 + $0x260] sm:$0xff]
    %v298 = vld [vmem:[#allocation11 + $0x268] sm:$0xff]
    %v299 = vld [vmem:[#allocation11 + $0x270] sm:$0xff]
    %v300 = vld [vmem:[#allocation11 + $0x278] sm:$0xff]
    %v301 = vld [vmem:[#allocation11 + $0x280] sm:$0xff]
    %v302 = vld [vmem:[#allocation11 + $0x288] sm:$0xff]
    %v303 = vld [vmem:[#allocation11 + $0x290] sm:$0xff]
    %v304 = vld [vmem:[#allocation11 + $0x298] sm:$0xff]
    %v305 = vld [vmem:[#allocation11 + $0x2a0] sm:$0xff]
    %v306 = vld [vmem:[#allocation11 + $0x2a8] sm:$0xff]
    %v307 = vld [vmem:[#allocation11 + $0x2b0] sm:$0xff]
    %v308 = vld [vmem:[#allocation11 + $0x2b8] sm:$0xff]
    %v309 = vld [vmem:[#allocation11 + $0x2c0] sm:$0xff]
    %v310 = vld [vmem:[#allocation11 + $0x2c8] sm:$0xff]
    %v311 = vld [vmem:[#allocation11 + $0x2d0] sm:$0xff]
    %v312 = vld [vmem:[#allocation11 + $0x2d8] sm:$0xff]
    %v313 = vld [vmem:[#allocation11 + $0x2e0] sm:$0xff]
    %v314 = vld [vmem:[#allocation11 + $0x2e8] sm:$0xff]
    %v315 = vld [vmem:[#allocation11 + $0x2f0] sm:$0xff]
    %v316 = vld [vmem:[#allocation11 + $0x2f8] sm:$0xff]
    %v317 = vld [vmem:[#allocation11 + $0x300] sm:$0xff]
    %v318 = vld [vmem:[#allocation11 + $0x308] sm:$0xff]
    %v319 = vld [vmem:[#allocation11 + $0x310] sm:$0xff]
    %v320 = vld [vmem:[#allocation11 + $0x318] sm:$0xff]
    %v321 = vld [vmem:[#allocation11 + $0x320] sm:$0xff]
    %v322 = vld [vmem:[#allocation11 + $0x328] sm:$0xff]
    %v323 = vld [vmem:[#allocation11 + $0x330] sm:$0xff]
    %v324 = vld [vmem:[#allocation11 + $0x338] sm:$0xff]
    %v325 = vld [vmem:[#allocation11 + $0x340] sm:$0xff]
    %v326 = vld [vmem:[#allocation11 + $0x348] sm:$0xff]
    %v327 = vld [vmem:[#allocation11 + $0x350] sm:$0xff]
    %v328 = vld [vmem:[#allocation11 + $0x358] sm:$0xff]
    %v329 = vld [vmem:[#allocation11 + $0x360] sm:$0xff]
    %v330 = vld [vmem:[#allocation11 + $0x368] sm:$0xff]
    %v331 = vld [vmem:[#allocation11 + $0x370] sm:$0xff]
    %v332 = vld [vmem:[#allocation11 + $0x378] sm:$0xff]
    %v333 = vld [vmem:[#allocation11 + $0x380] sm:$0xff]
    %v334 = vld [vmem:[#allocation11 + $0x388] sm:$0xff]
    %v335 = vld [vmem:[#allocation11 + $0x390] sm:$0xff]
    %v336 = vld [vmem:[#allocation11 + $0x398] sm:$0xff]
    %v337 = vld [vmem:[#allocation11 + $0x3a0] sm:$0xff]
    %v338 = vld [vmem:[#allocation11 + $0x3a8] sm:$0xff]
    %v339 = vld [vmem:[#allocation11 + $0x3b0] sm:$0xff]
    %v340 = vld [vmem:[#allocation11 + $0x3b8] sm:$0xff]
    %v341 = vld [vmem:[#allocation11 + $0x3c0] sm:$0xff]
    %v342 = vld [vmem:[#allocation11 + $0x3c8] sm:$0xff]
    %v343 = vld [vmem:[#allocation11 + $0x3d0] sm:$0xff]
    %v344 = vld [vmem:[#allocation11 + $0x3d8] sm:$0xff]
    %v345 = vld [vmem:[#allocation11 + $0x3e0] sm:$0xff]
    %v346 = vld [vmem:[#allocation11 + $0x3e8] sm:$0xff]
    %v347 = vld [vmem:[#allocation11 + $0x3f0] sm:$0xff]
    %v348 = vld [vmem:[#allocation11 + $0x3f8] sm:$0xff]
    %v349 = vld [vmem:[%s2] sm:$0xf]
    %v351 = vlaneseq
    %v352 = vshrl.u32 %v351, 7
    %v353 = vsub.s32 0, %v352
    %v354 = vrot.slane %v349, %v353
    %v355 = vlaneseq
    %v356 = vshrl.u32 %v355, 7
    %v357 = vsub.s32 1, %v356
    %v358 = vrot.slane %v349, %v357
    %v359 = vlaneseq
    %v360 = vshrl.u32 %v359, 7
    %v361 = vsub.s32 2, %v360
    %v362 = vrot.slane %v349, %v361
    %v363 = vlaneseq
    %v364 = vshrl.u32 %v363, 7
    %v365 = vsub.s32 3, %v364
    %v366 = vrot.slane %v349, %v365
    %v371 = vld [vmem:[%s4] sm:$0xf]
    %v373 = vlaneseq
    %v374 = vshrl.u32 %v373, 7
    %v375 = vsub.s32 0, %v374
    %v376 = vrot.slane %v371, %v375
    %v377 = vlaneseq
    %v378 = vshrl.u32 %v377, 7
    %v379 = vsub.s32 1, %v378
    %v380 = vrot.slane %v371, %v379
    %v381 = vlaneseq
    %v382 = vshrl.u32 %v381, 7
    %v383 = vsub.s32 2, %v382
    %v384 = vrot.slane %v371, %v383
    %v385 = vlaneseq
    %v386 = vshrl.u32 %v385, 7
    %v387 = vsub.s32 3, %v386
    %v388 = vrot.slane %v371, %v387
    %v393 = vld [vmem:[#allocation2] sm:$0xff]
    %v394 = vld [vmem:[#allocation3] sm:$0xff]
    %v395 = vld [vmem:[#allocation4] sm:$0xff]
    %v396 = vld [vmem:[#allocation5] sm:$0xff]
    %v397 = vld [vmem:[#allocation6] sm:$0xff]
    %398 = vmatprep.subr.mxu0 %v94
    %399 = vmatpush1.msra.mxu0 %v93
    %400 = vmatprep.subr.mxu0 %v98
    %401 = vmatpush1.msra.mxu0 %v97
    %402 = vmatprep.subr.mxu0 %v102
    %403 = vmatpush1.msra.mxu0 %v101
    %404 = vmatprep.subr.mxu0 %v106
    %405 = vmatpush1.msra.mxu0 %v105
    %406 = vmatprep.subr.mxu0 %v110
    %407 = vmatpush1.msra.mxu0 %v109
    %408 = vmatprep.subr.mxu0 %v114
    %409 = vmatpush1.msra.mxu0 %v113
    %410 = vmatprep.subr.mxu0 %v118
    %411 = vmatpush1.msra.mxu0 %v117
    %412 = vmatprep.subr.mxu0 %v122
    %413 = vmatpush1.msra.mxu0 %v121
    %414 = vmatprep.subr.mxu0 %v126
    %415 = vmatpush1.msra.mxu0 %v125
    %416 = vmatprep.subr.mxu0 %v130
    %417 = vmatpush1.msra.mxu0 %v129
    %418 = vmatprep.subr.mxu0 %v134
    %419 = vmatpush1.msra.mxu0 %v133
    %420 = vmatprep.subr.mxu0 %v138
    %421 = vmatpush1.msra.mxu0 %v137
    %422 = vmatprep.subr.mxu0 %v142
    %423 = vmatpush1.msra.mxu0 %v141
    %424 = vmatprep.subr.mxu0 %v146
    %425 = vmatpush1.msra.mxu0 %v145
    %426 = vmatprep.subr.mxu0 %v150
    %427 = vmatpush1.msra.mxu0 %v149
    %428 = vmatprep.subr.mxu0 %v154
    %429 = vmatpush1.msra.mxu0 %v153
    %430 = vmatprep.subr.mxu0 %v158
    %431 = vmatpush1.msra.mxu0 %v157
    %432 = vmatprep.subr.mxu0 %v162
    %433 = vmatpush1.msra.mxu0 %v161
    %434 = vmatprep.subr.mxu0 %v166
    %435 = vmatpush1.msra.mxu0 %v165
    %436 = vmatprep.subr.mxu0 %v170
    %437 = vmatpush1.msra.mxu0 %v169
    %438 = vmatprep.subr.mxu0 %v174
    %439 = vmatpush1.msra.mxu0 %v173
    %440 = vmatprep.subr.mxu0 %v178
    %441 = vmatpush1.msra.mxu0 %v177
    %442 = vmatprep.subr.mxu0 %v182
    %443 = vmatpush1.msra.mxu0 %v181
    %444 = vmatprep.subr.mxu0 %v186
    %445 = vmatpush1.msra.mxu0 %v185
    %446 = vmatprep.subr.mxu0 %v190
    %447 = vmatpush1.msra.mxu0 %v189
    %448 = vmatprep.subr.mxu0 %v194
    %449 = vmatpush1.msra.mxu0 %v193
    %450 = vmatprep.subr.mxu0 %v198
    %451 = vmatpush1.msra.mxu0 %v197
    %452 = vmatprep.subr.mxu0 %v202
    %453 = vmatpush1.msra.mxu0 %v201
    %454 = vmatprep.subr.mxu0 %v206
    %455 = vmatpush1.msra.mxu0 %v205
    %456 = vmatprep.subr.mxu0 %v210
    %457 = vmatpush1.msra.mxu0 %v209
    %458 = vmatprep.subr.mxu0 %v214
    %459 = vmatpush1.msra.mxu0 %v213
    %460 = vmatprep.subr.mxu0 %v218
    %461 = vmatpush1.msra.mxu0 %v217
    %462 = vmatprep.mubr.f32.mxu0 %v393
    %463 = vmatmul.mubr.f32.gmra.mrb[0].mxu0 %v397
    %v464 = vpop.f32.mrb[0].mxu0
    %v465 = vadd.f32 %v354, %v464
    %v466 = vpop.f32.mrb[0].mxu0
    %v467 = vadd.f32 %v358, %v466
    %468 = vdwg.mxu0
    %469 = vmatprep.subr.mxu0 %v96
    %470 = vmatpush1.msra.mxu0 %v95
    %471 = vmatprep.subr.mxu0 %v100
    %472 = vmatpush1.msra.mxu0 %v99
    %473 = vmatprep.subr.mxu0 %v104
    %474 = vmatpush1.msra.mxu0 %v103
    %475 = vmatprep.subr.mxu0 %v108
    %476 = vmatpush1.msra.mxu0 %v107
    %477 = vmatprep.subr.mxu0 %v112
    %478 = vmatpush1.msra.mxu0 %v111
    %479 = vmatprep.subr.mxu0 %v116
    %480 = vmatpush1.msra.mxu0 %v115
    %481 = vmatprep.subr.mxu0 %v120
    %482 = vmatpush1.msra.mxu0 %v119
    %483 = vmatprep.subr.mxu0 %v124
    %484 = vmatpush1.msra.mxu0 %v123
    %485 = vmatprep.subr.mxu0 %v128
    %486 = vmatpush1.msra.mxu0 %v127
    %487 = vmatprep.subr.mxu0 %v132
    %488 = vmatpush1.msra.mxu0 %v131
    %489 = vmatprep.subr.mxu0 %v136
    %490 = vmatpush1.msra.mxu0 %v135
    %491 = vmatprep.subr.mxu0 %v140
    %492 = vmatpush1.msra.mxu0 %v139
    %493 = vmatprep.subr.mxu0 %v144
    %494 = vmatpush1.msra.mxu0 %v143
    %495 = vmatprep.subr.mxu0 %v148
    %496 = vmatpush1.msra.mxu0 %v147
    %497 = vmatprep.subr.mxu0 %v152
    %498 = vmatpush1.msra.mxu0 %v151
    %499 = vmatprep.subr.mxu0 %v156
    %500 = vmatpush1.msra.mxu0 %v155
    %501 = vmatprep.subr.mxu0 %v160
    %502 = vmatpush1.msra.mxu0 %v159
    %503 = vmatprep.subr.mxu0 %v164
    %504 = vmatpush1.msra.mxu0 %v163
    %505 = vmatprep.subr.mxu0 %v168
    %506 = vmatpush1.msra.mxu0 %v167
    %507 = vmatprep.subr.mxu0 %v172
    %508 = vmatpush1.msra.mxu0 %v171
    %509 = vmatprep.subr.mxu0 %v176
    %510 = vmatpush1.msra.mxu0 %v175
    %511 = vmatprep.subr.mxu0 %v180
    %512 = vmatpush1.msra.mxu0 %v179
    %513 = vmatprep.subr.mxu0 %v184
    %514 = vmatpush1.msra.mxu0 %v183
    %515 = vmatprep.subr.mxu0 %v188
    %516 = vmatpush1.msra.mxu0 %v187
    %517 = vmatprep.subr.mxu0 %v192
    %518 = vmatpush1.msra.mxu0 %v191
    %519 = vmatprep.subr.mxu0 %v196
    %520 = vmatpush1.msra.mxu0 %v195
    %521 = vmatprep.subr.mxu0 %v200
    %522 = vmatpush1.msra.mxu0 %v199
    %523 = vmatprep.subr.mxu0 %v204
    %524 = vmatpush1.msra.mxu0 %v203
    %525 = vmatprep.subr.mxu0 %v208
    %526 = vmatpush1.msra.mxu0 %v207
    %527 = vmatprep.subr.mxu0 %v212
    %528 = vmatpush1.msra.mxu0 %v211
    %529 = vmatprep.subr.mxu0 %v216
    %530 = vmatpush1.msra.mxu0 %v215
    %531 = vmatprep.subr.mxu0 %v220
    %532 = vmatpush1.msra.mxu0 %v219
    %533 = vmatprep.mubr.f32.mxu0 %v393
    %534 = vmatmul.mubr.f32.gmra.mrb[0].mxu0 %v397
    %v535 = vpop.f32.mrb[0].mxu0
    %v536 = vadd.f32 %v362, %v535
    %v537 = vpop.f32.mrb[0].mxu0
    %v538 = vadd.f32 %v366, %v537
    %539 = vdwg.mxu0
    %v540 = vxor.u32 %v465, 2147483648
    %v541 = vmul.f32 %v540, 1.442695
    %v542 = vpow.pop %v541
    %v543 = vadd.f32 %v542, 1.0
    %v544 = vrcp.pop %v543
    %v545 = vmul.f32 1.0, %v544
    %v546 = vxor.u32 %v467, 2147483648
    %v547 = vmul.f32 %v546, 1.442695
    %v548 = vpow.pop %v547
    %v549 = vadd.f32 %v548, 1.0
    %v550 = vrcp.pop %v549
    %v551 = vmul.f32 1.0, %v550
    %v552 = vtanh.pop %v536
    %v553 = vxor.u32 %v538, 2147483648
    %v554 = vmul.f32 %v553, 1.442695
    %v555 = vpow.pop %v554
    %v556 = vadd.f32 %v555, 1.0
    %v557 = vrcp.pop %v556
    %v558 = vmul.f32 1.0, %v557
    %v559 = vmul.f32 %v551, %v394
    %v560 = vmul.f32 %v545, %v552
    %v561 = vadd.f32 %v559, %v560
    %v562 = vtanh.pop %v561
    %v563 = vmul.f32 %v558, %v562
    %564 = vmatprep.subr.mxu0 %v222
    %565 = vmatpush1.msra.mxu0 %v221
    %566 = vmatprep.subr.mxu0 %v226
    %567 = vmatpush1.msra.mxu0 %v225
    %568 = vmatprep.subr.mxu0 %v230
    %569 = vmatpush1.msra.mxu0 %v229
    %570 = vmatprep.subr.mxu0 %v234
    %571 = vmatpush1.msra.mxu0 %v233
    %572 = vmatprep.subr.mxu0 %v238
    %573 = vmatpush1.msra.mxu0 %v237
    %574 = vmatprep.subr.mxu0 %v242
    %575 = vmatpush1.msra.mxu0 %v241
    %576 = vmatprep.subr.mxu0 %v246
    %577 = vmatpush1.msra.mxu0 %v245
    %578 = vmatprep.subr.mxu0 %v250
    %579 = vmatpush1.msra.mxu0 %v249
    %580 = vmatprep.subr.mxu0 %v254
    %581 = vmatpush1.msra.mxu0 %v253
    %582 = vmatprep.subr.mxu0 %v258
    %583 = vmatpush1.msra.mxu0 %v257
    %584 = vmatprep.subr.mxu0 %v262
    %585 = vmatpush1.msra.mxu0 %v261
    %586 = vmatprep.subr.mxu0 %v266
    %587 = vmatpush1.msra.mxu0 %v265
    %588 = vmatprep.subr.mxu0 %v270
    %589 = vmatpush1.msra.mxu0 %v269
    %590 = vmatprep.subr.mxu0 %v274
    %591 = vmatpush1.msra.mxu0 %v273
    %592 = vmatprep.subr.mxu0 %v278
    %593 = vmatpush1.msra.mxu0 %v277
    %594 = vmatprep.subr.mxu0 %v282
    %595 = vmatpush1.msra.mxu0 %v281
    %596 = vmatprep.subr.mxu0 %v286
    %597 = vmatpush1.msra.mxu0 %v285
    %598 = vmatprep.subr.mxu0 %v290
    %599 = vmatpush1.msra.mxu0 %v289
    %600 = vmatprep.subr.mxu0 %v294
    %601 = vmatpush1.msra.mxu0 %v293
    %602 = vmatprep.subr.mxu0 %v298
    %603 = vmatpush1.msra.mxu0 %v297
    %604 = vmatprep.subr.mxu0 %v302
    %605 = vmatpush1.msra.mxu0 %v301
    %606 = vmatprep.subr.mxu0 %v306
    %607 = vmatpush1.msra.mxu0 %v305
    %608 = vmatprep.subr.mxu0 %v310
    %609 = vmatpush1.msra.mxu0 %v309
    %610 = vmatprep.subr.mxu0 %v314
    %611 = vmatpush1.msra.mxu0 %v313
    %612 = vmatprep.subr.mxu0 %v318
    %613 = vmatpush1.msra.mxu0 %v317
    %614 = vmatprep.subr.mxu0 %v322
    %615 = vmatpush1.msra.mxu0 %v321
    %616 = vmatprep.subr.mxu0 %v326
    %617 = vmatpush1.msra.mxu0 %v325
    %618 = vmatprep.subr.mxu0 %v330
    %619 = vmatpush1.msra.mxu0 %v329
    %620 = vmatprep.subr.mxu0 %v334
    %621 = vmatpush1.msra.mxu0 %v333
    %622 = vmatprep.subr.mxu0 %v338
    %623 = vmatpush1.msra.mxu0 %v337
    %624 = vmatprep.subr.mxu0 %v342
    %625 = vmatpush1.msra.mxu0 %v341
    %626 = vmatprep.subr.mxu0 %v346
    %627 = vmatpush1.msra.mxu0 %v345
    %628 = vmatprep.mubr.f32.mxu0 %v395
    %629 = vmatmul.mubr.f32.gmra.mrb[0].mxu0 %v563
    %v630 = vpop.f32.mrb[0].mxu0
    %v631 = vadd.f32 %v376, %v630
    %v632 = vpop.f32.mrb[0].mxu0
    %v633 = vadd.f32 %v380, %v632
    %634 = vdwg.mxu0
    %635 = vmatprep.subr.mxu0 %v224
    %636 = vmatpush1.msra.mxu0 %v223
    %637 = vmatprep.subr.mxu0 %v228
    %638 = vmatpush1.msra.mxu0 %v227
    %639 = vmatprep.subr.mxu0 %v232
    %640 = vmatpush1.msra.mxu0 %v231
    %641 = vmatprep.subr.mxu0 %v236
    %642 = vmatpush1.msra.mxu0 %v235
    %643 = vmatprep.subr.mxu0 %v240
    %644 = vmatpush1.msra.mxu0 %v239
    %645 = vmatprep.subr.mxu0 %v244
    %646 = vmatpush1.msra.mxu0 %v243
    %647 = vmatprep.subr.mxu0 %v248
    %648 = vmatpush1.msra.mxu0 %v247
    %649 = vmatprep.subr.mxu0 %v252
    %650 = vmatpush1.msra.mxu0 %v251
    %651 = vmatprep.subr.mxu0 %v256
    %652 = vmatpush1.msra.mxu0 %v255
    %653 = vmatprep.subr.mxu0 %v260
    %654 = vmatpush1.msra.mxu0 %v259
    %655 = vmatprep.subr.mxu0 %v264
    %656 = vmatpush1.msra.mxu0 %v263
    %657 = vmatprep.subr.mxu0 %v268
    %658 = vmatpush1.msra.mxu0 %v267
    %659 = vmatprep.subr.mxu0 %v272
    %660 = vmatpush1.msra.mxu0 %v271
    %661 = vmatprep.subr.mxu0 %v276
    %662 = vmatpush1.msra.mxu0 %v275
    %663 = vmatprep.subr.mxu0 %v280
    %664 = vmatpush1.msra.mxu0 %v279
    %665 = vmatprep.subr.mxu0 %v284
    %666 = vmatpush1.msra.mxu0 %v283
    %667 = vmatprep.subr.mxu0 %v288
    %668 = vmatpush1.msra.mxu0 %v287
    %669 = vmatprep.subr.mxu0 %v292
    %670 = vmatpush1.msra.mxu0 %v291
    %671 = vmatprep.subr.mxu0 %v296
    %672 = vmatpush1.msra.mxu0 %v295
    %673 = vmatprep.subr.mxu0 %v300
    %674 = vmatpush1.msra.mxu0 %v299
    %675 = vmatprep.subr.mxu0 %v304
    %676 = vmatpush1.msra.mxu0 %v303
    %677 = vmatprep.subr.mxu0 %v308
    %678 = vmatpush1.msra.mxu0 %v307
    %679 = vmatprep.subr.mxu0 %v312
    %680 = vmatpush1.msra.mxu0 %v311
    %681 = vmatprep.subr.mxu0 %v316
    %682 = vmatpush1.msra.mxu0 %v315
    %683 = vmatprep.subr.mxu0 %v320
    %684 = vmatpush1.msra.mxu0 %v319
    %685 = vmatprep.subr.mxu0 %v324
    %686 = vmatpush1.msra.mxu0 %v323
    %687 = vmatprep.subr.mxu0 %v328
    %688 = vmatpush1.msra.mxu0 %v327
    %689 = vmatprep.subr.mxu0 %v332
    %690 = vmatpush1.msra.mxu0 %v331
    %691 = vmatprep.subr.mxu0 %v336
    %692 = vmatpush1.msra.mxu0 %v335
    %693 = vmatprep.subr.mxu0 %v340
    %694 = vmatpush1.msra.mxu0 %v339
    %695 = vmatprep.subr.mxu0 %v344
    %696 = vmatpush1.msra.mxu0 %v343
    %697 = vmatprep.subr.mxu0 %v348
    %698 = vmatpush1.msra.mxu0 %v347
    %699 = vmatprep.mubr.f32.mxu0 %v395
    %700 = vmatmul.mubr.f32.gmra.mrb[0].mxu0 %v563
    %v701 = vpop.f32.mrb[0].mxu0
    %v702 = vadd.f32 %v384, %v701
    %v703 = vpop.f32.mrb[0].mxu0
    %v704 = vadd.f32 %v388, %v703
    %705 = vdwg.mxu0
    %v706 = vxor.u32 %v631, 2147483648
    %v707 = vmul.f32 %v706, 1.442695
    %v708 = vpow.pop %v707
    %v709 = vadd.f32 %v708, 1.0
    %v710 = vrcp.pop %v709
    %v711 = vmul.f32 1.0, %v710
    %v712 = vxor.u32 %v633, 2147483648
    %v713 = vmul.f32 %v712, 1.442695
    %v714 = vpow.pop %v713
    %v715 = vadd.f32 %v714, 1.0
    %v716 = vrcp.pop %v715
    %v717 = vmul.f32 1.0, %v716
    %v718 = vtanh.pop %v702
    %v719 = vxor.u32 %v704, 2147483648
    %v720 = vmul.f32 %v719, 1.442695
    %v721 = vpow.pop %v720
    %v722 = vadd.f32 %v721, 1.0
    %v723 = vrcp.pop %v722
    %v724 = vmul.f32 1.0, %v723
    %v725 = vmul.f32 %v717, %v396
    %v726 = vmul.f32 %v711, %v718
    %v727 = vadd.f32 %v725, %v726
    %v728 = vtanh.pop %v727
    %v729 = vmul.f32 %v724, %v728
    %s730 = scalar_lea.vmem [#allocation6], 8
    %v731 = vld [vmem:[%s730] sm:$0xff]
    %732 = vmatprep.subr.mxu0 %v94
    %733 = vmatpush1.msra.mxu0 %v93
    %734 = vmatprep.subr.mxu0 %v98
    %735 = vmatpush1.msra.mxu0 %v97
    %736 = vmatprep.subr.mxu0 %v102
    %737 = vmatpush1.msra.mxu0 %v101
    %738 = vmatprep.subr.mxu0 %v106
    %739 = vmatpush1.msra.mxu0 %v105
    %740 = vmatprep.subr.mxu0 %v110
    %741 = vmatpush1.msra.mxu0 %v109
    %742 = vmatprep.subr.mxu0 %v114
    %743 = vmatpush1.msra.mxu0 %v113
    %744 = vmatprep.subr.mxu0 %v118
    %745 = vmatpush1.msra.mxu0 %v117
    %746 = vmatprep.subr.mxu0 %v122
    %747 = vmatpush1.msra.mxu0 %v121
    %748 = vmatprep.subr.mxu0 %v126
    %749 = vmatpush1.msra.mxu0 %v125
    %750 = vmatprep.subr.mxu0 %v130
    %751 = vmatpush1.msra.mxu0 %v129
    %752 = vmatprep.subr.mxu0 %v134
    %753 = vmatpush1.msra.mxu0 %v133
    %754 = vmatprep.subr.mxu0 %v138
    %755 = vmatpush1.msra.mxu0 %v137
    %756 = vmatprep.subr.mxu0 %v142
    %757 = vmatpush1.msra.mxu0 %v141
    %758 = vmatprep.subr.mxu0 %v146
    %759 = vmatpush1.msra.mxu0 %v145
    %760 = vmatprep.subr.mxu0 %v150
    %761 = vmatpush1.msra.mxu0 %v149
    %762 = vmatprep.subr.mxu0 %v154
    %763 = vmatpush1.msra.mxu0 %v153
    %764 = vmatprep.subr.mxu0 %v158
    %765 = vmatpush1.msra.mxu0 %v157
    %766 = vmatprep.subr.mxu0 %v162
    %767 = vmatpush1.msra.mxu0 %v161
    %768 = vmatprep.subr.mxu0 %v166
    %769 = vmatpush1.msra.mxu0 %v165
    %770 = vmatprep.subr.mxu0 %v170
    %771 = vmatpush1.msra.mxu0 %v169
    %772 = vmatprep.subr.mxu0 %v174
    %773 = vmatpush1.msra.mxu0 %v173
    %774 = vmatprep.subr.mxu0 %v178
    %775 = vmatpush1.msra.mxu0 %v177
    %776 = vmatprep.subr.mxu0 %v182
    %777 = vmatpush1.msra.mxu0 %v181
    %778 = vmatprep.subr.mxu0 %v186
    %779 = vmatpush1.msra.mxu0 %v185
    %780 = vmatprep.subr.mxu0 %v190
    %781 = vmatpush1.msra.mxu0 %v189
    %782 = vmatprep.subr.mxu0 %v194
    %783 = vmatpush1.msra.mxu0 %v193
    %784 = vmatprep.subr.mxu0 %v198
    %785 = vmatpush1.msra.mxu0 %v197
    %786 = vmatprep.subr.mxu0 %v202
    %787 = vmatpush1.msra.mxu0 %v201
    %788 = vmatprep.subr.mxu0 %v206
    %789 = vmatpush1.msra.mxu0 %v205
    %790 = vmatprep.subr.mxu0 %v210
    %791 = vmatpush1.msra.mxu0 %v209
    %792 = vmatprep.subr.mxu0 %v214
    %793 = vmatpush1.msra.mxu0 %v213
    %794 = vmatprep.subr.mxu0 %v218
    %795 = vmatpush1.msra.mxu0 %v217
    %796 = vmatprep.mubr.f32.mxu0 %v563
    %797 = vmatmul.mubr.f32.gmra.mrb[0].mxu0 %v731
    %v798 = vpop.f32.mrb[0].mxu0
    %v799 = vadd.f32 %v354, %v798
    %v800 = vpop.f32.mrb[0].mxu0
    %v801 = vadd.f32 %v358, %v800
    %802 = vdwg.mxu0
    %803 = vmatprep.subr.mxu0 %v96
    %804 = vmatpush1.msra.mxu0 %v95
    %805 = vmatprep.subr.mxu0 %v100
    %806 = vmatpush1.msra.mxu0 %v99
    %807 = vmatprep.subr.mxu0 %v104
    %808 = vmatpush1.msra.mxu0 %v103
    %809 = vmatprep.subr.mxu0 %v108
    %810 = vmatpush1.msra.mxu0 %v107
    %811 = vmatprep.subr.mxu0 %v112
    %812 = vmatpush1.msra.mxu0 %v111
    %813 = vmatprep.subr.mxu0 %v116
    %814 = vmatpush1.msra.mxu0 %v115
    %815 = vmatprep.subr.mxu0 %v120
    %816 = vmatpush1.msra.mxu0 %v119
    %817 = vmatprep.subr.mxu0 %v124
    %818 = vmatpush1.msra.mxu0 %v123
    %819 = vmatprep.subr.mxu0 %v128
    %820 = vmatpush1.msra.mxu0 %v127
    %821 = vmatprep.subr.mxu0 %v132
    %822 = vmatpush1.msra.mxu0 %v131
    %823 = vmatprep.subr.mxu0 %v136
    %824 = vmatpush1.msra.mxu0 %v135
    %825 = vmatprep.subr.mxu0 %v140
    %826 = vmatpush1.msra.mxu0 %v139
    %827 = vmatprep.subr.mxu0 %v144
    %828 = vmatpush1.msra.mxu0 %v143
    %829 = vmatprep.subr.mxu0 %v148
    %830 = vmatpush1.msra.mxu0 %v147
    %831 = vmatprep.subr.mxu0 %v152
    %832 = vmatpush1.msra.mxu0 %v151
    %833 = vmatprep.subr.mxu0 %v156
    %834 = vmatpush1.msra.mxu0 %v155
    %835 = vmatprep.subr.mxu0 %v160
    %836 = vmatpush1.msra.mxu0 %v159
    %837 = vmatprep.subr.mxu0 %v164
    %838 = vmatpush1.msra.mxu0 %v163
    %839 = vmatprep.subr.mxu0 %v168
    %840 = vmatpush1.msra.mxu0 %v167
    %841 = vmatprep.subr.mxu0 %v172
    %842 = vmatpush1.msra.mxu0 %v171
    %843 = vmatprep.subr.mxu0 %v176
    %844 = vmatpush1.msra.mxu0 %v175
    %845 = vmatprep.subr.mxu0 %v180
    %846 = vmatpush1.msra.mxu0 %v179
    %847 = vmatprep.subr.mxu0 %v184
    %848 = vmatpush1.msra.mxu0 %v183
    %849 = vmatprep.subr.mxu0 %v188
    %850 = vmatpush1.msra.mxu0 %v187
    %851 = vmatprep.subr.mxu0 %v192
    %852 = vmatpush1.msra.mxu0 %v191
    %853 = vmatprep.subr.mxu0 %v196
    %854 = vmatpush1.msra.mxu0 %v195
    %855 = vmatprep.subr.mxu0 %v200
    %856 = vmatpush1.msra.mxu0 %v199
    %857 = vmatprep.subr.mxu0 %v204
    %858 = vmatpush1.msra.mxu0 %v203
    %859 = vmatprep.subr.mxu0 %v208
    %860 = vmatpush1.msra.mxu0 %v207
    %861 = vmatprep.subr.mxu0 %v212
    %862 = vmatpush1.msra.mxu0 %v211
    %863 = vmatprep.subr.mxu0 %v216
    %864 = vmatpush1.msra.mxu0 %v215
    %865 = vmatprep.subr.mxu0 %v220
    %866 = vmatpush1.msra.mxu0 %v219
    %867 = vmatprep.mubr.f32.mxu0 %v563
    %868 = vmatmul.mubr.f32.gmra.mrb[0].mxu0 %v731
    %v869 = vpop.f32.mrb[0].mxu0
    %v870 = vadd.f32 %v362, %v869
    %v871 = vpop.f32.mrb[0].mxu0
    %v872 = vadd.f32 %v366, %v871
    %873 = vdwg.mxu0
    %v874 = vxor.u32 %v799, 2147483648
    %v875 = vmul.f32 %v874, 1.442695
    %v876 = vpow.pop %v875
    %v877 = vadd.f32 %v876, 1.0
    %v878 = vrcp.pop %v877
    %v879 = vmul.f32 1.0, %v878
    %v880 = vxor.u32 %v801, 2147483648
    %v881 = vmul.f32 %v880, 1.442695
    %v882 = vpow.pop %v881
    %v883 = vadd.f32 %v882, 1.0
    %v884 = vrcp.pop %v883
    %v885 = vmul.f32 1.0, %v884
    %v886 = vtanh.pop %v870
    %v887 = vxor.u32 %v872, 2147483648
    %v888 = vmul.f32 %v887, 1.442695
    %v889 = vpow.pop %v888
    %v890 = vadd.f32 %v889, 1.0
    %v891 = vrcp.pop %v890
    %v892 = vmul.f32 1.0, %v891
    %v893 = vmul.f32 %v885, %v561
    %v894 = vmul.f32 %v879, %v886
    %v895 = vadd.f32 %v893, %v894
    %v896 = vtanh.pop %v895
    %v897 = vmul.f32 %v892, %v896
    %898 = vmatprep.subr.mxu0 %v222
    %899 = vmatpush1.msra.mxu0 %v221
    %900 = vmatprep.subr.mxu0 %v226
    %901 = vmatpush1.msra.mxu0 %v225
    %902 = vmatprep.subr.mxu0 %v230
    %903 = vmatpush1.msra.mxu0 %v229
    %904 = vmatprep.subr.mxu0 %v234
    %905 = vmatpush1.msra.mxu0 %v233
    %906 = vmatprep.subr.mxu0 %v238
    %907 = vmatpush1.msra.mxu0 %v237
    %908 = vmatprep.subr.mxu0 %v242
    %909 = vmatpush1.msra.mxu0 %v241
    %910 = vmatprep.subr.mxu0 %v246
    %911 = vmatpush1.msra.mxu0 %v245
    %912 = vmatprep.subr.mxu0 %v250
    %913 = vmatpush1.msra.mxu0 %v249
    %914 = vmatprep.subr.mxu0 %v254
    %915 = vmatpush1.msra.mxu0 %v253
    %916 = vmatprep.subr.mxu0 %v258
    %917 = vmatpush1.msra.mxu0 %v257
    %918 = vmatprep.subr.mxu0 %v262
    %919 = vmatpush1.msra.mxu0 %v261
    %920 = vmatprep.subr.mxu0 %v266
    %921 = vmatpush1.msra.mxu0 %v265
    %922 = vmatprep.subr.mxu0 %v270
    %923 = vmatpush1.msra.mxu0 %v269
    %924 = vmatprep.subr.mxu0 %v274
    %925 = vmatpush1.msra.mxu0 %v273
    %926 = vmatprep.subr.mxu0 %v278
    %927 = vmatpush1.msra.mxu0 %v277
    %928 = vmatprep.subr.mxu0 %v282
    %929 = vmatpush1.msra.mxu0 %v281
    %930 = vmatprep.subr.mxu0 %v286
    %931 = vmatpush1.msra.mxu0 %v285
    %932 = vmatprep.subr.mxu0 %v290
    %933 = vmatpush1.msra.mxu0 %v289
    %934 = vmatprep.subr.mxu0 %v294
    %935 = vmatpush1.msra.mxu0 %v293
    %936 = vmatprep.subr.mxu0 %v298
    %937 = vmatpush1.msra.mxu0 %v297
    %938 = vmatprep.subr.mxu0 %v302
    %939 = vmatpush1.msra.mxu0 %v301
    %940 = vmatprep.subr.mxu0 %v306
    %941 = vmatpush1.msra.mxu0 %v305
    %942 = vmatprep.subr.mxu0 %v310
    %943 = vmatpush1.msra.mxu0 %v309
    %944 = vmatprep.subr.mxu0 %v314
    %945 = vmatpush1.msra.mxu0 %v313
    %946 = vmatprep.subr.mxu0 %v318
    %947 = vmatpush1.msra.mxu0 %v317
    %948 = vmatprep.subr.mxu0 %v322
    %949 = vmatpush1.msra.mxu0 %v321
    %950 = vmatprep.subr.mxu0 %v326
    %951 = vmatpush1.msra.mxu0 %v325
    %952 = vmatprep.subr.mxu0 %v330
    %953 = vmatpush1.msra.mxu0 %v329
    %954 = vmatprep.subr.mxu0 %v334
    %955 = vmatpush1.msra.mxu0 %v333
    %956 = vmatprep.subr.mxu0 %v338
    %957 = vmatpush1.msra.mxu0 %v337
    %958 = vmatprep.subr.mxu0 %v342
    %959 = vmatpush1.msra.mxu0 %v341
    %960 = vmatprep.subr.mxu0 %v346
    %961 = vmatpush1.msra.mxu0 %v345
    %962 = vmatprep.mubr.f32.mxu0 %v729
    %963 = vmatmul.mubr.f32.gmra.mrb[0].mxu0 %v897
    %v964 = vpop.f32.mrb[0].mxu0
    %v965 = vadd.f32 %v376, %v964
    %v966 = vpop.f32.mrb[0].mxu0
    %v967 = vadd.f32 %v380, %v966
    %968 = vdwg.mxu0
    %969 = vmatprep.subr.mxu0 %v224
    %970 = vmatpush1.msra.mxu0 %v223
    %971 = vmatprep.subr.mxu0 %v228
    %972 = vmatpush1.msra.mxu0 %v227
    %973 = vmatprep.subr.mxu0 %v232
    %974 = vmatpush1.msra.mxu0 %v231
    %975 = vmatprep.subr.mxu0 %v236
    %976 = vmatpush1.msra.mxu0 %v235
    %977 = vmatprep.subr.mxu0 %v240
    %978 = vmatpush1.msra.mxu0 %v239
    %979 = vmatprep.subr.mxu0 %v244
    %980 = vmatpush1.msra.mxu0 %v243
    %981 = vmatprep.subr.mxu0 %v248
    %982 = vmatpush1.msra.mxu0 %v247
    %983 = vmatprep.subr.mxu0 %v252
    %984 = vmatpush1.msra.mxu0 %v251
    %985 = vmatprep.subr.mxu0 %v256
    %986 = vmatpush1.msra.mxu0 %v255
    %987 = vmatprep.subr.mxu0 %v260
    %988 = vmatpush1.msra.mxu0 %v259
    %989 = vmatprep.subr.mxu0 %v264
    %990 = vmatpush1.msra.mxu0 %v263
    %991 = vmatprep.subr.mxu0 %v268
    %992 = vmatpush1.msra.mxu0 %v267
    %993 = vmatprep.subr.mxu0 %v272
    %994 = vmatpush1.msra.mxu0 %v271
    %995 = vmatprep.subr.mxu0 %v276
    %996 = vmatpush1.msra.mxu0 %v275
    %997 = vmatprep.subr.mxu0 %v280
    %998 = vmatpush1.msra.mxu0 %v279
    %999 = vmatprep.subr.mxu0 %v284
    %1000 = vmatpush1.msra.mxu0 %v283
    %1001 = vmatprep.subr.mxu0 %v288
    %1002 = vmatpush1.msra.mxu0 %v287
    %1003 = vmatprep.subr.mxu0 %v292
    %1004 = vmatpush1.msra.mxu0 %v291
    %1005 = vmatprep.subr.mxu0 %v296
    %1006 = vmatpush1.msra.mxu0 %v295
    %1007 = vmatprep.subr.mxu0 %v300
    %1008 = vmatpush1.msra.mxu0 %v299
    %1009 = vmatprep.subr.mxu0 %v304
    %1010 = vmatpush1.msra.mxu0 %v303
    %1011 = vmatprep.subr.mxu0 %v308
    %1012 = vmatpush1.msra.mxu0 %v307
    %1013 = vmatprep.subr.mxu0 %v312
    %1014 = vmatpush1.msra.mxu0 %v311
    %1015 = vmatprep.subr.mxu0 %v316
    %1016 = vmatpush1.msra.mxu0 %v315
    %1017 = vmatprep.subr.mxu0 %v320
    %1018 = vmatpush1.msra.mxu0 %v319
    %1019 = vmatprep.subr.mxu0 %v324
    %1020 = vmatpush1.msra.mxu0 %v323
    %1021 = vmatprep.subr.mxu0 %v328
    %1022 = vmatpush1.msra.mxu0 %v327
    %1023 = vmatprep.subr.mxu0 %v332
    %1024 = vmatpush1.msra.mxu0 %v331
    %1025 = vmatprep.subr.mxu0 %v336
    %1026 = vmatpush1.msra.mxu0 %v335
    %1027 = vmatprep.subr.mxu0 %v340
    %1028 = vmatpush1.msra.mxu0 %v339
    %1029 = vmatprep.subr.mxu0 %v344
    %1030 = vmatpush1.msra.mxu0 %v343
    %1031 = vmatprep.subr.mxu0 %v348
    %1032 = vmatpush1.msra.mxu0 %v347
    %1033 = vmatprep.mubr.f32.mxu0 %v729
    %1034 = vmatmul.mubr.f32.gmra.mrb[0].mxu0 %v897
    %v1035 = vpop.f32.mrb[0].mxu0
    %v1036 = vadd.f32 %v384, %v1035
    %v1037 = vpop.f32.mrb[0].mxu0
    %v1038 = vadd.f32 %v388, %v1037
    %1039 = vdwg.mxu0
    %v1040 = vxor.u32 %v965, 2147483648
    %v1041 = vmul.f32 %v1040, 1.442695
    %v1042 = vpow.pop %v1041
    %v1043 = vadd.f32 %v1042, 1.0
    %v1044 = vrcp.pop %v1043
    %v1045 = vmul.f32 1.0, %v1044
    %v1046 = vxor.u32 %v967, 2147483648
    %v1047 = vmul.f32 %v1046, 1.442695
    %v1048 = vpow.pop %v1047
    %v1049 = vadd.f32 %v1048, 1.0
    %v1050 = vrcp.pop %v1049
    %v1051 = vmul.f32 1.0, %v1050
    %v1052 = vtanh.pop %v1036
    %v1053 = vxor.u32 %v1038, 2147483648
    %v1054 = vmul.f32 %v1053, 1.442695
    %v1055 = vpow.pop %v1054
    %v1056 = vadd.f32 %v1055, 1.0
    %v1057 = vrcp.pop %v1056
    %v1058 = vmul.f32 1.0, %v1057
    %v1059 = vmul.f32 %v1051, %v727
    %v1060 = vmul.f32 %v1045, %v1052
    %v1061 = vadd.f32 %v1059, %v1060
    %v1062 = vtanh.pop %v1061
    %v1063 = vmul.f32 %v1058, %v1062
    %s1064 = scalar_lea.vmem [#allocation6], 16
    %v1065 = vld [vmem:[%s1064] sm:$0xff]
    %1066 = vmatprep.subr.mxu0 %v94
    %1067 = vmatpush1.msra.mxu0 %v93
    %1068 = vmatprep.subr.mxu0 %v98
    %1069 = vmatpush1.msra.mxu0 %v97
    %1070 = vmatprep.subr.mxu0 %v102
    %1071 = vmatpush1.msra.mxu0 %v101
    %1072 = vmatprep.subr.mxu0 %v106
    %1073 = vmatpush1.msra.mxu0 %v105
    %1074 = vmatprep.subr.mxu0 %v110
    %1075 = vmatpush1.msra.mxu0 %v109
    %1076 = vmatprep.subr.mxu0 %v114
    %1077 = vmatpush1.msra.mxu0 %v113
    %1078 = vmatprep.subr.mxu0 %v118
    %1079 = vmatpush1.msra.mxu0 %v117
    %1080 = vmatprep.subr.mxu0 %v122
    %1081 = vmatpush1.msra.mxu0 %v121
    %1082 = vmatprep.subr.mxu0 %v126
    %1083 = vmatpush1.msra.mxu0 %v125
    %1084 = vmatprep.subr.mxu0 %v130
    %1085 = vmatpush1.msra.mxu0 %v129
    %1086 = vmatprep.subr.mxu0 %v134
    %1087 = vmatpush1.msra.mxu0 %v133
    %1088 = vmatprep.subr.mxu0 %v138
    %1089 = vmatpush1.msra.mxu0 %v137
    %1090 = vmatprep.subr.mxu0 %v142
    %1091 = vmatpush1.msra.mxu0 %v141
    %1092 = vmatprep.subr.mxu0 %v146
    %1093 = vmatpush1.msra.mxu0 %v145
    %1094 = vmatprep.subr.mxu0 %v150
    %1095 = vmatpush1.msra.mxu0 %v149
    %1096 = vmatprep.subr.mxu0 %v154
    %1097 = vmatpush1.msra.mxu0 %v153
    %1098 = vmatprep.subr.mxu0 %v158
    %1099 = vmatpush1.msra.mxu0 %v157
    %1100 = vmatprep.subr.mxu0 %v162
    %1101 = vmatpush1.msra.mxu0 %v161
    %1102 = vmatprep.subr.mxu0 %v166
    %1103 = vmatpush1.msra.mxu0 %v165
    %1104 = vmatprep.subr.mxu0 %v170
    %1105 = vmatpush1.msra.mxu0 %v169
    %1106 = vmatprep.subr.mxu0 %v174
    %1107 = vmatpush1.msra.mxu0 %v173
    %1108 = vmatprep.subr.mxu0 %v178
    %1109 = vmatpush1.msra.mxu0 %v177
    %1110 = vmatprep.subr.mxu0 %v182
    %1111 = vmatpush1.msra.mxu0 %v181
    %1112 = vmatprep.subr.mxu0 %v186
    %1113 = vmatpush1.msra.mxu0 %v185
    %1114 = vmatprep.subr.mxu0 %v190
    %1115 = vmatpush1.msra.mxu0 %v189
    %1116 = vmatprep.subr.mxu0 %v194
    %1117 = vmatpush1.msra.mxu0 %v193
    %1118 = vmatprep.subr.mxu0 %v198
    %1119 = vmatpush1.msra.mxu0 %v197
    %1120 = vmatprep.subr.mxu0 %v202
    %1121 = vmatpush1.msra.mxu0 %v201
    %1122 = vmatprep.subr.mxu0 %v206
    %1123 = vmatpush1.msra.mxu0 %v205
    %1124 = vmatprep.subr.mxu0 %v210
    %1125 = vmatpush1.msra.mxu0 %v209
    %1126 = vmatprep.subr.mxu0 %v214
    %1127 = vmatpush1.msra.mxu0 %v213
    %1128 = vmatprep.subr.mxu0 %v218
    %1129 = vmatpush1.msra.mxu0 %v217
    %1130 = vmatprep.mubr.f32.mxu0 %v897
    %1131 = vmatmul.mubr.f32.gmra.mrb[0].mxu0 %v1065
    %v1132 = vpop.f32.mrb[0].mxu0
    %v1133 = vadd.f32 %v354, %v1132
    %v1134 = vpop.f32.mrb[0].mxu0
    %v1135 = vadd.f32 %v358, %v1134
    %1136 = vdwg.mxu0
    %1137 = vmatprep.subr.mxu0 %v96
    %1138 = vmatpush1.msra.mxu0 %v95
    %1139 = vmatprep.subr.mxu0 %v100
    %1140 = vmatpush1.msra.mxu0 %v99
    %1141 = vmatprep.subr.mxu0 %v104
    %1142 = vmatpush1.msra.mxu0 %v103
    %1143 = vmatprep.subr.mxu0 %v108
    %1144 = vmatpush1.msra.mxu0 %v107
    %1145 = vmatprep.subr.mxu0 %v112
    %1146 = vmatpush1.msra.mxu0 %v111
    %1147 = vmatprep.subr.mxu0 %v116
    %1148 = vmatpush1.msra.mxu0 %v115
    %1149 = vmatprep.subr.mxu0 %v120
    %1150 = vmatpush1.msra.mxu0 %v119
    %1151 = vmatprep.subr.mxu0 %v124
    %1152 = vmatpush1.msra.mxu0 %v123
    %1153 = vmatprep.subr.mxu0 %v128
    %1154 = vmatpush1.msra.mxu0 %v127
    %1155 = vmatprep.subr.mxu0 %v132
    %1156 = vmatpush1.msra.mxu0 %v131
    %1157 = vmatprep.subr.mxu0 %v136
    %1158 = vmatpush1.msra.mxu0 %v135
    %1159 = vmatprep.subr.mxu0 %v140
    %1160 = vmatpush1.msra.mxu0 %v139
    %1161 = vmatprep.subr.mxu0 %v144
    %1162 = vmatpush1.msra.mxu0 %v143
    %1163 = vmatprep.subr.mxu0 %v148
    %1164 = vmatpush1.msra.mxu0 %v147
    %1165 = vmatprep.subr.mxu0 %v152
    %1166 = vmatpush1.msra.mxu0 %v151
    %1167 = vmatprep.subr.mxu0 %v156
    %1168 = vmatpush1.msra.mxu0 %v155
    %1169 = vmatprep.subr.mxu0 %v160
    %1170 = vmatpush1.msra.mxu0 %v159
    %1171 = vmatprep.subr.mxu0 %v164
    %1172 = vmatpush1.msra.mxu0 %v163
    %1173 = vmatprep.subr.mxu0 %v168
    %1174 = vmatpush1.msra.mxu0 %v167
    %1175 = vmatprep.subr.mxu0 %v172
    %1176 = vmatpush1.msra.mxu0 %v171
    %1177 = vmatprep.subr.mxu0 %v176
    %1178 = vmatpush1.msra.mxu0 %v175
    %1179 = vmatprep.subr.mxu0 %v180
    %1180 = vmatpush1.msra.mxu0 %v179
    %1181 = vmatprep.subr.mxu0 %v184
    %1182 = vmatpush1.msra.mxu0 %v183
    %1183 = vmatprep.subr.mxu0 %v188
    %1184 = vmatpush1.msra.mxu0 %v187
    %1185 = vmatprep.subr.mxu0 %v192
    %1186 = vmatpush1.msra.mxu0 %v191
    %1187 = vmatprep.subr.mxu0 %v196
    %1188 = vmatpush1.msra.mxu0 %v195
    %1189 = vmatprep.subr.mxu0 %v200
    %1190 = vmatpush1.msra.mxu0 %v199
    %1191 = vmatprep.subr.mxu0 %v204
    %1192 = vmatpush1.msra.mxu0 %v203
    %1193 = vmatprep.subr.mxu0 %v208
    %1194 = vmatpush1.msra.mxu0 %v207
    %1195 = vmatprep.subr.mxu0 %v212
    %1196 = vmatpush1.msra.mxu0 %v211
    %1197 = vmatprep.subr.mxu0 %v216
    %1198 = vmatpush1.msra.mxu0 %v215
    %1199 = vmatprep.subr.mxu0 %v220
    %1200 = vmatpush1.msra.mxu0 %v219
    %1201 = vmatprep.mubr.f32.mxu0 %v897
    %1202 = vmatmul.mubr.f32.gmra.mrb[0].mxu0 %v1065
    %v1203 = vpop.f32.mrb[0].mxu0
    %v1204 = vadd.f32 %v362, %v1203
    %v1205 = vpop.f32.mrb[0].mxu0
    %v1206 = vadd.f32 %v366, %v1205
    %1207 = vdwg.mxu0
    %v1208 = vxor.u32 %v1133, 2147483648
    %v1209 = vmul.f32 %v1208, 1.442695
    %v1210 = vpow.pop %v1209
    %v1211 = vadd.f32 %v1210, 1.0
    %v1212 = vrcp.pop %v1211
    %v1213 = vmul.f32 1.0, %v1212
    %v1214 = vxor.u32 %v1135, 2147483648
    %v1215 = vmul.f32 %v1214, 1.442695
    %v1216 = vpow.pop %v1215
    %v1217 = vadd.f32 %v1216, 1.0
    %v1218 = vrcp.pop %v1217
    %v1219 = vmul.f32 1.0, %v1218
    %v1220 = vtanh.pop %v1204
    %v1221 = vxor.u32 %v1206, 2147483648
    %v1222 = vmul.f32 %v1221, 1.442695
    %v1223 = vpow.pop %v1222
    %v1224 = vadd.f32 %v1223, 1.0
    %v1225 = vrcp.pop %v1224
    %v1226 = vmul.f32 1.0, %v1225
    %v1227 = vmul.f32 %v1219, %v895
    %v1228 = vmul.f32 %v1213, %v1220
    %v1229 = vadd.f32 %v1227, %v1228
    %v1230 = vtanh.pop %v1229
    %v1231 = vmul.f32 %v1226, %v1230
    %1232 = vmatprep.subr.mxu0 %v222
    %1233 = vmatpush1.msra.mxu0 %v221
    %1234 = vmatprep.subr.mxu0 %v226
    %1235 = vmatpush1.msra.mxu0 %v225
    %1236 = vmatprep.subr.mxu0 %v230
    %1237 = vmatpush1.msra.mxu0 %v229
    %1238 = vmatprep.subr.mxu0 %v234
    %1239 = vmatpush1.msra.mxu0 %v233
    %1240 = vmatprep.subr.mxu0 %v238
    %1241 = vmatpush1.msra.mxu0 %v237
    %1242 = vmatprep.subr.mxu0 %v242
    %1243 = vmatpush1.msra.mxu0 %v241
    %1244 = vmatprep.subr.mxu0 %v246
    %1245 = vmatpush1.msra.mxu0 %v245
    %1246 = vmatprep.subr.mxu0 %v250
    %1247 = vmatpush1.msra.mxu0 %v249
    %1248 = vmatprep.subr.mxu0 %v254
    %1249 = vmatpush1.msra.mxu0 %v253
    %1250 = vmatprep.subr.mxu0 %v258
    %1251 = vmatpush1.msra.mxu0 %v257
    %1252 = vmatprep.subr.mxu0 %v262
    %1253 = vmatpush1.msra.mxu0 %v261
    %1254 = vmatprep.subr.mxu0 %v266
    %1255 = vmatpush1.msra.mxu0 %v265
    %1256 = vmatprep.subr.mxu0 %v270
    %1257 = vmatpush1.msra.mxu0 %v269
    %1258 = vmatprep.subr.mxu0 %v274
    %1259 = vmatpush1.msra.mxu0 %v273
    %1260 = vmatprep.subr.mxu0 %v278
    %1261 = vmatpush1.msra.mxu0 %v277
    %1262 = vmatprep.subr.mxu0 %v282
    %1263 = vmatpush1.msra.mxu0 %v281
    %1264 = vmatprep.subr.mxu0 %v286
    %1265 = vmatpush1.msra.mxu0 %v285
    %1266 = vmatprep.subr.mxu0 %v290
    %1267 = vmatpush1.msra.mxu0 %v289
    %1268 = vmatprep.subr.mxu0 %v294
    %1269 = vmatpush1.msra.mxu0 %v293
    %1270 = vmatprep.subr.mxu0 %v298
    %1271 = vmatpush1.msra.mxu0 %v297
    %1272 = vmatprep.subr.mxu0 %v302
    %1273 = vmatpush1.msra.mxu0 %v301
    %1274 = vmatprep.subr.mxu0 %v306
    %1275 = vmatpush1.msra.mxu0 %v305
    %1276 = vmatprep.subr.mxu0 %v310
    %1277 = vmatpush1.msra.mxu0 %v309
    %1278 = vmatprep.subr.mxu0 %v314
    %1279 = vmatpush1.msra.mxu0 %v313
    %1280 = vmatprep.subr.mxu0 %v318
    %1281 = vmatpush1.msra.mxu0 %v317
    %1282 = vmatprep.subr.mxu0 %v322
    %1283 = vmatpush1.msra.mxu0 %v321
    %1284 = vmatprep.subr.mxu0 %v326
    %1285 = vmatpush1.msra.mxu0 %v325
    %1286 = vmatprep.subr.mxu0 %v330
    %1287 = vmatpush1.msra.mxu0 %v329
    %1288 = vmatprep.subr.mxu0 %v334
    %1289 = vmatpush1.msra.mxu0 %v333
    %1290 = vmatprep.subr.mxu0 %v338
    %1291 = vmatpush1.msra.mxu0 %v337
    %1292 = vmatprep.subr.mxu0 %v342
    %1293 = vmatpush1.msra.mxu0 %v341
    %1294 = vmatprep.subr.mxu0 %v346
    %1295 = vmatpush1.msra.mxu0 %v345
    %1296 = vmatprep.mubr.f32.mxu0 %v1063
    %1297 = vmatmul.mubr.f32.gmra.mrb[0].mxu0 %v1231
    %v1298 = vpop.f32.mrb[0].mxu0
    %v1299 = vadd.f32 %v376, %v1298
    %v1300 = vpop.f32.mrb[0].mxu0
    %v1301 = vadd.f32 %v380, %v1300
    %1302 = vdwg.mxu0
    %1303 = vmatprep.subr.mxu0 %v224
    %1304 = vmatpush1.msra.mxu0 %v223
    %1305 = vmatprep.subr.mxu0 %v228
    %1306 = vmatpush1.msra.mxu0 %v227
    %1307 = vmatprep.subr.mxu0 %v232
    %1308 = vmatpush1.msra.mxu0 %v231
    %1309 = vmatprep.subr.mxu0 %v236
    %1310 = vmatpush1.msra.mxu0 %v235
    %1311 = vmatprep.subr.mxu0 %v240
    %1312 = vmatpush1.msra.mxu0 %v239
    %1313 = vmatprep.subr.mxu0 %v244
    %1314 = vmatpush1.msra.mxu0 %v243
    %1315 = vmatprep.subr.mxu0 %v248
    %1316 = vmatpush1.msra.mxu0 %v247
    %1317 = vmatprep.subr.mxu0 %v252
    %1318 = vmatpush1.msra.mxu0 %v251
    %1319 = vmatprep.subr.mxu0 %v256
    %1320 = vmatpush1.msra.mxu0 %v255
    %1321 = vmatprep.subr.mxu0 %v260
    %1322 = vmatpush1.msra.mxu0 %v259
    %1323 = vmatprep.subr.mxu0 %v264
    %1324 = vmatpush1.msra.mxu0 %v263
    %1325 = vmatprep.subr.mxu0 %v268
    %1326 = vmatpush1.msra.mxu0 %v267
    %1327 = vmatprep.subr.mxu0 %v272
    %1328 = vmatpush1.msra.mxu0 %v271
    %1329 = vmatprep.subr.mxu0 %v276
    %1330 = vmatpush1.msra.mxu0 %v275
    %1331 = vmatprep.subr.mxu0 %v280
    %1332 = vmatpush1.msra.mxu0 %v279
    %1333 = vmatprep.subr.mxu0 %v284
    %1334 = vmatpush1.msra.mxu0 %v283
    %1335 = vmatprep.subr.mxu0 %v288
    %1336 = vmatpush1.msra.mxu0 %v287
    %1337 = vmatprep.subr.mxu0 %v292
    %1338 = vmatpush1.msra.mxu0 %v291
    %1339 = vmatprep.subr.mxu0 %v296
    %1340 = vmatpush1.msra.mxu0 %v295
    %1341 = vmatprep.subr.mxu0 %v300
    %1342 = vmatpush1.msra.mxu0 %v299
    %1343 = vmatprep.subr.mxu0 %v304
    %1344 = vmatpush1.msra.mxu0 %v303
    %1345 = vmatprep.subr.mxu0 %v308
    %1346 = vmatpush1.msra.mxu0 %v307
    %1347 = vmatprep.subr.mxu0 %v312
    %1348 = vmatpush1.msra.mxu0 %v311
    %1349 = vmatprep.subr.mxu0 %v316
    %1350 = vmatpush1.msra.mxu0 %v315
    %1351 = vmatprep.subr.mxu0 %v320
    %1352 = vmatpush1.msra.mxu0 %v319
    %1353 = vmatprep.subr.mxu0 %v324
    %1354 = vmatpush1.msra.mxu0 %v323
    %1355 = vmatprep.subr.mxu0 %v328
    %1356 = vmatpush1.msra.mxu0 %v327
    %1357 = vmatprep.subr.mxu0 %v332
    %1358 = vmatpush1.msra.mxu0 %v331
    %1359 = vmatprep.subr.mxu0 %v336
    %1360 = vmatpush1.msra.mxu0 %v335
    %1361 = vmatprep.subr.mxu0 %v340
    %1362 = vmatpush1.msra.mxu0 %v339
    %1363 = vmatprep.subr.mxu0 %v344
    %1364 = vmatpush1.msra.mxu0 %v343
    %1365 = vmatprep.subr.mxu0 %v348
    %1366 = vmatpush1.msra.mxu0 %v347
    %1367 = vmatprep.mubr.f32.mxu0 %v1063
    %1368 = vmatmul.mubr.f32.gmra.mrb[0].mxu0 %v1231
    %v1369 = vpop.f32.mrb[0].mxu0
    %v1370 = vadd.f32 %v384, %v1369
    %v1371 = vpop.f32.mrb[0].mxu0
    %v1372 = vadd.f32 %v388, %v1371
    %1373 = vdwg.mxu0
    %v1374 = vxor.u32 %v1299, 2147483648
    %v1375 = vmul.f32 %v1374, 1.442695
    %v1376 = vpow.pop %v1375
    %v1377 = vadd.f32 %v1376, 1.0
    %v1378 = vrcp.pop %v1377
    %v1379 = vmul.f32 1.0, %v1378
    %v1380 = vxor.u32 %v1301, 2147483648
    %v1381 = vmul.f32 %v1380, 1.442695
    %v1382 = vpow.pop %v1381
    %v1383 = vadd.f32 %v1382, 1.0
    %v1384 = vrcp.pop %v1383
    %v1385 = vmul.f32 1.0, %v1384
    %v1386 = vtanh.pop %v1370
    %v1387 = vxor.u32 %v1372, 2147483648
    %v1388 = vmul.f32 %v1387, 1.442695
    %v1389 = vpow.pop %v1388
    %v1390 = vadd.f32 %v1389, 1.0
    %v1391 = vrcp.pop %v1390
    %v1392 = vmul.f32 1.0, %v1391
    %v1393 = vmul.f32 %v1385, %v1061
    %v1394 = vmul.f32 %v1379, %v1386
    %v1395 = vadd.f32 %v1393, %v1394
    %v1396 = vtanh.pop %v1395
    %v1397 = vmul.f32 %v1392, %v1396
    %s1398 = scalar_lea.vmem [#allocation6], 24
    %v1399 = vld [vmem:[%s1398] sm:$0xff]
    %1400 = vmatprep.subr.mxu0 %v94
    %1401 = vmatpush1.msra.mxu0 %v93
    %1402 = vmatprep.subr.mxu0 %v98
    %1403 = vmatpush1.msra.mxu0 %v97
    %1404 = vmatprep.subr.mxu0 %v102
    %1405 = vmatpush1.msra.mxu0 %v101
    %1406 = vmatprep.subr.mxu0 %v106
    %1407 = vmatpush1.msra.mxu0 %v105
    %1408 = vmatprep.subr.mxu0 %v110
    %1409 = vmatpush1.msra.mxu0 %v109
    %1410 = vmatprep.subr.mxu0 %v114
    %1411 = vmatpush1.msra.mxu0 %v113
    %1412 = vmatprep.subr.mxu0 %v118
    %1413 = vmatpush1.msra.mxu0 %v117
    %1414 = vmatprep.subr.mxu0 %v122
    %1415 = vmatpush1.msra.mxu0 %v121
    %1416 = vmatprep.subr.mxu0 %v126
    %1417 = vmatpush1.msra.mxu0 %v125
    %1418 = vmatprep.subr.mxu0 %v130
    %1419 = vmatpush1.msra.mxu0 %v129
    %1420 = vmatprep.subr.mxu0 %v134
    %1421 = vmatpush1.msra.mxu0 %v133
    %1422 = vmatprep.subr.mxu0 %v138
    %1423 = vmatpush1.msra.mxu0 %v137
    %1424 = vmatprep.subr.mxu0 %v142
    %1425 = vmatpush1.msra.mxu0 %v141
    %1426 = vmatprep.subr.mxu0 %v146
    %1427 = vmatpush1.msra.mxu0 %v145
    %1428 = vmatprep.subr.mxu0 %v150
    %1429 = vmatpush1.msra.mxu0 %v149
    %1430 = vmatprep.subr.mxu0 %v154
    %1431 = vmatpush1.msra.mxu0 %v153
    %1432 = vmatprep.subr.mxu0 %v158
    %1433 = vmatpush1.msra.mxu0 %v157
    %1434 = vmatprep.subr.mxu0 %v162
    %1435 = vmatpush1.msra.mxu0 %v161
    %1436 = vmatprep.subr.mxu0 %v166
    %1437 = vmatpush1.msra.mxu0 %v165
    %1438 = vmatprep.subr.mxu0 %v170
    %1439 = vmatpush1.msra.mxu0 %v169
    %1440 = vmatprep.subr.mxu0 %v174
    %1441 = vmatpush1.msra.mxu0 %v173
    %1442 = vmatprep.subr.mxu0 %v178
    %1443 = vmatpush1.msra.mxu0 %v177
    %1444 = vmatprep.subr.mxu0 %v182
    %1445 = vmatpush1.msra.mxu0 %v181
    %1446 = vmatprep.subr.mxu0 %v186
    %1447 = vmatpush1.msra.mxu0 %v185
    %1448 = vmatprep.subr.mxu0 %v190
    %1449 = vmatpush1.msra.mxu0 %v189
    %1450 = vmatprep.subr.mxu0 %v194
    %1451 = vmatpush1.msra.mxu0 %v193
    %1452 = vmatprep.subr.mxu0 %v198
    %1453 = vmatpush1.msra.mxu0 %v197
    %1454 = vmatprep.subr.mxu0 %v202
    %1455 = vmatpush1.msra.mxu0 %v201
    %1456 = vmatprep.subr.mxu0 %v206
    %1457 = vmatpush1.msra.mxu0 %v205
    %1458 = vmatprep.subr.mxu0 %v210
    %1459 = vmatpush1.msra.mxu0 %v209
    %1460 = vmatprep.subr.mxu0 %v214
    %1461 = vmatpush1.msra.mxu0 %v213
    %1462 = vmatprep.subr.mxu0 %v218
    %1463 = vmatpush1.msra.mxu0 %v217
    %1464 = vmatprep.mubr.f32.mxu0 %v1231
    %1465 = vmatmul.mubr.f32.gmra.mrb[0].mxu0 %v1399
    %v1466 = vpop.f32.mrb[0].mxu0
    %v1467 = vadd.f32 %v354, %v1466
    %v1468 = vpop.f32.mrb[0].mxu0
    %v1469 = vadd.f32 %v358, %v1468
    %1470 = vdwg.mxu0
    %1471 = vmatprep.subr.mxu0 %v96
    %1472 = vmatpush1.msra.mxu0 %v95
    %1473 = vmatprep.subr.mxu0 %v100
    %1474 = vmatpush1.msra.mxu0 %v99
    %1475 = vmatprep.subr.mxu0 %v104
    %1476 = vmatpush1.msra.mxu0 %v103
    %1477 = vmatprep.subr.mxu0 %v108
    %1478 = vmatpush1.msra.mxu0 %v107
    %1479 = vmatprep.subr.mxu0 %v112
    %1480 = vmatpush1.msra.mxu0 %v111
    %1481 = vmatprep.subr.mxu0 %v116
    %1482 = vmatpush1.msra.mxu0 %v115
    %1483 = vmatprep.subr.mxu0 %v120
    %1484 = vmatpush1.msra.mxu0 %v119
    %1485 = vmatprep.subr.mxu0 %v124
    %1486 = vmatpush1.msra.mxu0 %v123
    %1487 = vmatprep.subr.mxu0 %v128
    %1488 = vmatpush1.msra.mxu0 %v127
    %1489 = vmatprep.subr.mxu0 %v132
    %1490 = vmatpush1.msra.mxu0 %v131
    %1491 = vmatprep.subr.mxu0 %v136
    %1492 = vmatpush1.msra.mxu0 %v135
    %1493 = vmatprep.subr.mxu0 %v140
    %1494 = vmatpush1.msra.mxu0 %v139
    %1495 = vmatprep.subr.mxu0 %v144
    %1496 = vmatpush1.msra.mxu0 %v143
    %1497 = vmatprep.subr.mxu0 %v148
    %1498 = vmatpush1.msra.mxu0 %v147
    %1499 = vmatprep.subr.mxu0 %v152
    %1500 = vmatpush1.msra.mxu0 %v151
    %1501 = vmatprep.subr.mxu0 %v156
    %1502 = vmatpush1.msra.mxu0 %v155
    %1503 = vmatprep.subr.mxu0 %v160
    %1504 = vmatpush1.msra.mxu0 %v159
    %1505 = vmatprep.subr.mxu0 %v164
    %1506 = vmatpush1.msra.mxu0 %v163
    %1507 = vmatprep.subr.mxu0 %v168
    %1508 = vmatpush1.msra.mxu0 %v167
    %1509 = vmatprep.subr.mxu0 %v172
    %1510 = vmatpush1.msra.mxu0 %v171
    %1511 = vmatprep.subr.mxu0 %v176
    %1512 = vmatpush1.msra.mxu0 %v175
    %1513 = vmatprep.subr.mxu0 %v180
    %1514 = vmatpush1.msra.mxu0 %v179
    %1515 = vmatprep.subr.mxu0 %v184
    %1516 = vmatpush1.msra.mxu0 %v183
    %1517 = vmatprep.subr.mxu0 %v188
    %1518 = vmatpush1.msra.mxu0 %v187
    %1519 = vmatprep.subr.mxu0 %v192
    %1520 = vmatpush1.msra.mxu0 %v191
    %1521 = vmatprep.subr.mxu0 %v196
    %1522 = vmatpush1.msra.mxu0 %v195
    %1523 = vmatprep.subr.mxu0 %v200
    %1524 = vmatpush1.msra.mxu0 %v199
    %1525 = vmatprep.subr.mxu0 %v204
    %1526 = vmatpush1.msra.mxu0 %v203
    %1527 = vmatprep.subr.mxu0 %v208
    %1528 = vmatpush1.msra.mxu0 %v207
    %1529 = vmatprep.subr.mxu0 %v212
    %1530 = vmatpush1.msra.mxu0 %v211
    %1531 = vmatprep.subr.mxu0 %v216
    %1532 = vmatpush1.msra.mxu0 %v215
    %1533 = vmatprep.subr.mxu0 %v220
    %1534 = vmatpush1.msra.mxu0 %v219
    %1535 = vmatprep.mubr.f32.mxu0 %v1231
    %1536 = vmatmul.mubr.f32.gmra.mrb[0].mxu0 %v1399
    %v1537 = vpop.f32.mrb[0].mxu0
    %v1538 = vadd.f32 %v362, %v1537
    %v1539 = vpop.f32.mrb[0].mxu0
    %v1540 = vadd.f32 %v366, %v1539
    %1541 = vdwg.mxu0
    %v1542 = vxor.u32 %v1467, 2147483648
    %v1543 = vmul.f32 %v1542, 1.442695
    %v1544 = vpow.pop %v1543
    %v1545 = vadd.f32 %v1544, 1.0
    %v1546 = vrcp.pop %v1545
    %v1547 = vmul.f32 1.0, %v1546
    %v1548 = vxor.u32 %v1469, 2147483648
    %v1549 = vmul.f32 %v1548, 1.442695
    %v1550 = vpow.pop %v1549
    %v1551 = vadd.f32 %v1550, 1.0
    %v1552 = vrcp.pop %v1551
    %v1553 = vmul.f32 1.0, %v1552
    %v1554 = vtanh.pop %v1538
    %v1555 = vxor.u32 %v1540, 2147483648
    %v1556 = vmul.f32 %v1555, 1.442695
    %v1557 = vpow.pop %v1556
    %v1558 = vadd.f32 %v1557, 1.0
    %v1559 = vrcp.pop %v1558
    %v1560 = vmul.f32 1.0, %v1559
    %v1561 = vmul.f32 %v1553, %v1229
    %v1562 = vmul.f32 %v1547, %v1554
    %v1563 = vadd.f32 %v1561, %v1562
    %v1564 = vtanh.pop %v1563
    %v1565 = vmul.f32 %v1560, %v1564
    %1566 = vmatprep.subr.mxu0 %v222
    %1567 = vmatpush1.msra.mxu0 %v221
    %1568 = vmatprep.subr.mxu0 %v226
    %1569 = vmatpush1.msra.mxu0 %v225
    %1570 = vmatprep.subr.mxu0 %v230
    %1571 = vmatpush1.msra.mxu0 %v229
    %1572 = vmatprep.subr.mxu0 %v234
    %1573 = vmatpush1.msra.mxu0 %v233
    %1574 = vmatprep.subr.mxu0 %v238
    %1575 = vmatpush1.msra.mxu0 %v237
    %1576 = vmatprep.subr.mxu0 %v242
    %1577 = vmatpush1.msra.mxu0 %v241
    %1578 = vmatprep.subr.mxu0 %v246
    %1579 = vmatpush1.msra.mxu0 %v245
    %1580 = vmatprep.subr.mxu0 %v250
    %1581 = vmatpush1.msra.mxu0 %v249
    %1582 = vmatprep.subr.mxu0 %v254
    %1583 = vmatpush1.msra.mxu0 %v253
    %1584 = vmatprep.subr.mxu0 %v258
    %1585 = vmatpush1.msra.mxu0 %v257
    %1586 = vmatprep.subr.mxu0 %v262
    %1587 = vmatpush1.msra.mxu0 %v261
    %1588 = vmatprep.subr.mxu0 %v266
    %1589 = vmatpush1.msra.mxu0 %v265
    %1590 = vmatprep.subr.mxu0 %v270
    %1591 = vmatpush1.msra.mxu0 %v269
    %1592 = vmatprep.subr.mxu0 %v274
    %1593 = vmatpush1.msra.mxu0 %v273
    %1594 = vmatprep.subr.mxu0 %v278
    %1595 = vmatpush1.msra.mxu0 %v277
    %1596 = vmatprep.subr.mxu0 %v282
    %1597 = vmatpush1.msra.mxu0 %v281
    %1598 = vmatprep.subr.mxu0 %v286
    %1599 = vmatpush1.msra.mxu0 %v285
    %1600 = vmatprep.subr.mxu0 %v290
    %1601 = vmatpush1.msra.mxu0 %v289
    %1602 = vmatprep.subr.mxu0 %v294
    %1603 = vmatpush1.msra.mxu0 %v293
    %1604 = vmatprep.subr.mxu0 %v298
    %1605 = vmatpush1.msra.mxu0 %v297
    %1606 = vmatprep.subr.mxu0 %v302
    %1607 = vmatpush1.msra.mxu0 %v301
    %1608 = vmatprep.subr.mxu0 %v306
    %1609 = vmatpush1.msra.mxu0 %v305
    %1610 = vmatprep.subr.mxu0 %v310
    %1611 = vmatpush1.msra.mxu0 %v309
    %1612 = vmatprep.subr.mxu0 %v314
    %1613 = vmatpush1.msra.mxu0 %v313
    %1614 = vmatprep.subr.mxu0 %v318
    %1615 = vmatpush1.msra.mxu0 %v317
    %1616 = vmatprep.subr.mxu0 %v322
    %1617 = vmatpush1.msra.mxu0 %v321
    %1618 = vmatprep.subr.mxu0 %v326
    %1619 = vmatpush1.msra.mxu0 %v325
    %1620 = vmatprep.subr.mxu0 %v330
    %1621 = vmatpush1.msra.mxu0 %v329
    %1622 = vmatprep.subr.mxu0 %v334
    %1623 = vmatpush1.msra.mxu0 %v333
    %1624 = vmatprep.subr.mxu0 %v338
    %1625 = vmatpush1.msra.mxu0 %v337
    %1626 = vmatprep.subr.mxu0 %v342
    %1627 = vmatpush1.msra.mxu0 %v341
    %1628 = vmatprep.subr.mxu0 %v346
    %1629 = vmatpush1.msra.mxu0 %v345
    %1630 = vmatprep.mubr.f32.mxu0 %v1397
    %1631 = vmatmul.mubr.f32.gmra.mrb[0].mxu0 %v1565
    %v1632 = vpop.f32.mrb[0].mxu0
    %v1633 = vadd.f32 %v376, %v1632
    %v1634 = vpop.f32.mrb[0].mxu0
    %v1635 = vadd.f32 %v380, %v1634
    %1636 = vdwg.mxu0
    %1637 = vmatprep.subr.mxu0 %v224
    %1638 = vmatpush1.msra.mxu0 %v223
    %1639 = vmatprep.subr.mxu0 %v228
    %1640 = vmatpush1.msra.mxu0 %v227
    %1641 = vmatprep.subr.mxu0 %v232
    %1642 = vmatpush1.msra.mxu0 %v231
    %1643 = vmatprep.subr.mxu0 %v236
    %1644 = vmatpush1.msra.mxu0 %v235
    %1645 = vmatprep.subr.mxu0 %v240
    %1646 = vmatpush1.msra.mxu0 %v239
    %1647 = vmatprep.subr.mxu0 %v244
    %1648 = vmatpush1.msra.mxu0 %v243
    %1649 = vmatprep.subr.mxu0 %v248
    %1650 = vmatpush1.msra.mxu0 %v247
    %1651 = vmatprep.subr.mxu0 %v252
    %1652 = vmatpush1.msra.mxu0 %v251
    %1653 = vmatprep.subr.mxu0 %v256
    %1654 = vmatpush1.msra.mxu0 %v255
    %1655 = vmatprep.subr.mxu0 %v260
    %1656 = vmatpush1.msra.mxu0 %v259
    %1657 = vmatprep.subr.mxu0 %v264
    %1658 = vmatpush1.msra.mxu0 %v263
    %1659 = vmatprep.subr.mxu0 %v268
    %1660 = vmatpush1.msra.mxu0 %v267
    %1661 = vmatprep.subr.mxu0 %v272
    %1662 = vmatpush1.msra.mxu0 %v271
    %1663 = vmatprep.subr.mxu0 %v276
    %1664 = vmatpush1.msra.mxu0 %v275
    %1665 = vmatprep.subr.mxu0 %v280
    %1666 = vmatpush1.msra.mxu0 %v279
    %1667 = vmatprep.subr.mxu0 %v284
    %1668 = vmatpush1.msra.mxu0 %v283
    %1669 = vmatprep.subr.mxu0 %v288
    %1670 = vmatpush1.msra.mxu0 %v287
    %1671 = vmatprep.subr.mxu0 %v292
    %1672 = vmatpush1.msra.mxu0 %v291
    %1673 = vmatprep.subr.mxu0 %v296
    %1674 = vmatpush1.msra.mxu0 %v295
    %1675 = vmatprep.subr.mxu0 %v300
    %1676 = vmatpush1.msra.mxu0 %v299
    %1677 = vmatprep.subr.mxu0 %v304
    %1678 = vmatpush1.msra.mxu0 %v303
    %1679 = vmatprep.subr.mxu0 %v308
    %1680 = vmatpush1.msra.mxu0 %v307
    %1681 = vmatprep.subr.mxu0 %v312
    %1682 = vmatpush1.msra.mxu0 %v311
    %1683 = vmatprep.subr.mxu0 %v316
    %1684 = vmatpush1.msra.mxu0 %v315
    %1685 = vmatprep.subr.mxu0 %v320
    %1686 = vmatpush1.msra.mxu0 %v319
    %1687 = vmatprep.subr.mxu0 %v324
    %1688 = vmatpush1.msra.mxu0 %v323
    %1689 = vmatprep.subr.mxu0 %v328
    %1690 = vmatpush1.msra.mxu0 %v327
    %1691 = vmatprep.subr.mxu0 %v332
    %1692 = vmatpush1.msra.mxu0 %v331
    %1693 = vmatprep.subr.mxu0 %v336
    %1694 = vmatpush1.msra.mxu0 %v335
    %1695 = vmatprep.subr.mxu0 %v340
    %1696 = vmatpush1.msra.mxu0 %v339
    %1697 = vmatprep.subr.mxu0 %v344
    %1698 = vmatpush1.msra.mxu0 %v343
    %1699 = vmatprep.subr.mxu0 %v348
    %1700 = vmatpush1.msra.mxu0 %v347
    %1701 = vmatprep.mubr.f32.mxu0 %v1397
    %1702 = vmatmul.mubr.f32.gmra.mrb[0].mxu0 %v1565
    %v1703 = vpop.f32.mrb[0].mxu0
    %v1704 = vadd.f32 %v384, %v1703
    %v1705 = vpop.f32.mrb[0].mxu0
    %v1706 = vadd.f32 %v388, %v1705
    %1707 = vdwg.mxu0
    %v1708 = vxor.u32 %v1633, 2147483648
    %v1709 = vmul.f32 %v1708, 1.442695
    %v1710 = vpow.pop %v1709
    %v1711 = vadd.f32 %v1710, 1.0
    %v1712 = vrcp.pop %v1711
    %v1713 = vmul.f32 1.0, %v1712
    %v1714 = vxor.u32 %v1635, 2147483648
    %v1715 = vmul.f32 %v1714, 1.442695
    %v1716 = vpow.pop %v1715
    %v1717 = vadd.f32 %v1716, 1.0
    %v1718 = vrcp.pop %v1717
    %v1719 = vmul.f32 1.0, %v1718
    %v1720 = vtanh.pop %v1704
    %v1721 = vxor.u32 %v1706, 2147483648
    %v1722 = vmul.f32 %v1721, 1.442695
    %v1723 = vpow.pop %v1722
    %v1724 = vadd.f32 %v1723, 1.0
    %v1725 = vrcp.pop %v1724
    %v1726 = vmul.f32 1.0, %v1725
    %v1727 = vmul.f32 %v1719, %v1395
    %v1728 = vmul.f32 %v1713, %v1720
    %v1729 = vadd.f32 %v1727, %v1728
    %v1730 = vtanh.pop %v1729
    %v1731 = vmul.f32 %v1726, %v1730
    %s1732 = scalar_lea.vmem [#allocation6], 32
    %v1733 = vld [vmem:[%s1732] sm:$0xff]
    %1734 = vmatprep.subr.mxu0 %v94
    %1735 = vmatpush1.msra.mxu0 %v93
    %1736 = vmatprep.subr.mxu0 %v98
    %1737 = vmatpush1.msra.mxu0 %v97
    %1738 = vmatprep.subr.mxu0 %v102
    %1739 = vmatpush1.msra.mxu0 %v101
    %1740 = vmatprep.subr.mxu0 %v106
    %1741 = vmatpush1.msra.mxu0 %v105
    %1742 = vmatprep.subr.mxu0 %v110
    %1743 = vmatpush1.msra.mxu0 %v109
    %1744 = vmatprep.subr.mxu0 %v114
    %1745 = vmatpush1.msra.mxu0 %v113
    %1746 = vmatprep.subr.mxu0 %v118
    %1747 = vmatpush1.msra.mxu0 %v117
    %1748 = vmatprep.subr.mxu0 %v122
    %1749 = vmatpush1.msra.mxu0 %v121
    %1750 = vmatprep.subr.mxu0 %v126
    %1751 = vmatpush1.msra.mxu0 %v125
    %1752 = vmatprep.subr.mxu0 %v130
    %1753 = vmatpush1.msra.mxu0 %v129
    %1754 = vmatprep.subr.mxu0 %v134
    %1755 = vmatpush1.msra.mxu0 %v133
    %1756 = vmatprep.subr.mxu0 %v138
    %1757 = vmatpush1.msra.mxu0 %v137
    %1758 = vmatprep.subr.mxu0 %v142
    %1759 = vmatpush1.msra.mxu0 %v141
    %1760 = vmatprep.subr.mxu0 %v146
    %1761 = vmatpush1.msra.mxu0 %v145
    %1762 = vmatprep.subr.mxu0 %v150
    %1763 = vmatpush1.msra.mxu0 %v149
    %1764 = vmatprep.subr.mxu0 %v154
    %1765 = vmatpush1.msra.mxu0 %v153
    %1766 = vmatprep.subr.mxu0 %v158
    %1767 = vmatpush1.msra.mxu0 %v157
    %1768 = vmatprep.subr.mxu0 %v162
    %1769 = vmatpush1.msra.mxu0 %v161
    %1770 = vmatprep.subr.mxu0 %v166
    %1771 = vmatpush1.msra.mxu0 %v165
    %1772 = vmatprep.subr.mxu0 %v170
    %1773 = vmatpush1.msra.mxu0 %v169
    %1774 = vmatprep.subr.mxu0 %v174
    %1775 = vmatpush1.msra.mxu0 %v173
    %1776 = vmatprep.subr.mxu0 %v178
    %1777 = vmatpush1.msra.mxu0 %v177
    %1778 = vmatprep.subr.mxu0 %v182
    %1779 = vmatpush1.msra.mxu0 %v181
    %1780 = vmatprep.subr.mxu0 %v186
    %1781 = vmatpush1.msra.mxu0 %v185
    %1782 = vmatprep.subr.mxu0 %v190
    %1783 = vmatpush1.msra.mxu0 %v189
    %1784 = vmatprep.subr.mxu0 %v194
    %1785 = vmatpush1.msra.mxu0 %v193
    %1786 = vmatprep.subr.mxu0 %v198
    %1787 = vmatpush1.msra.mxu0 %v197
    %1788 = vmatprep.subr.mxu0 %v202
    %1789 = vmatpush1.msra.mxu0 %v201
    %1790 = vmatprep.subr.mxu0 %v206
    %1791 = vmatpush1.msra.mxu0 %v205
    %1792 = vmatprep.subr.mxu0 %v210
    %1793 = vmatpush1.msra.mxu0 %v209
    %1794 = vmatprep.subr.mxu0 %v214
    %1795 = vmatpush1.msra.mxu0 %v213
    %1796 = vmatprep.subr.mxu0 %v218
    %1797 = vmatpush1.msra.mxu0 %v217
    %1798 = vmatprep.mubr.f32.mxu0 %v1565
    %1799 = vmatmul.mubr.f32.gmra.mrb[0].mxu0 %v1733
    %v1800 = vpop.f32.mrb[0].mxu0
    %v1801 = vadd.f32 %v354, %v1800
    %v1802 = vpop.f32.mrb[0].mxu0
    %v1803 = vadd.f32 %v358, %v1802
    %1804 = vdwg.mxu0
    %1805 = vmatprep.subr.mxu0 %v96
    %1806 = vmatpush1.msra.mxu0 %v95
    %1807 = vmatprep.subr.mxu0 %v100
    %1808 = vmatpush1.msra.mxu0 %v99
    %1809 = vmatprep.subr.mxu0 %v104
    %1810 = vmatpush1.msra.mxu0 %v103
    %1811 = vmatprep.subr.mxu0 %v108
    %1812 = vmatpush1.msra.mxu0 %v107
    %1813 = vmatprep.subr.mxu0 %v112
    %1814 = vmatpush1.msra.mxu0 %v111
    %1815 = vmatprep.subr.mxu0 %v116
    %1816 = vmatpush1.msra.mxu0 %v115
    %1817 = vmatprep.subr.mxu0 %v120
    %1818 = vmatpush1.msra.mxu0 %v119
    %1819 = vmatprep.subr.mxu0 %v124
    %1820 = vmatpush1.msra.mxu0 %v123
    %1821 = vmatprep.subr.mxu0 %v128
    %1822 = vmatpush1.msra.mxu0 %v127
    %1823 = vmatprep.subr.mxu0 %v132
    %1824 = vmatpush1.msra.mxu0 %v131
    %1825 = vmatprep.subr.mxu0 %v136
    %1826 = vmatpush1.msra.mxu0 %v135
    %1827 = vmatprep.subr.mxu0 %v140
    %1828 = vmatpush1.msra.mxu0 %v139
    %1829 = vmatprep.subr.mxu0 %v144
    %1830 = vmatpush1.msra.mxu0 %v143
    %1831 = vmatprep.subr.mxu0 %v148
    %1832 = vmatpush1.msra.mxu0 %v147
    %1833 = vmatprep.subr.mxu0 %v152
    %1834 = vmatpush1.msra.mxu0 %v151
    %1835 = vmatprep.subr.mxu0 %v156
    %1836 = vmatpush1.msra.mxu0 %v155
    %1837 = vmatprep.subr.mxu0 %v160
    %1838 = vmatpush1.msra.mxu0 %v159
    %1839 = vmatprep.subr.mxu0 %v164
    %1840 = vmatpush1.msra.mxu0 %v163
    %1841 = vmatprep.subr.mxu0 %v168
    %1842 = vmatpush1.msra.mxu0 %v167
    %1843 = vmatprep.subr.mxu0 %v172
    %1844 = vmatpush1.msra.mxu0 %v171
    %1845 = vmatprep.subr.mxu0 %v176
    %1846 = vmatpush1.msra.mxu0 %v175
    %1847 = vmatprep.subr.mxu0 %v180
    %1848 = vmatpush1.msra.mxu0 %v179
    %1849 = vmatprep.subr.mxu0 %v184
    %1850 = vmatpush1.msra.mxu0 %v183
    %1851 = vmatprep.subr.mxu0 %v188
    %1852 = vmatpush1.msra.mxu0 %v187
    %1853 = vmatprep.subr.mxu0 %v192
    %1854 = vmatpush1.msra.mxu0 %v191
    %1855 = vmatprep.subr.mxu0 %v196
    %1856 = vmatpush1.msra.mxu0 %v195
    %1857 = vmatprep.subr.mxu0 %v200
    %1858 = vmatpush1.msra.mxu0 %v199
    %1859 = vmatprep.subr.mxu0 %v204
    %1860 = vmatpush1.msra.mxu0 %v203
    %1861 = vmatprep.subr.mxu0 %v208
    %1862 = vmatpush1.msra.mxu0 %v207
    %1863 = vmatprep.subr.mxu0 %v212
    %1864 = vmatpush1.msra.mxu0 %v211
    %1865 = vmatprep.subr.mxu0 %v216
    %1866 = vmatpush1.msra.mxu0 %v215
    %1867 = vmatprep.subr.mxu0 %v220
    %1868 = vmatpush1.msra.mxu0 %v219
    %1869 = vmatprep.mubr.f32.mxu0 %v1565
    %1870 = vmatmul.mubr.f32.gmra.mrb[0].mxu0 %v1733
    %v1871 = vpop.f32.mrb[0].mxu0
    %v1872 = vadd.f32 %v362, %v1871
    %v1873 = vpop.f32.mrb[0].mxu0
    %v1874 = vadd.f32 %v366, %v1873
    %1875 = vdwg.mxu0
    %v1876 = vxor.u32 %v1801, 2147483648
    %v1877 = vmul.f32 %v1876, 1.442695
    %v1878 = vpow.pop %v1877
    %v1879 = vadd.f32 %v1878, 1.0
    %v1880 = vrcp.pop %v1879
    %v1881 = vmul.f32 1.0, %v1880
    %v1882 = vxor.u32 %v1803, 2147483648
    %v1883 = vmul.f32 %v1882, 1.442695
    %v1884 = vpow.pop %v1883
    %v1885 = vadd.f32 %v1884, 1.0
    %v1886 = vrcp.pop %v1885
    %v1887 = vmul.f32 1.0, %v1886
    %v1888 = vtanh.pop %v1872
    %v1889 = vxor.u32 %v1874, 2147483648
    %v1890 = vmul.f32 %v1889, 1.442695
    %v1891 = vpow.pop %v1890
    %v1892 = vadd.f32 %v1891, 1.0
    %v1893 = vrcp.pop %v1892
    %v1894 = vmul.f32 1.0, %v1893
    %v1895 = vmul.f32 %v1887, %v1563
    %v1896 = vmul.f32 %v1881, %v1888
    %v1897 = vadd.f32 %v1895, %v1896
    %v1898 = vtanh.pop %v1897
    %v1899 = vmul.f32 %v1894, %v1898
    %1900 = vmatprep.subr.mxu0 %v222
    %1901 = vmatpush1.msra.mxu0 %v221
    %1902 = vmatprep.subr.mxu0 %v226
    %1903 = vmatpush1.msra.mxu0 %v225
    %1904 = vmatprep.subr.mxu0 %v230
    %1905 = vmatpush1.msra.mxu0 %v229
    %1906 = vmatprep.subr.mxu0 %v234
    %1907 = vmatpush1.msra.mxu0 %v233
    %1908 = vmatprep.subr.mxu0 %v238
    %1909 = vmatpush1.msra.mxu0 %v237
    %1910 = vmatprep.subr.mxu0 %v242
    %1911 = vmatpush1.msra.mxu0 %v241
    %1912 = vmatprep.subr.mxu0 %v246
    %1913 = vmatpush1.msra.mxu0 %v245
    %1914 = vmatprep.subr.mxu0 %v250
    %1915 = vmatpush1.msra.mxu0 %v249
    %1916 = vmatprep.subr.mxu0 %v254
    %1917 = vmatpush1.msra.mxu0 %v253
    %1918 = vmatprep.subr.mxu0 %v258
    %1919 = vmatpush1.msra.mxu0 %v257
    %1920 = vmatprep.subr.mxu0 %v262
    %1921 = vmatpush1.msra.mxu0 %v261
    %1922 = vmatprep.subr.mxu0 %v266
    %1923 = vmatpush1.msra.mxu0 %v265
    %1924 = vmatprep.subr.mxu0 %v270
    %1925 = vmatpush1.msra.mxu0 %v269
    %1926 = vmatprep.subr.mxu0 %v274
    %1927 = vmatpush1.msra.mxu0 %v273
    %1928 = vmatprep.subr.mxu0 %v278
    %1929 = vmatpush1.msra.mxu0 %v277
    %1930 = vmatprep.subr.mxu0 %v282
    %1931 = vmatpush1.msra.mxu0 %v281
    %1932 = vmatprep.subr.mxu0 %v286
    %1933 = vmatpush1.msra.mxu0 %v285
    %1934 = vmatprep.subr.mxu0 %v290
    %1935 = vmatpush1.msra.mxu0 %v289
    %1936 = vmatprep.subr.mxu0 %v294
    %1937 = vmatpush1.msra.mxu0 %v293
    %1938 = vmatprep.subr.mxu0 %v298
    %1939 = vmatpush1.msra.mxu0 %v297
    %1940 = vmatprep.subr.mxu0 %v302
    %1941 = vmatpush1.msra.mxu0 %v301
    %1942 = vmatprep.subr.mxu0 %v306
    %1943 = vmatpush1.msra.mxu0 %v305
    %1944 = vmatprep.subr.mxu0 %v310
    %1945 = vmatpush1.msra.mxu0 %v309
    %1946 = vmatprep.subr.mxu0 %v314
    %1947 = vmatpush1.msra.mxu0 %v313
    %1948 = vmatprep.subr.mxu0 %v318
    %1949 = vmatpush1.msra.mxu0 %v317
    %1950 = vmatprep.subr.mxu0 %v322
    %1951 = vmatpush1.msra.mxu0 %v321
    %1952 = vmatprep.subr.mxu0 %v326
    %1953 = vmatpush1.msra.mxu0 %v325
    %1954 = vmatprep.subr.mxu0 %v330
    %1955 = vmatpush1.msra.mxu0 %v329
    %1956 = vmatprep.subr.mxu0 %v334
    %1957 = vmatpush1.msra.mxu0 %v333
    %1958 = vmatprep.subr.mxu0 %v338
    %1959 = vmatpush1.msra.mxu0 %v337
    %1960 = vmatprep.subr.mxu0 %v342
    %1961 = vmatpush1.msra.mxu0 %v341
    %1962 = vmatprep.subr.mxu0 %v346
    %1963 = vmatpush1.msra.mxu0 %v345
    %1964 = vmatprep.mubr.f32.mxu0 %v1731
    %1965 = vmatmul.mubr.f32.gmra.mrb[0].mxu0 %v1899
    %v1966 = vpop.f32.mrb[0].mxu0
    %v1967 = vadd.f32 %v376, %v1966
    %v1968 = vpop.f32.mrb[0].mxu0
    %v1969 = vadd.f32 %v380, %v1968
    %1970 = vdwg.mxu0
    %1971 = vmatprep.subr.mxu0 %v224
    %1972 = vmatpush1.msra.mxu0 %v223
    %1973 = vmatprep.subr.mxu0 %v228
    %1974 = vmatpush1.msra.mxu0 %v227
    %1975 = vmatprep.subr.mxu0 %v232
    %1976 = vmatpush1.msra.mxu0 %v231
    %1977 = vmatprep.subr.mxu0 %v236
    %1978 = vmatpush1.msra.mxu0 %v235
    %1979 = vmatprep.subr.mxu0 %v240
    %1980 = vmatpush1.msra.mxu0 %v239
    %1981 = vmatprep.subr.mxu0 %v244
    %1982 = vmatpush1.msra.mxu0 %v243
    %1983 = vmatprep.subr.mxu0 %v248
    %1984 = vmatpush1.msra.mxu0 %v247
    %1985 = vmatprep.subr.mxu0 %v252
    %1986 = vmatpush1.msra.mxu0 %v251
    %1987 = vmatprep.subr.mxu0 %v256
    %1988 = vmatpush1.msra.mxu0 %v255
    %1989 = vmatprep.subr.mxu0 %v260
    %1990 = vmatpush1.msra.mxu0 %v259
    %1991 = vmatprep.subr.mxu0 %v264
    %1992 = vmatpush1.msra.mxu0 %v263
    %1993 = vmatprep.subr.mxu0 %v268
    %1994 = vmatpush1.msra.mxu0 %v267
    %1995 = vmatprep.subr.mxu0 %v272
    %1996 = vmatpush1.msra.mxu0 %v271
    %1997 = vmatprep.subr.mxu0 %v276
    %1998 = vmatpush1.msra.mxu0 %v275
    %1999 = vmatprep.subr.mxu0 %v280
    %2000 = vmatpush1.msra.mxu0 %v279
    %2001 = vmatprep.subr.mxu0 %v284
    %2002 = vmatpush1.msra.mxu0 %v283
    %2003 = vmatprep.subr.mxu0 %v288
    %2004 = vmatpush1.msra.mxu0 %v287
    %2005 = vmatprep.subr.mxu0 %v292
    %2006 = vmatpush1.msra.mxu0 %v291
    %2007 = vmatprep.subr.mxu0 %v296
    %2008 = vmatpush1.msra.mxu0 %v295
    %2009 = vmatprep.subr.mxu0 %v300
    %2010 = vmatpush1.msra.mxu0 %v299
    %2011 = vmatprep.subr.mxu0 %v304
    %2012 = vmatpush1.msra.mxu0 %v303
    %2013 = vmatprep.subr.mxu0 %v308
    %2014 = vmatpush1.msra.mxu0 %v307
    %2015 = vmatprep.subr.mxu0 %v312
    %2016 = vmatpush1.msra.mxu0 %v311
    %2017 = vmatprep.subr.mxu0 %v316
    %2018 = vmatpush1.msra.mxu0 %v315
    %2019 = vmatprep.subr.mxu0 %v320
    %2020 = vmatpush1.msra.mxu0 %v319
    %2021 = vmatprep.subr.mxu0 %v324
    %2022 = vmatpush1.msra.mxu0 %v323
    %2023 = vmatprep.subr.mxu0 %v328
    %2024 = vmatpush1.msra.mxu0 %v327
    %2025 = vmatprep.subr.mxu0 %v332
    %2026 = vmatpush1.msra.mxu0 %v331
    %2027 = vmatprep.subr.mxu0 %v336
    %2028 = vmatpush1.msra.mxu0 %v335
    %2029 = vmatprep.subr.mxu0 %v340
    %2030 = vmatpush1.msra.mxu0 %v339
    %2031 = vmatprep.subr.mxu0 %v344
    %2032 = vmatpush1.msra.mxu0 %v343
    %2033 = vmatprep.subr.mxu0 %v348
    %2034 = vmatpush1.msra.mxu0 %v347
    %2035 = vmatprep.mubr.f32.mxu0 %v1731
    %2036 = vmatmul.mubr.f32.gmra.mrb[0].mxu0 %v1899
    %v2037 = vpop.f32.mrb[0].mxu0
    %v2038 = vadd.f32 %v384, %v2037
    %v2039 = vpop.f32.mrb[0].mxu0
    %v2040 = vadd.f32 %v388, %v2039
    %2041 = vdwg.mxu0
    %v2042 = vxor.u32 %v1967, 2147483648
    %v2043 = vmul.f32 %v2042, 1.442695
    %v2044 = vpow.pop %v2043
    %v2045 = vadd.f32 %v2044, 1.0
    %v2046 = vrcp.pop %v2045
    %v2047 = vmul.f32 1.0, %v2046
    %v2048 = vxor.u32 %v1969, 2147483648
    %v2049 = vmul.f32 %v2048, 1.442695
    %v2050 = vpow.pop %v2049
    %v2051 = vadd.f32 %v2050, 1.0
    %v2052 = vrcp.pop %v2051
    %v2053 = vmul.f32 1.0, %v2052
    %v2054 = vtanh.pop %v2038
    %v2055 = vxor.u32 %v2040, 2147483648
    %v2056 = vmul.f32 %v2055, 1.442695
    %v2057 = vpow.pop %v2056
    %v2058 = vadd.f32 %v2057, 1.0
    %v2059 = vrcp.pop %v2058
    %v2060 = vmul.f32 1.0, %v2059
    %v2061 = vmul.f32 %v2053, %v1729
    %v2062 = vmul.f32 %v2047, %v2054
    %v2063 = vadd.f32 %v2061, %v2062
    %v2064 = vtanh.pop %v2063
    %v2065 = vmul.f32 %v2060, %v2064
    %s2066 = scalar_lea.vmem [#allocation6], 40
    %v2067 = vld [vmem:[%s2066] sm:$0xff]
    %2068 = vmatprep.subr.mxu0 %v94
    %2069 = vmatpush1.msra.mxu0 %v93
    %2070 = vmatprep.subr.mxu0 %v98
    %2071 = vmatpush1.msra.mxu0 %v97
    %2072 = vmatprep.subr.mxu0 %v102
    %2073 = vmatpush1.msra.mxu0 %v101
    %2074 = vmatprep.subr.mxu0 %v106
    %2075 = vmatpush1.msra.mxu0 %v105
    %2076 = vmatprep.subr.mxu0 %v110
    %2077 = vmatpush1.msra.mxu0 %v109
    %2078 = vmatprep.subr.mxu0 %v114
    %2079 = vmatpush1.msra.mxu0 %v113
    %2080 = vmatprep.subr.mxu0 %v118
    %2081 = vmatpush1.msra.mxu0 %v117
    %2082 = vmatprep.subr.mxu0 %v122
    %2083 = vmatpush1.msra.mxu0 %v121
    %2084 = vmatprep.subr.mxu0 %v126
    %2085 = vmatpush1.msra.mxu0 %v125
    %2086 = vmatprep.subr.mxu0 %v130
    %2087 = vmatpush1.msra.mxu0 %v129
    %2088 = vmatprep.subr.mxu0 %v134
    %2089 = vmatpush1.msra.mxu0 %v133
    %2090 = vmatprep.subr.mxu0 %v138
    %2091 = vmatpush1.msra.mxu0 %v137
    %2092 = vmatprep.subr.mxu0 %v142
    %2093 = vmatpush1.msra.mxu0 %v141
    %2094 = vmatprep.subr.mxu0 %v146
    %2095 = vmatpush1.msra.mxu0 %v145
    %2096 = vmatprep.subr.mxu0 %v150
    %2097 = vmatpush1.msra.mxu0 %v149
    %2098 = vmatprep.subr.mxu0 %v154
    %2099 = vmatpush1.msra.mxu0 %v153
    %2100 = vmatprep.subr.mxu0 %v158
    %2101 = vmatpush1.msra.mxu0 %v157
    %2102 = vmatprep.subr.mxu0 %v162
    %2103 = vmatpush1.msra.mxu0 %v161
    %2104 = vmatprep.subr.mxu0 %v166
    %2105 = vmatpush1.msra.mxu0 %v165
    %2106 = vmatprep.subr.mxu0 %v170
    %2107 = vmatpush1.msra.mxu0 %v169
    %2108 = vmatprep.subr.mxu0 %v174
    %2109 = vmatpush1.msra.mxu0 %v173
    %2110 = vmatprep.subr.mxu0 %v178
    %2111 = vmatpush1.msra.mxu0 %v177
    %2112 = vmatprep.subr.mxu0 %v182
    %2113 = vmatpush1.msra.mxu0 %v181
    %2114 = vmatprep.subr.mxu0 %v186
    %2115 = vmatpush1.msra.mxu0 %v185
    %2116 = vmatprep.subr.mxu0 %v190
    %2117 = vmatpush1.msra.mxu0 %v189
    %2118 = vmatprep.subr.mxu0 %v194
    %2119 = vmatpush1.msra.mxu0 %v193
    %2120 = vmatprep.subr.mxu0 %v198
    %2121 = vmatpush1.msra.mxu0 %v197
    %2122 = vmatprep.subr.mxu0 %v202
    %2123 = vmatpush1.msra.mxu0 %v201
    %2124 = vmatprep.subr.mxu0 %v206
    %2125 = vmatpush1.msra.mxu0 %v205
    %2126 = vmatprep.subr.mxu0 %v210
    %2127 = vmatpush1.msra.mxu0 %v209
    %2128 = vmatprep.subr.mxu0 %v214
    %2129 = vmatpush1.msra.mxu0 %v213
    %2130 = vmatprep.subr.mxu0 %v218
    %2131 = vmatpush1.msra.mxu0 %v217
    %2132 = vmatprep.mubr.f32.mxu0 %v1899
    %2133 = vmatmul.mubr.f32.gmra.mrb[0].mxu0 %v2067
    %v2134 = vpop.f32.mrb[0].mxu0
    %v2135 = vadd.f32 %v354, %v2134
    %v2136 = vpop.f32.mrb[0].mxu0
    %v2137 = vadd.f32 %v358, %v2136
    %2138 = vdwg.mxu0
    %2139 = vmatprep.subr.mxu0 %v96
    %2140 = vmatpush1.msra.mxu0 %v95
    %2141 = vmatprep.subr.mxu0 %v100
    %2142 = vmatpush1.msra.mxu0 %v99
    %2143 = vmatprep.subr.mxu0 %v104
    %2144 = vmatpush1.msra.mxu0 %v103
    %2145 = vmatprep.subr.mxu0 %v108
    %2146 = vmatpush1.msra.mxu0 %v107
    %2147 = vmatprep.subr.mxu0 %v112
    %2148 = vmatpush1.msra.mxu0 %v111
    %2149 = vmatprep.subr.mxu0 %v116
    %2150 = vmatpush1.msra.mxu0 %v115
    %2151 = vmatprep.subr.mxu0 %v120
    %2152 = vmatpush1.msra.mxu0 %v119
    %2153 = vmatprep.subr.mxu0 %v124
    %2154 = vmatpush1.msra.mxu0 %v123
    %2155 = vmatprep.subr.mxu0 %v128
    %2156 = vmatpush1.msra.mxu0 %v127
    %2157 = vmatprep.subr.mxu0 %v132
    %2158 = vmatpush1.msra.mxu0 %v131
    %2159 = vmatprep.subr.mxu0 %v136
    %2160 = vmatpush1.msra.mxu0 %v135
    %2161 = vmatprep.subr.mxu0 %v140
    %2162 = vmatpush1.msra.mxu0 %v139
    %2163 = vmatprep.subr.mxu0 %v144
    %2164 = vmatpush1.msra.mxu0 %v143
    %2165 = vmatprep.subr.mxu0 %v148
    %2166 = vmatpush1.msra.mxu0 %v147
    %2167 = vmatprep.subr.mxu0 %v152
    %2168 = vmatpush1.msra.mxu0 %v151
    %2169 = vmatprep.subr.mxu0 %v156
    %2170 = vmatpush1.msra.mxu0 %v155
    %2171 = vmatprep.subr.mxu0 %v160
    %2172 = vmatpush1.msra.mxu0 %v159
    %2173 = vmatprep.subr.mxu0 %v164
    %2174 = vmatpush1.msra.mxu0 %v163
    %2175 = vmatprep.subr.mxu0 %v168
    %2176 = vmatpush1.msra.mxu0 %v167
    %2177 = vmatprep.subr.mxu0 %v172
    %2178 = vmatpush1.msra.mxu0 %v171
    %2179 = vmatprep.subr.mxu0 %v176
    %2180 = vmatpush1.msra.mxu0 %v175
    %2181 = vmatprep.subr.mxu0 %v180
    %2182 = vmatpush1.msra.mxu0 %v179
    %2183 = vmatprep.subr.mxu0 %v184
    %2184 = vmatpush1.msra.mxu0 %v183
    %2185 = vmatprep.subr.mxu0 %v188
    %2186 = vmatpush1.msra.mxu0 %v187
    %2187 = vmatprep.subr.mxu0 %v192
    %2188 = vmatpush1.msra.mxu0 %v191
    %2189 = vmatprep.subr.mxu0 %v196
    %2190 = vmatpush1.msra.mxu0 %v195
    %2191 = vmatprep.subr.mxu0 %v200
    %2192 = vmatpush1.msra.mxu0 %v199
    %2193 = vmatprep.subr.mxu0 %v204
    %2194 = vmatpush1.msra.mxu0 %v203
    %2195 = vmatprep.subr.mxu0 %v208
    %2196 = vmatpush1.msra.mxu0 %v207
    %2197 = vmatprep.subr.mxu0 %v212
    %2198 = vmatpush1.msra.mxu0 %v211
    %2199 = vmatprep.subr.mxu0 %v216
    %2200 = vmatpush1.msra.mxu0 %v215
    %2201 = vmatprep.subr.mxu0 %v220
    %2202 = vmatpush1.msra.mxu0 %v219
    %2203 = vmatprep.mubr.f32.mxu0 %v1899
    %2204 = vmatmul.mubr.f32.gmra.mrb[0].mxu0 %v2067
    %v2205 = vpop.f32.mrb[0].mxu0
    %v2206 = vadd.f32 %v362, %v2205
    %v2207 = vpop.f32.mrb[0].mxu0
    %v2208 = vadd.f32 %v366, %v2207
    %2209 = vdwg.mxu0
    %v2210 = vxor.u32 %v2135, 2147483648
    %v2211 = vmul.f32 %v2210, 1.442695
    %v2212 = vpow.pop %v2211
    %v2213 = vadd.f32 %v2212, 1.0
    %v2214 = vrcp.pop %v2213
    %v2215 = vmul.f32 1.0, %v2214
    %v2216 = vxor.u32 %v2137, 2147483648
    %v2217 = vmul.f32 %v2216, 1.442695
    %v2218 = vpow.pop %v2217
    %v2219 = vadd.f32 %v2218, 1.0
    %v2220 = vrcp.pop %v2219
    %v2221 = vmul.f32 1.0, %v2220
    %v2222 = vtanh.pop %v2206
    %v2223 = vxor.u32 %v2208, 2147483648
    %v2224 = vmul.f32 %v2223, 1.442695
    %v2225 = vpow.pop %v2224
    %v2226 = vadd.f32 %v2225, 1.0
    %v2227 = vrcp.pop %v2226
    %v2228 = vmul.f32 1.0, %v2227
    %v2229 = vmul.f32 %v2221, %v1897
    %v2230 = vmul.f32 %v2215, %v2222
    %v2231 = vadd.f32 %v2229, %v2230
    %v2232 = vtanh.pop %v2231
    %v2233 = vmul.f32 %v2228, %v2232
    %2234 = vmatprep.subr.mxu0 %v222
    %2235 = vmatpush1.msra.mxu0 %v221
    %2236 = vmatprep.subr.mxu0 %v226
    %2237 = vmatpush1.msra.mxu0 %v225
    %2238 = vmatprep.subr.mxu0 %v230
    %2239 = vmatpush1.msra.mxu0 %v229
    %2240 = vmatprep.subr.mxu0 %v234
    %2241 = vmatpush1.msra.mxu0 %v233
    %2242 = vmatprep.subr.mxu0 %v238
    %2243 = vmatpush1.msra.mxu0 %v237
    %2244 = vmatprep.subr.mxu0 %v242
    %2245 = vmatpush1.msra.mxu0 %v241
    %2246 = vmatprep.subr.mxu0 %v246
    %2247 = vmatpush1.msra.mxu0 %v245
    %2248 = vmatprep.subr.mxu0 %v250
    %2249 = vmatpush1.msra.mxu0 %v249
    %2250 = vmatprep.subr.mxu0 %v254
    %2251 = vmatpush1.msra.mxu0 %v253
    %2252 = vmatprep.subr.mxu0 %v258
    %2253 = vmatpush1.msra.mxu0 %v257
    %2254 = vmatprep.subr.mxu0 %v262
    %2255 = vmatpush1.msra.mxu0 %v261
    %2256 = vmatprep.subr.mxu0 %v266
    %2257 = vmatpush1.msra.mxu0 %v265
    %2258 = vmatprep.subr.mxu0 %v270
    %2259 = vmatpush1.msra.mxu0 %v269
    %2260 = vmatprep.subr.mxu0 %v274
    %2261 = vmatpush1.msra.mxu0 %v273
    %2262 = vmatprep.subr.mxu0 %v278
    %2263 = vmatpush1.msra.mxu0 %v277
    %2264 = vmatprep.subr.mxu0 %v282
    %2265 = vmatpush1.msra.mxu0 %v281
    %2266 = vmatprep.subr.mxu0 %v286
    %2267 = vmatpush1.msra.mxu0 %v285
    %2268 = vmatprep.subr.mxu0 %v290
    %2269 = vmatpush1.msra.mxu0 %v289
    %2270 = vmatprep.subr.mxu0 %v294
    %2271 = vmatpush1.msra.mxu0 %v293
    %2272 = vmatprep.subr.mxu0 %v298
    %2273 = vmatpush1.msra.mxu0 %v297
    %2274 = vmatprep.subr.mxu0 %v302
    %2275 = vmatpush1.msra.mxu0 %v301
    %2276 = vmatprep.subr.mxu0 %v306
    %2277 = vmatpush1.msra.mxu0 %v305
    %2278 = vmatprep.subr.mxu0 %v310
    %2279 = vmatpush1.msra.mxu0 %v309
    %2280 = vmatprep.subr.mxu0 %v314
    %2281 = vmatpush1.msra.mxu0 %v313
    %2282 = vmatprep.subr.mxu0 %v318
    %2283 = vmatpush1.msra.mxu0 %v317
    %2284 = vmatprep.subr.mxu0 %v322
    %2285 = vmatpush1.msra.mxu0 %v321
    %2286 = vmatprep.subr.mxu0 %v326
    %2287 = vmatpush1.msra.mxu0 %v325
    %2288 = vmatprep.subr.mxu0 %v330
    %2289 = vmatpush1.msra.mxu0 %v329
    %2290 = vmatprep.subr.mxu0 %v334
    %2291 = vmatpush1.msra.mxu0 %v333
    %2292 = vmatprep.subr.mxu0 %v338
    %2293 = vmatpush1.msra.mxu0 %v337
    %2294 = vmatprep.subr.mxu0 %v342
    %2295 = vmatpush1.msra.mxu0 %v341
    %2296 = vmatprep.subr.mxu0 %v346
    %2297 = vmatpush1.msra.mxu0 %v345
    %2298 = vmatprep.mubr.f32.mxu0 %v2065
    %2299 = vmatmul.mubr.f32.gmra.mrb[0].mxu0 %v2233
    %v2300 = vpop.f32.mrb[0].mxu0
    %v2301 = vadd.f32 %v376, %v2300
    %v2302 = vpop.f32.mrb[0].mxu0
    %v2303 = vadd.f32 %v380, %v2302
    %2304 = vdwg.mxu0
    %2305 = vmatprep.subr.mxu0 %v224
    %2306 = vmatpush1.msra.mxu0 %v223
    %2307 = vmatprep.subr.mxu0 %v228
    %2308 = vmatpush1.msra.mxu0 %v227
    %2309 = vmatprep.subr.mxu0 %v232
    %2310 = vmatpush1.msra.mxu0 %v231
    %2311 = vmatprep.subr.mxu0 %v236
    %2312 = vmatpush1.msra.mxu0 %v235
    %2313 = vmatprep.subr.mxu0 %v240
    %2314 = vmatpush1.msra.mxu0 %v239
    %2315 = vmatprep.subr.mxu0 %v244
    %2316 = vmatpush1.msra.mxu0 %v243
    %2317 = vmatprep.subr.mxu0 %v248
    %2318 = vmatpush1.msra.mxu0 %v247
    %2319 = vmatprep.subr.mxu0 %v252
    %2320 = vmatpush1.msra.mxu0 %v251
    %2321 = vmatprep.subr.mxu0 %v256
    %2322 = vmatpush1.msra.mxu0 %v255
    %2323 = vmatprep.subr.mxu0 %v260
    %2324 = vmatpush1.msra.mxu0 %v259
    %2325 = vmatprep.subr.mxu0 %v264
    %2326 = vmatpush1.msra.mxu0 %v263
    %2327 = vmatprep.subr.mxu0 %v268
    %2328 = vmatpush1.msra.mxu0 %v267
    %2329 = vmatprep.subr.mxu0 %v272
    %2330 = vmatpush1.msra.mxu0 %v271
    %2331 = vmatprep.subr.mxu0 %v276
    %2332 = vmatpush1.msra.mxu0 %v275
    %2333 = vmatprep.subr.mxu0 %v280
    %2334 = vmatpush1.msra.mxu0 %v279
    %2335 = vmatprep.subr.mxu0 %v284
    %2336 = vmatpush1.msra.mxu0 %v283
    %2337 = vmatprep.subr.mxu0 %v288
    %2338 = vmatpush1.msra.mxu0 %v287
    %2339 = vmatprep.subr.mxu0 %v292
    %2340 = vmatpush1.msra.mxu0 %v291
    %2341 = vmatprep.subr.mxu0 %v296
    %2342 = vmatpush1.msra.mxu0 %v295
    %2343 = vmatprep.subr.mxu0 %v300
    %2344 = vmatpush1.msra.mxu0 %v299
    %2345 = vmatprep.subr.mxu0 %v304
    %2346 = vmatpush1.msra.mxu0 %v303
    %2347 = vmatprep.subr.mxu0 %v308
    %2348 = vmatpush1.msra.mxu0 %v307
    %2349 = vmatprep.subr.mxu0 %v312
    %2350 = vmatpush1.msra.mxu0 %v311
    %2351 = vmatprep.subr.mxu0 %v316
    %2352 = vmatpush1.msra.mxu0 %v315
    %2353 = vmatprep.subr.mxu0 %v320
    %2354 = vmatpush1.msra.mxu0 %v319
    %2355 = vmatprep.subr.mxu0 %v324
    %2356 = vmatpush1.msra.mxu0 %v323
    %2357 = vmatprep.subr.mxu0 %v328
    %2358 = vmatpush1.msra.mxu0 %v327
    %2359 = vmatprep.subr.mxu0 %v332
    %2360 = vmatpush1.msra.mxu0 %v331
    %2361 = vmatprep.subr.mxu0 %v336
    %2362 = vmatpush1.msra.mxu0 %v335
    %2363 = vmatprep.subr.mxu0 %v340
    %2364 = vmatpush1.msra.mxu0 %v339
    %2365 = vmatprep.subr.mxu0 %v344
    %2366 = vmatpush1.msra.mxu0 %v343
    %2367 = vmatprep.subr.mxu0 %v348
    %2368 = vmatpush1.msra.mxu0 %v347
    %2369 = vmatprep.mubr.f32.mxu0 %v2065
    %2370 = vmatmul.mubr.f32.gmra.mrb[0].mxu0 %v2233
    %v2371 = vpop.f32.mrb[0].mxu0
    %v2372 = vadd.f32 %v384, %v2371
    %v2373 = vpop.f32.mrb[0].mxu0
    %v2374 = vadd.f32 %v388, %v2373
    %2375 = vdwg.mxu0
    %v2376 = vxor.u32 %v2301, 2147483648
    %v2377 = vmul.f32 %v2376, 1.442695
    %v2378 = vpow.pop %v2377
    %v2379 = vadd.f32 %v2378, 1.0
    %v2380 = vrcp.pop %v2379
    %v2381 = vmul.f32 1.0, %v2380
    %v2382 = vxor.u32 %v2303, 2147483648
    %v2383 = vmul.f32 %v2382, 1.442695
    %v2384 = vpow.pop %v2383
    %v2385 = vadd.f32 %v2384, 1.0
    %v2386 = vrcp.pop %v2385
    %v2387 = vmul.f32 1.0, %v2386
    %v2388 = vtanh.pop %v2372
    %v2389 = vxor.u32 %v2374, 2147483648
    %v2390 = vmul.f32 %v2389, 1.442695
    %v2391 = vpow.pop %v2390
    %v2392 = vadd.f32 %v2391, 1.0
    %v2393 = vrcp.pop %v2392
    %v2394 = vmul.f32 1.0, %v2393
    %v2395 = vmul.f32 %v2387, %v2063
    %v2396 = vmul.f32 %v2381, %v2388
    %v2397 = vadd.f32 %v2395, %v2396
    %v2398 = vtanh.pop %v2397
    %v2399 = vmul.f32 %v2394, %v2398
    %s2400 = scalar_lea.vmem [#allocation6], 48
    %v2401 = vld [vmem:[%s2400] sm:$0xff]
    %2402 = vmatprep.subr.mxu0 %v94
    %2403 = vmatpush1.msra.mxu0 %v93
    %2404 = vmatprep.subr.mxu0 %v98
    %2405 = vmatpush1.msra.mxu0 %v97
    %2406 = vmatprep.subr.mxu0 %v102
    %2407 = vmatpush1.msra.mxu0 %v101
    %2408 = vmatprep.subr.mxu0 %v106
    %2409 = vmatpush1.msra.mxu0 %v105
    %2410 = vmatprep.subr.mxu0 %v110
    %2411 = vmatpush1.msra.mxu0 %v109
    %2412 = vmatprep.subr.mxu0 %v114
    %2413 = vmatpush1.msra.mxu0 %v113
    %2414 = vmatprep.subr.mxu0 %v118
    %2415 = vmatpush1.msra.mxu0 %v117
    %2416 = vmatprep.subr.mxu0 %v122
    %2417 = vmatpush1.msra.mxu0 %v121
    %2418 = vmatprep.subr.mxu0 %v126
    %2419 = vmatpush1.msra.mxu0 %v125
    %2420 = vmatprep.subr.mxu0 %v130
    %2421 = vmatpush1.msra.mxu0 %v129
    %2422 = vmatprep.subr.mxu0 %v134
    %2423 = vmatpush1.msra.mxu0 %v133
    %2424 = vmatprep.subr.mxu0 %v138
    %2425 = vmatpush1.msra.mxu0 %v137
    %2426 = vmatprep.subr.mxu0 %v142
    %2427 = vmatpush1.msra.mxu0 %v141
    %2428 = vmatprep.subr.mxu0 %v146
    %2429 = vmatpush1.msra.mxu0 %v145
    %2430 = vmatprep.subr.mxu0 %v150
    %2431 = vmatpush1.msra.mxu0 %v149
    %2432 = vmatprep.subr.mxu0 %v154
    %2433 = vmatpush1.msra.mxu0 %v153
    %2434 = vmatprep.subr.mxu0 %v158
    %2435 = vmatpush1.msra.mxu0 %v157
    %2436 = vmatprep.subr.mxu0 %v162
    %2437 = vmatpush1.msra.mxu0 %v161
    %2438 = vmatprep.subr.mxu0 %v166
    %2439 = vmatpush1.msra.mxu0 %v165
    %2440 = vmatprep.subr.mxu0 %v170
    %2441 = vmatpush1.msra.mxu0 %v169
    %2442 = vmatprep.subr.mxu0 %v174
    %2443 = vmatpush1.msra.mxu0 %v173
    %2444 = vmatprep.subr.mxu0 %v178
    %2445 = vmatpush1.msra.mxu0 %v177
    %2446 = vmatprep.subr.mxu0 %v182
    %2447 = vmatpush1.msra.mxu0 %v181
    %2448 = vmatprep.subr.mxu0 %v186
    %2449 = vmatpush1.msra.mxu0 %v185
    %2450 = vmatprep.subr.mxu0 %v190
    %2451 = vmatpush1.msra.mxu0 %v189
    %2452 = vmatprep.subr.mxu0 %v194
    %2453 = vmatpush1.msra.mxu0 %v193
    %2454 = vmatprep.subr.mxu0 %v198
    %2455 = vmatpush1.msra.mxu0 %v197
    %2456 = vmatprep.subr.mxu0 %v202
    %2457 = vmatpush1.msra.mxu0 %v201
    %2458 = vmatprep.subr.mxu0 %v206
    %2459 = vmatpush1.msra.mxu0 %v205
    %2460 = vmatprep.subr.mxu0 %v210
    %2461 = vmatpush1.msra.mxu0 %v209
    %2462 = vmatprep.subr.mxu0 %v214
    %2463 = vmatpush1.msra.mxu0 %v213
    %2464 = vmatprep.subr.mxu0 %v218
    %2465 = vmatpush1.msra.mxu0 %v217
    %2466 = vmatprep.mubr.f32.mxu0 %v2233
    %2467 = vmatmul.mubr.f32.gmra.mrb[0].mxu0 %v2401
    %v2468 = vpop.f32.mrb[0].mxu0
    %v2469 = vadd.f32 %v354, %v2468
    %v2470 = vpop.f32.mrb[0].mxu0
    %v2471 = vadd.f32 %v358, %v2470
    %2472 = vdwg.mxu0
    %2473 = vmatprep.subr.mxu0 %v96
    %2474 = vmatpush1.msra.mxu0 %v95
    %2475 = vmatprep.subr.mxu0 %v100
    %2476 = vmatpush1.msra.mxu0 %v99
    %2477 = vmatprep.subr.mxu0 %v104
    %2478 = vmatpush1.msra.mxu0 %v103
    %2479 = vmatprep.subr.mxu0 %v108
    %2480 = vmatpush1.msra.mxu0 %v107
    %2481 = vmatprep.subr.mxu0 %v112
    %2482 = vmatpush1.msra.mxu0 %v111
    %2483 = vmatprep.subr.mxu0 %v116
    %2484 = vmatpush1.msra.mxu0 %v115
    %2485 = vmatprep.subr.mxu0 %v120
    %2486 = vmatpush1.msra.mxu0 %v119
    %2487 = vmatprep.subr.mxu0 %v124
    %2488 = vmatpush1.msra.mxu0 %v123
    %2489 = vmatprep.subr.mxu0 %v128
    %2490 = vmatpush1.msra.mxu0 %v127
    %2491 = vmatprep.subr.mxu0 %v132
    %2492 = vmatpush1.msra.mxu0 %v131
    %2493 = vmatprep.subr.mxu0 %v136
    %2494 = vmatpush1.msra.mxu0 %v135
    %2495 = vmatprep.subr.mxu0 %v140
    %2496 = vmatpush1.msra.mxu0 %v139
    %2497 = vmatprep.subr.mxu0 %v144
    %2498 = vmatpush1.msra.mxu0 %v143
    %2499 = vmatprep.subr.mxu0 %v148
    %2500 = vmatpush1.msra.mxu0 %v147
    %2501 = vmatprep.subr.mxu0 %v152
    %2502 = vmatpush1.msra.mxu0 %v151
    %2503 = vmatprep.subr.mxu0 %v156
    %2504 = vmatpush1.msra.mxu0 %v155
    %2505 = vmatprep.subr.mxu0 %v160
    %2506 = vmatpush1.msra.mxu0 %v159
    %2507 = vmatprep.subr.mxu0 %v164
    %2508 = vmatpush1.msra.mxu0 %v163
    %2509 = vmatprep.subr.mxu0 %v168
    %2510 = vmatpush1.msra.mxu0 %v167
    %2511 = vmatprep.subr.mxu0 %v172
    %2512 = vmatpush1.msra.mxu0 %v171
    %2513 = vmatprep.subr.mxu0 %v176
    %2514 = vmatpush1.msra.mxu0 %v175
    %2515 = vmatprep.subr.mxu0 %v180
    %2516 = vmatpush1.msra.mxu0 %v179
    %2517 = vmatprep.subr.mxu0 %v184
    %2518 = vmatpush1.msra.mxu0 %v183
    %2519 = vmatprep.subr.mxu0 %v188
    %2520 = vmatpush1.msra.mxu0 %v187
    %2521 = vmatprep.subr.mxu0 %v192
    %2522 = vmatpush1.msra.mxu0 %v191
    %2523 = vmatprep.subr.mxu0 %v196
    %2524 = vmatpush1.msra.mxu0 %v195
    %2525 = vmatprep.subr.mxu0 %v200
    %2526 = vmatpush1.msra.mxu0 %v199
    %2527 = vmatprep.subr.mxu0 %v204
    %2528 = vmatpush1.msra.mxu0 %v203
    %2529 = vmatprep.subr.mxu0 %v208
    %2530 = vmatpush1.msra.mxu0 %v207
    %2531 = vmatprep.subr.mxu0 %v212
    %2532 = vmatpush1.msra.mxu0 %v211
    %2533 = vmatprep.subr.mxu0 %v216
    %2534 = vmatpush1.msra.mxu0 %v215
    %2535 = vmatprep.subr.mxu0 %v220
    %2536 = vmatpush1.msra.mxu0 %v219
    %2537 = vmatprep.mubr.f32.mxu0 %v2233
    %2538 = vmatmul.mubr.f32.gmra.mrb[0].mxu0 %v2401
    %v2539 = vpop.f32.mrb[0].mxu0
    %v2540 = vadd.f32 %v362, %v2539
    %v2541 = vpop.f32.mrb[0].mxu0
    %v2542 = vadd.f32 %v366, %v2541
    %2543 = vdwg.mxu0
    %v2544 = vxor.u32 %v2469, 2147483648
    %v2545 = vmul.f32 %v2544, 1.442695
    %v2546 = vpow.pop %v2545
    %v2547 = vadd.f32 %v2546, 1.0
    %v2548 = vrcp.pop %v2547
    %v2549 = vmul.f32 1.0, %v2548
    %v2550 = vxor.u32 %v2471, 2147483648
    %v2551 = vmul.f32 %v2550, 1.442695
    %v2552 = vpow.pop %v2551
    %v2553 = vadd.f32 %v2552, 1.0
    %v2554 = vrcp.pop %v2553
    %v2555 = vmul.f32 1.0, %v2554
    %v2556 = vtanh.pop %v2540
    %v2557 = vxor.u32 %v2542, 2147483648
    %v2558 = vmul.f32 %v2557, 1.442695
    %v2559 = vpow.pop %v2558
    %v2560 = vadd.f32 %v2559, 1.0
    %v2561 = vrcp.pop %v2560
    %v2562 = vmul.f32 1.0, %v2561
    %v2563 = vmul.f32 %v2555, %v2231
    %v2564 = vmul.f32 %v2549, %v2556
    %v2565 = vadd.f32 %v2563, %v2564
    %v2566 = vtanh.pop %v2565
    %v2567 = vmul.f32 %v2562, %v2566
    %2568 = vmatprep.subr.mxu0 %v222
    %2569 = vmatpush1.msra.mxu0 %v221
    %2570 = vmatprep.subr.mxu0 %v226
    %2571 = vmatpush1.msra.mxu0 %v225
    %2572 = vmatprep.subr.mxu0 %v230
    %2573 = vmatpush1.msra.mxu0 %v229
    %2574 = vmatprep.subr.mxu0 %v234
    %2575 = vmatpush1.msra.mxu0 %v233
    %2576 = vmatprep.subr.mxu0 %v238
    %2577 = vmatpush1.msra.mxu0 %v237
    %2578 = vmatprep.subr.mxu0 %v242
    %2579 = vmatpush1.msra.mxu0 %v241
    %2580 = vmatprep.subr.mxu0 %v246
    %2581 = vmatpush1.msra.mxu0 %v245
    %2582 = vmatprep.subr.mxu0 %v250
    %2583 = vmatpush1.msra.mxu0 %v249
    %2584 = vmatprep.subr.mxu0 %v254
    %2585 = vmatpush1.msra.mxu0 %v253
    %2586 = vmatprep.subr.mxu0 %v258
    %2587 = vmatpush1.msra.mxu0 %v257
    %2588 = vmatprep.subr.mxu0 %v262
    %2589 = vmatpush1.msra.mxu0 %v261
    %2590 = vmatprep.subr.mxu0 %v266
    %2591 = vmatpush1.msra.mxu0 %v265
    %2592 = vmatprep.subr.mxu0 %v270
    %2593 = vmatpush1.msra.mxu0 %v269
    %2594 = vmatprep.subr.mxu0 %v274
    %2595 = vmatpush1.msra.mxu0 %v273
    %2596 = vmatprep.subr.mxu0 %v278
    %2597 = vmatpush1.msra.mxu0 %v277
    %2598 = vmatprep.subr.mxu0 %v282
    %2599 = vmatpush1.msra.mxu0 %v281
    %2600 = vmatprep.subr.mxu0 %v286
    %2601 = vmatpush1.msra.mxu0 %v285
    %2602 = vmatprep.subr.mxu0 %v290
    %2603 = vmatpush1.msra.mxu0 %v289
    %2604 = vmatprep.subr.mxu0 %v294
    %2605 = vmatpush1.msra.mxu0 %v293
    %2606 = vmatprep.subr.mxu0 %v298
    %2607 = vmatpush1.msra.mxu0 %v297
    %2608 = vmatprep.subr.mxu0 %v302
    %2609 = vmatpush1.msra.mxu0 %v301
    %2610 = vmatprep.subr.mxu0 %v306
    %2611 = vmatpush1.msra.mxu0 %v305
    %2612 = vmatprep.subr.mxu0 %v310
    %2613 = vmatpush1.msra.mxu0 %v309
    %2614 = vmatprep.subr.mxu0 %v314
    %2615 = vmatpush1.msra.mxu0 %v313
    %2616 = vmatprep.subr.mxu0 %v318
    %2617 = vmatpush1.msra.mxu0 %v317
    %2618 = vmatprep.subr.mxu0 %v322
    %2619 = vmatpush1.msra.mxu0 %v321
    %2620 = vmatprep.subr.mxu0 %v326
    %2621 = vmatpush1.msra.mxu0 %v325
    %2622 = vmatprep.subr.mxu0 %v330
    %2623 = vmatpush1.msra.mxu0 %v329
    %2624 = vmatprep.subr.mxu0 %v334
    %2625 = vmatpush1.msra.mxu0 %v333
    %2626 = vmatprep.subr.mxu0 %v338
    %2627 = vmatpush1.msra.mxu0 %v337
    %2628 = vmatprep.subr.mxu0 %v342
    %2629 = vmatpush1.msra.mxu0 %v341
    %2630 = vmatprep.subr.mxu0 %v346
    %2631 = vmatpush1.msra.mxu0 %v345
    %2632 = vmatprep.mubr.f32.mxu0 %v2399
    %2633 = vmatmul.mubr.f32.gmra.mrb[0].mxu0 %v2567
    %v2634 = vpop.f32.mrb[0].mxu0
    %v2635 = vadd.f32 %v376, %v2634
    %v2636 = vpop.f32.mrb[0].mxu0
    %v2637 = vadd.f32 %v380, %v2636
    %2638 = vdwg.mxu0
    %2639 = vmatprep.subr.mxu0 %v224
    %2640 = vmatpush1.msra.mxu0 %v223
    %2641 = vmatprep.subr.mxu0 %v228
    %2642 = vmatpush1.msra.mxu0 %v227
    %2643 = vmatprep.subr.mxu0 %v232
    %2644 = vmatpush1.msra.mxu0 %v231
    %2645 = vmatprep.subr.mxu0 %v236
    %2646 = vmatpush1.msra.mxu0 %v235
    %2647 = vmatprep.subr.mxu0 %v240
    %2648 = vmatpush1.msra.mxu0 %v239
    %2649 = vmatprep.subr.mxu0 %v244
    %2650 = vmatpush1.msra.mxu0 %v243
    %2651 = vmatprep.subr.mxu0 %v248
    %2652 = vmatpush1.msra.mxu0 %v247
    %2653 = vmatprep.subr.mxu0 %v252
    %2654 = vmatpush1.msra.mxu0 %v251
    %2655 = vmatprep.subr.mxu0 %v256
    %2656 = vmatpush1.msra.mxu0 %v255
    %2657 = vmatprep.subr.mxu0 %v260
    %2658 = vmatpush1.msra.mxu0 %v259
    %2659 = vmatprep.subr.mxu0 %v264
    %2660 = vmatpush1.msra.mxu0 %v263
    %2661 = vmatprep.subr.mxu0 %v268
    %2662 = vmatpush1.msra.mxu0 %v267
    %2663 = vmatprep.subr.mxu0 %v272
    %2664 = vmatpush1.msra.mxu0 %v271
    %2665 = vmatprep.subr.mxu0 %v276
    %2666 = vmatpush1.msra.mxu0 %v275
    %2667 = vmatprep.subr.mxu0 %v280
    %2668 = vmatpush1.msra.mxu0 %v279
    %2669 = vmatprep.subr.mxu0 %v284
    %2670 = vmatpush1.msra.mxu0 %v283
    %2671 = vmatprep.subr.mxu0 %v288
    %2672 = vmatpush1.msra.mxu0 %v287
    %2673 = vmatprep.subr.mxu0 %v292
    %2674 = vmatpush1.msra.mxu0 %v291
    %2675 = vmatprep.subr.mxu0 %v296
    %2676 = vmatpush1.msra.mxu0 %v295
    %2677 = vmatprep.subr.mxu0 %v300
    %2678 = vmatpush1.msra.mxu0 %v299
    %2679 = vmatprep.subr.mxu0 %v304
    %2680 = vmatpush1.msra.mxu0 %v303
    %2681 = vmatprep.subr.mxu0 %v308
    %2682 = vmatpush1.msra.mxu0 %v307
    %2683 = vmatprep.subr.mxu0 %v312
    %2684 = vmatpush1.msra.mxu0 %v311
    %2685 = vmatprep.subr.mxu0 %v316
    %2686 = vmatpush1.msra.mxu0 %v315
    %2687 = vmatprep.subr.mxu0 %v320
    %2688 = vmatpush1.msra.mxu0 %v319
    %2689 = vmatprep.subr.mxu0 %v324
    %2690 = vmatpush1.msra.mxu0 %v323
    %2691 = vmatprep.subr.mxu0 %v328
    %2692 = vmatpush1.msra.mxu0 %v327
    %2693 = vmatprep.subr.mxu0 %v332
    %2694 = vmatpush1.msra.mxu0 %v331
    %2695 = vmatprep.subr.mxu0 %v336
    %2696 = vmatpush1.msra.mxu0 %v335
    %2697 = vmatprep.subr.mxu0 %v340
    %2698 = vmatpush1.msra.mxu0 %v339
    %2699 = vmatprep.subr.mxu0 %v344
    %2700 = vmatpush1.msra.mxu0 %v343
    %2701 = vmatprep.subr.mxu0 %v348
    %2702 = vmatpush1.msra.mxu0 %v347
    %2703 = vmatprep.mubr.f32.mxu0 %v2399
    %2704 = vmatmul.mubr.f32.gmra.mrb[0].mxu0 %v2567
    %v2705 = vpop.f32.mrb[0].mxu0
    %v2706 = vadd.f32 %v384, %v2705
    %v2707 = vpop.f32.mrb[0].mxu0
    %v2708 = vadd.f32 %v388, %v2707
    %2709 = vdwg.mxu0
    %v2710 = vxor.u32 %v2635, 2147483648
    %v2711 = vmul.f32 %v2710, 1.442695
    %v2712 = vpow.pop %v2711
    %v2713 = vadd.f32 %v2712, 1.0
    %v2714 = vrcp.pop %v2713
    %v2715 = vmul.f32 1.0, %v2714
    %v2716 = vxor.u32 %v2637, 2147483648
    %v2717 = vmul.f32 %v2716, 1.442695
    %v2718 = vpow.pop %v2717
    %v2719 = vadd.f32 %v2718, 1.0
    %v2720 = vrcp.pop %v2719
    %v2721 = vmul.f32 1.0, %v2720
    %v2722 = vtanh.pop %v2706
    %v2723 = vxor.u32 %v2708, 2147483648
    %v2724 = vmul.f32 %v2723, 1.442695
    %v2725 = vpow.pop %v2724
    %v2726 = vadd.f32 %v2725, 1.0
    %v2727 = vrcp.pop %v2726
    %v2728 = vmul.f32 1.0, %v2727
    %v2729 = vmul.f32 %v2721, %v2397
    %v2730 = vmul.f32 %v2715, %v2722
    %v2731 = vadd.f32 %v2729, %v2730
    %v2732 = vtanh.pop %v2731
    %v2733 = vmul.f32 %v2728, %v2732
    %s2734 = scalar_lea.vmem [#allocation6], 56
    %v2735 = vld [vmem:[%s2734] sm:$0xff]
    %2736 = vmatprep.subr.mxu0 %v94
    %2737 = vmatpush1.msra.mxu0 %v93
    %2738 = vmatprep.subr.mxu0 %v98
    %2739 = vmatpush1.msra.mxu0 %v97
    %2740 = vmatprep.subr.mxu0 %v102
    %2741 = vmatpush1.msra.mxu0 %v101
    %2742 = vmatprep.subr.mxu0 %v106
    %2743 = vmatpush1.msra.mxu0 %v105
    %2744 = vmatprep.subr.mxu0 %v110
    %2745 = vmatpush1.msra.mxu0 %v109
    %2746 = vmatprep.subr.mxu0 %v114
    %2747 = vmatpush1.msra.mxu0 %v113
    %2748 = vmatprep.subr.mxu0 %v118
    %2749 = vmatpush1.msra.mxu0 %v117
    %2750 = vmatprep.subr.mxu0 %v122
    %2751 = vmatpush1.msra.mxu0 %v121
    %2752 = vmatprep.subr.mxu0 %v126
    %2753 = vmatpush1.msra.mxu0 %v125
    %2754 = vmatprep.subr.mxu0 %v130
    %2755 = vmatpush1.msra.mxu0 %v129
    %2756 = vmatprep.subr.mxu0 %v134
    %2757 = vmatpush1.msra.mxu0 %v133
    %2758 = vmatprep.subr.mxu0 %v138
    %2759 = vmatpush1.msra.mxu0 %v137
    %2760 = vmatprep.subr.mxu0 %v142
    %2761 = vmatpush1.msra.mxu0 %v141
    %2762 = vmatprep.subr.mxu0 %v146
    %2763 = vmatpush1.msra.mxu0 %v145
    %2764 = vmatprep.subr.mxu0 %v150
    %2765 = vmatpush1.msra.mxu0 %v149
    %2766 = vmatprep.subr.mxu0 %v154
    %2767 = vmatpush1.msra.mxu0 %v153
    %2768 = vmatprep.subr.mxu0 %v158
    %2769 = vmatpush1.msra.mxu0 %v157
    %2770 = vmatprep.subr.mxu0 %v162
    %2771 = vmatpush1.msra.mxu0 %v161
    %2772 = vmatprep.subr.mxu0 %v166
    %2773 = vmatpush1.msra.mxu0 %v165
    %2774 = vmatprep.subr.mxu0 %v170
    %2775 = vmatpush1.msra.mxu0 %v169
    %2776 = vmatprep.subr.mxu0 %v174
    %2777 = vmatpush1.msra.mxu0 %v173
    %2778 = vmatprep.subr.mxu0 %v178
    %2779 = vmatpush1.msra.mxu0 %v177
    %2780 = vmatprep.subr.mxu0 %v182
    %2781 = vmatpush1.msra.mxu0 %v181
    %2782 = vmatprep.subr.mxu0 %v186
    %2783 = vmatpush1.msra.mxu0 %v185
    %2784 = vmatprep.subr.mxu0 %v190
    %2785 = vmatpush1.msra.mxu0 %v189
    %2786 = vmatprep.subr.mxu0 %v194
    %2787 = vmatpush1.msra.mxu0 %v193
    %2788 = vmatprep.subr.mxu0 %v198
    %2789 = vmatpush1.msra.mxu0 %v197
    %2790 = vmatprep.subr.mxu0 %v202
    %2791 = vmatpush1.msra.mxu0 %v201
    %2792 = vmatprep.subr.mxu0 %v206
    %2793 = vmatpush1.msra.mxu0 %v205
    %2794 = vmatprep.subr.mxu0 %v210
    %2795 = vmatpush1.msra.mxu0 %v209
    %2796 = vmatprep.subr.mxu0 %v214
    %2797 = vmatpush1.msra.mxu0 %v213
    %2798 = vmatprep.subr.mxu0 %v218
    %2799 = vmatpush1.msra.mxu0 %v217
    %2800 = vmatprep.mubr.f32.mxu0 %v2567
    %2801 = vmatmul.mubr.f32.gmra.mrb[0].mxu0 %v2735
    %v2802 = vpop.f32.mrb[0].mxu0
    %v2803 = vadd.f32 %v354, %v2802
    %v2804 = vpop.f32.mrb[0].mxu0
    %v2805 = vadd.f32 %v358, %v2804
    %2806 = vdwg.mxu0
    %2807 = vmatprep.subr.mxu0 %v96
    %2808 = vmatpush1.msra.mxu0 %v95
    %2809 = vmatprep.subr.mxu0 %v100
    %2810 = vmatpush1.msra.mxu0 %v99
    %2811 = vmatprep.subr.mxu0 %v104
    %2812 = vmatpush1.msra.mxu0 %v103
    %2813 = vmatprep.subr.mxu0 %v108
    %2814 = vmatpush1.msra.mxu0 %v107
    %2815 = vmatprep.subr.mxu0 %v112
    %2816 = vmatpush1.msra.mxu0 %v111
    %2817 = vmatprep.subr.mxu0 %v116
    %2818 = vmatpush1.msra.mxu0 %v115
    %2819 = vmatprep.subr.mxu0 %v120
    %2820 = vmatpush1.msra.mxu0 %v119
    %2821 = vmatprep.subr.mxu0 %v124
    %2822 = vmatpush1.msra.mxu0 %v123
    %2823 = vmatprep.subr.mxu0 %v128
    %2824 = vmatpush1.msra.mxu0 %v127
    %2825 = vmatprep.subr.mxu0 %v132
    %2826 = vmatpush1.msra.mxu0 %v131
    %2827 = vmatprep.subr.mxu0 %v136
    %2828 = vmatpush1.msra.mxu0 %v135
    %2829 = vmatprep.subr.mxu0 %v140
    %2830 = vmatpush1.msra.mxu0 %v139
    %2831 = vmatprep.subr.mxu0 %v144
    %2832 = vmatpush1.msra.mxu0 %v143
    %2833 = vmatprep.subr.mxu0 %v148
    %2834 = vmatpush1.msra.mxu0 %v147
    %2835 = vmatprep.subr.mxu0 %v152
    %2836 = vmatpush1.msra.mxu0 %v151
    %2837 = vmatprep.subr.mxu0 %v156
    %2838 = vmatpush1.msra.mxu0 %v155
    %2839 = vmatprep.subr.mxu0 %v160
    %2840 = vmatpush1.msra.mxu0 %v159
    %2841 = vmatprep.subr.mxu0 %v164
    %2842 = vmatpush1.msra.mxu0 %v163
    %2843 = vmatprep.subr.mxu0 %v168
    %2844 = vmatpush1.msra.mxu0 %v167
    %2845 = vmatprep.subr.mxu0 %v172
    %2846 = vmatpush1.msra.mxu0 %v171
    %2847 = vmatprep.subr.mxu0 %v176
    %2848 = vmatpush1.msra.mxu0 %v175
    %2849 = vmatprep.subr.mxu0 %v180
    %2850 = vmatpush1.msra.mxu0 %v179
    %2851 = vmatprep.subr.mxu0 %v184
    %2852 = vmatpush1.msra.mxu0 %v183
    %2853 = vmatprep.subr.mxu0 %v188
    %2854 = vmatpush1.msra.mxu0 %v187
    %2855 = vmatprep.subr.mxu0 %v192
    %2856 = vmatpush1.msra.mxu0 %v191
    %2857 = vmatprep.subr.mxu0 %v196
    %2858 = vmatpush1.msra.mxu0 %v195
    %2859 = vmatprep.subr.mxu0 %v200
    %2860 = vmatpush1.msra.mxu0 %v199
    %2861 = vmatprep.subr.mxu0 %v204
    %2862 = vmatpush1.msra.mxu0 %v203
    %2863 = vmatprep.subr.mxu0 %v208
    %2864 = vmatpush1.msra.mxu0 %v207
    %2865 = vmatprep.subr.mxu0 %v212
    %2866 = vmatpush1.msra.mxu0 %v211
    %2867 = vmatprep.subr.mxu0 %v216
    %2868 = vmatpush1.msra.mxu0 %v215
    %2869 = vmatprep.subr.mxu0 %v220
    %2870 = vmatpush1.msra.mxu0 %v219
    %2871 = vmatprep.mubr.f32.mxu0 %v2567
    %2872 = vmatmul.mubr.f32.gmra.mrb[0].mxu0 %v2735
    %v2873 = vpop.f32.mrb[0].mxu0
    %v2874 = vadd.f32 %v362, %v2873
    %v2875 = vpop.f32.mrb[0].mxu0
    %v2876 = vadd.f32 %v366, %v2875
    %2877 = vdwg.mxu0
    %v2878 = vxor.u32 %v2803, 2147483648
    %v2879 = vmul.f32 %v2878, 1.442695
    %v2880 = vpow.pop %v2879
    %v2881 = vadd.f32 %v2880, 1.0
    %v2882 = vrcp.pop %v2881
    %v2883 = vmul.f32 1.0, %v2882
    %v2884 = vxor.u32 %v2805, 2147483648
    %v2885 = vmul.f32 %v2884, 1.442695
    %v2886 = vpow.pop %v2885
    %v2887 = vadd.f32 %v2886, 1.0
    %v2888 = vrcp.pop %v2887
    %v2889 = vmul.f32 1.0, %v2888
    %v2890 = vtanh.pop %v2874
    %v2891 = vxor.u32 %v2876, 2147483648
    %v2892 = vmul.f32 %v2891, 1.442695
    %v2893 = vpow.pop %v2892
    %v2894 = vadd.f32 %v2893, 1.0
    %v2895 = vrcp.pop %v2894
    %v2896 = vmul.f32 1.0, %v2895
    %v2897 = vmul.f32 %v2889, %v2565
    %v2898 = vmul.f32 %v2883, %v2890
    %v2899 = vadd.f32 %v2897, %v2898
    %v2900 = vtanh.pop %v2899
    %v2901 = vmul.f32 %v2896, %v2900
    %2902 = vmatprep.subr.mxu0 %v222
    %2903 = vmatpush1.msra.mxu0 %v221
    %2904 = vmatprep.subr.mxu0 %v226
    %2905 = vmatpush1.msra.mxu0 %v225
    %2906 = vmatprep.subr.mxu0 %v230
    %2907 = vmatpush1.msra.mxu0 %v229
    %2908 = vmatprep.subr.mxu0 %v234
    %2909 = vmatpush1.msra.mxu0 %v233
    %2910 = vmatprep.subr.mxu0 %v238
    %2911 = vmatpush1.msra.mxu0 %v237
    %2912 = vmatprep.subr.mxu0 %v242
    %2913 = vmatpush1.msra.mxu0 %v241
    %2914 = vmatprep.subr.mxu0 %v246
    %2915 = vmatpush1.msra.mxu0 %v245
    %2916 = vmatprep.subr.mxu0 %v250
    %2917 = vmatpush1.msra.mxu0 %v249
    %2918 = vmatprep.subr.mxu0 %v254
    %2919 = vmatpush1.msra.mxu0 %v253
    %2920 = vmatprep.subr.mxu0 %v258
    %2921 = vmatpush1.msra.mxu0 %v257
    %2922 = vmatprep.subr.mxu0 %v262
    %2923 = vmatpush1.msra.mxu0 %v261
    %2924 = vmatprep.subr.mxu0 %v266
    %2925 = vmatpush1.msra.mxu0 %v265
    %2926 = vmatprep.subr.mxu0 %v270
    %2927 = vmatpush1.msra.mxu0 %v269
    %2928 = vmatprep.subr.mxu0 %v274
    %2929 = vmatpush1.msra.mxu0 %v273
    %2930 = vmatprep.subr.mxu0 %v278
    %2931 = vmatpush1.msra.mxu0 %v277
    %2932 = vmatprep.subr.mxu0 %v282
    %2933 = vmatpush1.msra.mxu0 %v281
    %2934 = vmatprep.subr.mxu0 %v286
    %2935 = vmatpush1.msra.mxu0 %v285
    %2936 = vmatprep.subr.mxu0 %v290
    %2937 = vmatpush1.msra.mxu0 %v289
    %2938 = vmatprep.subr.mxu0 %v294
    %2939 = vmatpush1.msra.mxu0 %v293
    %2940 = vmatprep.subr.mxu0 %v298
    %2941 = vmatpush1.msra.mxu0 %v297
    %2942 = vmatprep.subr.mxu0 %v302
    %2943 = vmatpush1.msra.mxu0 %v301
    %2944 = vmatprep.subr.mxu0 %v306
    %2945 = vmatpush1.msra.mxu0 %v305
    %2946 = vmatprep.subr.mxu0 %v310
    %2947 = vmatpush1.msra.mxu0 %v309
    %2948 = vmatprep.subr.mxu0 %v314
    %2949 = vmatpush1.msra.mxu0 %v313
    %2950 = vmatprep.subr.mxu0 %v318
    %2951 = vmatpush1.msra.mxu0 %v317
    %2952 = vmatprep.subr.mxu0 %v322
    %2953 = vmatpush1.msra.mxu0 %v321
    %2954 = vmatprep.subr.mxu0 %v326
    %2955 = vmatpush1.msra.mxu0 %v325
    %2956 = vmatprep.subr.mxu0 %v330
    %2957 = vmatpush1.msra.mxu0 %v329
    %2958 = vmatprep.subr.mxu0 %v334
    %2959 = vmatpush1.msra.mxu0 %v333
    %2960 = vmatprep.subr.mxu0 %v338
    %2961 = vmatpush1.msra.mxu0 %v337
    %2962 = vmatprep.subr.mxu0 %v342
    %2963 = vmatpush1.msra.mxu0 %v341
    %2964 = vmatprep.subr.mxu0 %v346
    %2965 = vmatpush1.msra.mxu0 %v345
    %2966 = vmatprep.mubr.f32.mxu0 %v2733
    %2967 = vmatmul.mubr.f32.gmra.mrb[0].mxu0 %v2901
    %v2968 = vpop.f32.mrb[0].mxu0
    %v2969 = vadd.f32 %v376, %v2968
    %v2970 = vpop.f32.mrb[0].mxu0
    %v2971 = vadd.f32 %v380, %v2970
    %2972 = vdwg.mxu0
    %2973 = vmatprep.subr.mxu0 %v224
    %2974 = vmatpush1.msra.mxu0 %v223
    %2975 = vmatprep.subr.mxu0 %v228
    %2976 = vmatpush1.msra.mxu0 %v227
    %2977 = vmatprep.subr.mxu0 %v232
    %2978 = vmatpush1.msra.mxu0 %v231
    %2979 = vmatprep.subr.mxu0 %v236
    %2980 = vmatpush1.msra.mxu0 %v235
    %2981 = vmatprep.subr.mxu0 %v240
    %2982 = vmatpush1.msra.mxu0 %v239
    %2983 = vmatprep.subr.mxu0 %v244
    %2984 = vmatpush1.msra.mxu0 %v243
    %2985 = vmatprep.subr.mxu0 %v248
    %2986 = vmatpush1.msra.mxu0 %v247
    %2987 = vmatprep.subr.mxu0 %v252
    %2988 = vmatpush1.msra.mxu0 %v251
    %2989 = vmatprep.subr.mxu0 %v256
    %2990 = vmatpush1.msra.mxu0 %v255
    %2991 = vmatprep.subr.mxu0 %v260
    %2992 = vmatpush1.msra.mxu0 %v259
    %2993 = vmatprep.subr.mxu0 %v264
    %2994 = vmatpush1.msra.mxu0 %v263
    %2995 = vmatprep.subr.mxu0 %v268
    %2996 = vmatpush1.msra.mxu0 %v267
    %2997 = vmatprep.subr.mxu0 %v272
    %2998 = vmatpush1.msra.mxu0 %v271
    %2999 = vmatprep.subr.mxu0 %v276
    %3000 = vmatpush1.msra.mxu0 %v275
    %3001 = vmatprep.subr.mxu0 %v280
    %3002 = vmatpush1.msra.mxu0 %v279
    %3003 = vmatprep.subr.mxu0 %v284
    %3004 = vmatpush1.msra.mxu0 %v283
    %3005 = vmatprep.subr.mxu0 %v288
    %3006 = vmatpush1.msra.mxu0 %v287
    %3007 = vmatprep.subr.mxu0 %v292
    %3008 = vmatpush1.msra.mxu0 %v291
    %3009 = vmatprep.subr.mxu0 %v296
    %3010 = vmatpush1.msra.mxu0 %v295
    %3011 = vmatprep.subr.mxu0 %v300
    %3012 = vmatpush1.msra.mxu0 %v299
    %3013 = vmatprep.subr.mxu0 %v304
    %3014 = vmatpush1.msra.mxu0 %v303
    %3015 = vmatprep.subr.mxu0 %v308
    %3016 = vmatpush1.msra.mxu0 %v307
    %3017 = vmatprep.subr.mxu0 %v312
    %3018 = vmatpush1.msra.mxu0 %v311
    %3019 = vmatprep.subr.mxu0 %v316
    %3020 = vmatpush1.msra.mxu0 %v315
    %3021 = vmatprep.subr.mxu0 %v320
    %3022 = vmatpush1.msra.mxu0 %v319
    %3023 = vmatprep.subr.mxu0 %v324
    %3024 = vmatpush1.msra.mxu0 %v323
    %3025 = vmatprep.subr.mxu0 %v328
    %3026 = vmatpush1.msra.mxu0 %v327
    %3027 = vmatprep.subr.mxu0 %v332
    %3028 = vmatpush1.msra.mxu0 %v331
    %3029 = vmatprep.subr.mxu0 %v336
    %3030 = vmatpush1.msra.mxu0 %v335
    %3031 = vmatprep.subr.mxu0 %v340
    %3032 = vmatpush1.msra.mxu0 %v339
    %3033 = vmatprep.subr.mxu0 %v344
    %3034 = vmatpush1.msra.mxu0 %v343
    %3035 = vmatprep.subr.mxu0 %v348
    %3036 = vmatpush1.msra.mxu0 %v347
    %3037 = vmatprep.mubr.f32.mxu0 %v2733
    %3038 = vmatmul.mubr.f32.gmra.mrb[0].mxu0 %v2901
    %v3039 = vpop.f32.mrb[0].mxu0
    %v3040 = vadd.f32 %v384, %v3039
    %v3041 = vpop.f32.mrb[0].mxu0
    %v3042 = vadd.f32 %v388, %v3041
    %3043 = vdwg.mxu0
    %v3044 = vxor.u32 %v2969, 2147483648
    %v3045 = vmul.f32 %v3044, 1.442695
    %v3046 = vpow.pop %v3045
    %v3047 = vadd.f32 %v3046, 1.0
    %v3048 = vrcp.pop %v3047
    %v3049 = vmul.f32 1.0, %v3048
    %v3050 = vxor.u32 %v2971, 2147483648
    %v3051 = vmul.f32 %v3050, 1.442695
    %v3052 = vpow.pop %v3051
    %v3053 = vadd.f32 %v3052, 1.0
    %v3054 = vrcp.pop %v3053
    %v3055 = vmul.f32 1.0, %v3054
    %v3056 = vtanh.pop %v3040
    %v3057 = vxor.u32 %v3042, 2147483648
    %v3058 = vmul.f32 %v3057, 1.442695
    %v3059 = vpow.pop %v3058
    %v3060 = vadd.f32 %v3059, 1.0
    %v3061 = vrcp.pop %v3060
    %v3062 = vmul.f32 1.0, %v3061
    %v3063 = vmul.f32 %v3055, %v2731
    %v3064 = vmul.f32 %v3049, %v3056
    %v3065 = vadd.f32 %v3063, %v3064
    %v3066 = vtanh.pop %v3065
    %v3067 = vmul.f32 %v3062, %v3066
    %3068 = vst [vmem:[#allocation2] sm:$0xff] %v2901
    %3069 = vst [vmem:[#allocation3] sm:$0xff] %v2899
    %3070 = vst [vmem:[#allocation4] sm:$0xff] %v3067
    %3071 = vst [vmem:[#allocation5] sm:$0xff] %v3065
    // Predicated region
    $region50: #{tpu_custom_call.1} parent=1 // pred_check
      %p3072 = pneg %p85
    $region51: #{tpu_custom_call.1} parent=1 // pred_check_branch
      %3074 = sbr.rel (%p3072) target = $region53
    $region52: #{tpu_custom_call.1} parent=1 // pred_region
      %3075 = vst [vmem:[#allocation15] sm:$0xff] %v3067
      %v3076 = vld [vmem:[#allocation12] sm:$0xff]
      %v3077 = vld [vmem:[#allocation12 + $0x8] sm:$0xff]
      %v3078 = vld [vmem:[#allocation12 + $0x10] sm:$0xff]
      %v3079 = vld [vmem:[#allocation12 + $0x18] sm:$0xff]
      %v3080 = vld [vmem:[#allocation12 + $0x20] sm:$0xff]
      %v3081 = vld [vmem:[#allocation12 + $0x28] sm:$0xff]
      %v3082 = vld [vmem:[#allocation12 + $0x30] sm:$0xff]
      %v3083 = vld [vmem:[#allocation12 + $0x38] sm:$0xff]
      %v3084 = vld [vmem:[#allocation12 + $0x40] sm:$0xff]
      %v3085 = vld [vmem:[#allocation12 + $0x48] sm:$0xff]
      %v3086 = vld [vmem:[#allocation12 + $0x50] sm:$0xff]
      %v3087 = vld [vmem:[#allocation12 + $0x58] sm:$0xff]
      %v3088 = vld [vmem:[#allocation12 + $0x60] sm:$0xff]
      %v3089 = vld [vmem:[#allocation12 + $0x68] sm:$0xff]
      %v3090 = vld [vmem:[#allocation12 + $0x70] sm:$0xff]
      %v3091 = vld [vmem:[#allocation12 + $0x78] sm:$0xff]
      %v3092 = vld [vmem:[%s6] sm:$0x1]
      %v3094 = vlaneseq
      %v3095 = vshrl.u32 %v3094, 7
      %v3096 = vsub.s32 0, %v3095
      %v3097 = vrot.slane %v3092, %v3096
      %3099 = vmatprep.subr.mxu0 0.0
      %3100 = vmatpush1.msra.mxu0 %v3076
      %3101 = vmatprep.subr.mxu0 0.0
      %3102 = vmatpush1.msra.mxu0 %v3077
      %3103 = vmatprep.subr.mxu0 0.0
      %3104 = vmatpush1.msra.mxu0 %v3078
      %3105 = vmatprep.subr.mxu0 0.0
      %3106 = vmatpush1.msra.mxu0 %v3079
      %3107 = vmatprep.subr.mxu0 0.0
      %3108 = vmatpush1.msra.mxu0 %v3080
      %3109 = vmatprep.subr.mxu0 0.0
      %3110 = vmatpush1.msra.mxu0 %v3081
      %3111 = vmatprep.subr.mxu0 0.0
      %3112 = vmatpush1.msra.mxu0 %v3082
      %3113 = vmatprep.subr.mxu0 0.0
      %3114 = vmatpush1.msra.mxu0 %v3083
      %3115 = vmatprep.subr.mxu0 0.0
      %3116 = vmatpush1.msra.mxu0 %v3084
      %3117 = vmatprep.subr.mxu0 0.0
      %3118 = vmatpush1.msra.mxu0 %v3085
      %3119 = vmatprep.subr.mxu0 0.0
      %3120 = vmatpush1.msra.mxu0 %v3086
      %3121 = vmatprep.subr.mxu0 0.0
      %3122 = vmatpush1.msra.mxu0 %v3087
      %3123 = vmatprep.subr.mxu0 0.0
      %3124 = vmatpush1.msra.mxu0 %v3088
      %3125 = vmatprep.subr.mxu0 0.0
      %3126 = vmatpush1.msra.mxu0 %v3089
      %3127 = vmatprep.subr.mxu0 0.0
      %3128 = vmatpush1.msra.mxu0 %v3090
      %3129 = vmatprep.subr.mxu0 0.0
      %3130 = vmatpush1.msra.mxu0 %v3091
      %3131 = vmatprep.subr.mxu0 0.0
      %3132 = vmatpush1.msra.mxu0 0.0
      %3133 = vmatprep.subr.mxu0 0.0
      %3134 = vmatpush1.msra.mxu0 0.0
      %3135 = vmatprep.subr.mxu0 0.0
      %3136 = vmatpush1.msra.mxu0 0.0
      %3137 = vmatprep.subr.mxu0 0.0
      %3138 = vmatpush1.msra.mxu0 0.0
      %3139 = vmatprep.subr.mxu0 0.0
      %3140 = vmatpush1.msra.mxu0 0.0
      %3141 = vmatprep.subr.mxu0 0.0
      %3142 = vmatpush1.msra.mxu0 0.0
      %3143 = vmatprep.subr.mxu0 0.0
      %3144 = vmatpush1.msra.mxu0 0.0
      %3145 = vmatprep.subr.mxu0 0.0
      %3146 = vmatpush1.msra.mxu0 0.0
      %3147 = vmatprep.subr.mxu0 0.0
      %3148 = vmatpush1.msra.mxu0 0.0
      %3149 = vmatprep.subr.mxu0 0.0
      %3150 = vmatpush1.msra.mxu0 0.0
      %3151 = vmatprep.subr.mxu0 0.0
      %3152 = vmatpush1.msra.mxu0 0.0
      %3153 = vmatprep.subr.mxu0 0.0
      %3154 = vmatpush1.msra.mxu0 0.0
      %3155 = vmatprep.subr.mxu0 0.0
      %3156 = vmatpush1.msra.mxu0 0.0
      %3157 = vmatprep.subr.mxu0 0.0
      %3158 = vmatpush1.msra.mxu0 0.0
      %3159 = vmatprep.subr.mxu0 0.0
      %3160 = vmatpush1.msra.mxu0 0.0
      %3161 = vmatprep.subr.mxu0 0.0
      %3162 = vmatpush1.msra.mxu0 0.0
      %3163 = vmatprep.mubr.f32.mxu0 0.0
      %3164 = vmatmul.mubr.f32.gmra.mrb[0].mxu0 %v3067
      %v3165 = vpop.f32.mrb[0].mxu0
      %v3166 = vadd.f32 %v3097, %v3165
      %v3167 = vpop.f32.mrb[0].mxu0
      %3168 = vdwg.mxu0
      %v3169 = vmax.f32 %v3166, 0.0
      %3170 = vst [vmem:[#allocation14] sm:$0xff] %v3169
    $region53: #{tpu_custom_call.1} parent=1 // pred_fallthru
      _
    // Predicated region
    $region54: #{tpu_custom_call.1} parent=1 // pred_check
      _
    $region55: #{tpu_custom_call.1} parent=1 // pred_check_branch
      %3172 = sbr.rel (0) target = $region57
    $region56: #{tpu_custom_call.1} parent=1 // pred_region
      %s3174 = ssub.s32 128, 128
      %3175 = vsyncadd [#allocation8], %s3174
      %s3177 = sshll.u32 [#allocation14], 4
      %s3178 = int_to_ptr.vmem [resolvable:$true] %s3177
      %3180 = dma.vmem_to_hbm [thread:$0]  %s3178, 128, %s7, [#allocation8]
    $region57: #{tpu_custom_call.1} parent=1 // pred_fallthru
      _
    // Predicated region
    $region58: #{tpu_custom_call.1} parent=1 // pred_check
      _
    $region59: #{tpu_custom_call.1} parent=1 // pred_check_branch
      %3182 = sbr.rel (0) target = $region61
    $region60: #{tpu_custom_call.1} parent=1 // pred_region
      %s3184 = ssub.s32 128, 128
      %3185 = vsyncadd [#allocation16], %s3184
      %s3187 = sshll.u32 [#allocation15], 4
      %s3188 = int_to_ptr.vmem [resolvable:$true] %s3187
      %3190 = dma.vmem_to_hbm [thread:$0]  %s3188, 128, %s8, [#allocation16]
    $region61: #{tpu_custom_call.1} parent=1 // pred_fallthru
      _
    // Predicated region
    $region62: #{tpu_custom_call.1} parent=1 // pred_check
      _
    $region63: #{tpu_custom_call.1} parent=1 // pred_check_branch
      %3192 = sbr.rel (0) target = $region65
    $region64: #{tpu_custom_call.1} parent=1 // pred_region
      %3193 = dma.done [#allocation8], 128
    $region65: #{tpu_custom_call.1} parent=1 // pred_fallthru
      _
    // Predicated region
    $region66: #{tpu_custom_call.1} parent=1 // pred_check
      _
    $region67: #{tpu_custom_call.1} parent=1 // pred_check_branch
      %3195 = sbr.rel (0) target = $region69
    $region68: #{tpu_custom_call.1} parent=1 // pred_region
      %3196 = dma.done [#allocation16], 128
    $region69: #{tpu_custom_call.1} parent=1 // pred_fallthru
      _
    %3197 = vsyncpa [#allocation7], 1
    %3198 = vsyncpa [#allocation10], 1
    %3199 = vsyncpa [#allocation13], 1
    %3200 = vsyncpa [#allocation8], 1
    %3201 = vsyncpa [#allocation16], 1

</llo_original>
